<compile_context>
chip_gen: v7x
topology: tpu7x:2x2x1
jax: 0.10.0
libtpu: 0.0.40
codegen_flags: <defaults>
</compile_context>

<pallas_src>
import functools
import math

import jax
import jax.numpy as jnp
from jax import lax
from jax.experimental import pallas as pl
from jax.experimental.pallas import tpu as pltpu

DIM = 32                        # config.dim
HEAD = 4                        # config.head
D_MODEL = DIM // HEAD           # 8
MEM_TOKEN = 8                   # config.mem_token (in_layer)
LD = MEM_TOKEN * DIM            # 256: entity-major lane width (multiple of 128)
LH = MEM_TOKEN * HEAD           # 32: compact (token, head) score lanes
INTERMEDIATE = 2 * DIM          # 64: LlamaMLP intermediate size per token
LI = MEM_TOKEN * INTERMEDIATE   # 512: entity-major MLP activation lanes
NUM_LAYERS = 2                  # mid_num_layers
ROPE_THETA = 10000.0
RMS_EPS = 1e-6
SOFTMAX_EPS = 1e-16             # torch_geometric.utils.softmax denominator eps
NEG_BIG = 1e30                  # finite "-inf" for the masked segment max


# ----------------------------------------------------------------------------
# Fused per-layer kernel (single program, whole graph resident in VMEM).
#   Rows = graph entities (nodes / edges), lanes = mem_token*dim = 256.
# ----------------------------------------------------------------------------
def _gofa_layer_kernel(x_ref, xe_ref, gd_ref, gs_ref, gdt_ref, gdx_ref,
                       rep_ref, fold_ref, rmsm_ref, hsc_ref, hsb_ref,
                       wxn_ref, wxen_ref, wpn_ref,
                       wqkv_ref, we_ref, wo_ref, wgu_ref, wdn_ref,
                       out_ref):
    f32 = jnp.float32
    rmsm = rmsm_ref[...]

    def rmsnorm(t, w):
        # per-token mean(x^2) broadcast back over that token's 32 lanes via a
        # block-diagonal [256,256] matmul (keeps everything 256-lane dense).
        var = jnp.dot(t * t, rmsm, preferred_element_type=f32)
        return t * lax.rsqrt(var + RMS_EPS) * w

    x = x_ref[...]                                                    # [N, 256]
    xn = rmsnorm(x, wxn_ref[...])
    xen = rmsnorm(xe_ref[...], wxen_ref[...])                         # [E, 256]

    # Fused block-diagonal projections; rotary is folded into the q/k/ek blocks
    # (it is linear and row-wise, so rope(gather(k)+ek) == gather(rope(k)) + rope(ek)).
    qkv = jnp.dot(xn, wqkv_ref[...], preferred_element_type=f32)      # [N, 768] = q|k|v
    q = qkv[:, :LD]
    kv = qkv[:, LD:]                                                  # [N, 512] = k|v
    ekv = jnp.dot(xen, we_ref[...], preferred_element_type=f32)       # [E, 512] = ek|ev

    gd = gd_ref[...]                                                  # [E, N] one-hot dst
    gs = gs_ref[...]                                                  # [E, N] one-hot src
    gdt = gdt_ref[...]                                                # [N, E] = gd^T (host-built)

    q_e = jnp.dot(gd, q, preferred_element_type=f32)                  # [E, 256]
    kv_e = jnp.dot(gs, kv, preferred_element_type=f32) + ekv          # [E, 512]
    k_e = kv_e[:, :LD]
    v_e = kv_e[:, LD:]

    # per-(token, head) scores, compact 32-lane form (1/sqrt(d_model) folded in)
    s_c = jnp.dot(q_e * k_e, hsc_ref[...], preferred_element_type=f32)   # [E, 32]

    # Exact per-destination segment max (matches torch_geometric softmax), using
    # only 2-D ops: expand scores to the node-major [E, N*32] slab, mask with the
    # expanded one-hot, reduce over edges (axis 0), then fold back per edge.
    # TODO(synk): this is O(E*N*32); switch to a tiled/flash formulation for big graphs.
    gdx = gdx_ref[...]                                                # [E, N*32]
    s_tile = jnp.dot(s_c, rep_ref[...], preferred_element_type=f32)   # [E, N*32]
    masked = gdx * s_tile + (gdx - 1.0) * NEG_BIG
    seg_max = jnp.max(masked, axis=0, keepdims=True)                  # [1, N*32]
    m_e = jnp.dot(gdx * seg_max, fold_ref[...], preferred_element_type=f32)  # [E, 32]

    ex = jnp.exp(s_c - m_e)                                           # [E, 32]
    denom_n = jnp.dot(gdt, ex, preferred_element_type=f32)            # [N, 32]
    denom_e = jnp.dot(gd, denom_n, preferred_element_type=f32) + SOFTMAX_EPS
    alpha_c = ex / denom_e                                            # [E, 32]
    # TODO(synk): attention dropout on alpha skipped (dropout=0.0 / eval mode).
    alpha = jnp.dot(alpha_c, hsb_ref[...], preferred_element_type=f32)   # [E, 256]

    agg = jnp.dot(gdt, v_e * alpha, preferred_element_type=f32)       # [N, 256]

    # o_proj + residual + post-norm + LlamaMLP (gate|up fused) + residual
    h = x + jnp.dot(agg, wo_ref[...], preferred_element_type=f32)     # [N, 256]
    hn = rmsnorm(h, wpn_ref[...])
    gu = jnp.dot(hn, wgu_ref[...], preferred_element_type=f32)        # [N, 1024]
    gate = gu[:, :LI]
    up = gu[:, LI:]
    act = gate * (1.0 / (1.0 + jnp.exp(-gate))) * up                  # SiLU(gate)*up, [N, 512]
    out_ref[...] = h + jnp.dot(act, wdn_ref[...], preferred_element_type=f32)


def _layer_call(x_em, xe_em, static, p):
    n_nodes = x_em.shape[0]
    vmem = pl.BlockSpec(memory_space=pltpu.MemorySpace.VMEM)
    return pl.pallas_call(
        _gofa_layer_kernel,
        out_shape=jax.ShapeDtypeStruct((n_nodes, LD), jnp.float32),
        in_specs=[vmem] * 19,
        out_specs=vmem,
        input_output_aliases={0: 0},   # residual slab reuses its HBM buffer
        compiler_params=pltpu.CompilerParams(vmem_limit_bytes=32 * 1024 * 1024),
    )(x_em, xe_em,
      static["gd"], static["gs"], static["gdt"], static["gdx"],
      static["rep"], static["fold"], static["rmsm"], static["hsc"], static["hsb"],
      p["w_xnorm_t"], p["w_xenorm_t"], p["w_postnorm_t"],
      p["w_qkv_big"], p["w_e_big"], p["w_o_big"], p["w_gu_big"], p["w_down_big"])


# ----------------------------------------------------------------------------
# Structural data (layer-invariant) and host-side parameter folding.
# ----------------------------------------------------------------------------
def _build_static(n_nodes, src, dst):
    gd = jax.nn.one_hot(dst, n_nodes, dtype=jnp.float32)     # [E, N]
    gs = jax.nn.one_hot(src, n_nodes, dtype=jnp.float32)     # [E, N]
    gdt = gd.T                                                # [N, E] pre-transposed
    gdx = jnp.repeat(gd, LH, axis=1)                          # [E, N*32]
    eye_lh = jnp.eye(LH, dtype=jnp.float32)
    rep = jnp.tile(eye_lh, (1, n_nodes))                      # [32, N*32]
    fold = jnp.tile(eye_lh, (n_nodes, 1))                     # [N*32, 32]
    eye_l = jnp.eye(MEM_TOKEN, dtype=jnp.float32)
    rmsm = jnp.kron(eye_l, jnp.ones((DIM, DIM), jnp.float32) / DIM)   # [256, 256]
    head_sel = jnp.kron(jnp.eye(HEAD, dtype=jnp.float32),
                        jnp.ones((D_MODEL, 1), jnp.float32))          # [32, 4]
    hsc = jnp.kron(eye_l, head_sel) / math.sqrt(D_MODEL)              # [256, 32]
    hsb = jnp.kron(eye_l, head_sel.T)                                 # [32, 256]
    return dict(gd=gd, gs=gs, gdt=gdt, gdx=gdx, rep=rep, fold=fold,
                rmsm=rmsm, hsc=hsc, hsb=hsb)


def _rotary_tables():
    inv_freq = 1.0 / (ROPE_THETA ** (
        jnp.arange(0, D_MODEL, 2, dtype=jnp.float32) / D_MODEL))
    t = jnp.arange(MEM_TOKEN, dtype=jnp.float32)
    freqs = jnp.outer(t, inv_freq)                         # [L, dm/2]
    emb = jnp.concatenate([freqs, freqs], axis=-1)         # [L, dm]
    cos = jnp.tile(jnp.cos(emb), (1, HEAD))                # [L, D] (head-major lanes)
    sin = jnp.tile(jnp.sin(emb), (1, HEAD))
    return cos, sin


def _rotate_half_columns(w):
    """Column-space rotate_half: x @ result == rotate_half(x @ w)."""
    half = D_MODEL // 2
    w3 = w.reshape(w.shape[0], HEAD, D_MODEL)
    return jnp.concatenate([-w3[..., half:], w3[..., :half]], axis=-1).reshape(w.shape)


def _blockdiag(w):
    """kron(I_L, w): per-token projection in the entity-major 256-lane layout."""
    return jnp.kron(jnp.eye(MEM_TOKEN, dtype=w.dtype), w)


def _blockdiag_rope(w, cos, sin):
    """Block-diagonal projection with rotary folded into each position's block."""
    w_rot = _rotate_half_columns(w)
    rows, cols = w.shape
    big = jnp.zeros((MEM_TOKEN * rows, MEM_TOKEN * cols), w.dtype)
    for t in range(MEM_TOKEN):
        blk = w * cos[t][None, :] + w_rot * sin[t][None, :]
        big = big.at[t * rows:(t + 1) * rows, t * cols:(t + 1) * cols].set(blk)
    return big


def prepare_layer_params(p):
    """Fold rotary / per-token structure into block-diagonal weights.
    Host side, once per parameter set (hoisted out of the jitted forward)."""
    cos, sin = _rotary_tables()
    wq = p["w_qkv"][:, :DIM]
    wk = p["w_qkv"][:, DIM:2 * DIM]
    wv = p["w_qkv"][:, 2 * DIM:]
    wek = p["w_e"][:, :DIM]
    wev = p["w_e"][:, DIM:]
    return dict(
        w_xnorm_t=jnp.tile(p["w_xnorm"], (1, MEM_TOKEN)),             # [1, 256]
        w_xenorm_t=jnp.tile(p["w_xenorm"], (1, MEM_TOKEN)),
        w_postnorm_t=jnp.tile(p["w_postnorm"], (1, MEM_TOKEN)),
        w_qkv_big=jnp.concatenate([_blockdiag_rope(wq, cos, sin),
                                   _blockdiag_rope(wk, cos, sin),
                                   _blockdiag(wv)], axis=1),          # [256, 768]
        w_e_big=jnp.concatenate([_blockdiag_rope(wek, cos, sin),
                                 _blockdiag(wev)], axis=1),           # [256, 512]
        w_o_big=_blockdiag(p["w_o"]),                                 # [256, 256]
        w_gu_big=jnp.concatenate([_blockdiag(p["w_gate"]),
                                  _blockdiag(p["w_up"])], axis=1),    # [256, 1024]
        w_down_big=_blockdiag(p["w_down"]),                           # [512, 256]
    )


# ----------------------------------------------------------------------------
# Forward (map_node=None path).
# ----------------------------------------------------------------------------
@functools.partial(jax.jit, static_argnums=(3,))
def gofa_gnn_forward_pallas(hidden_states, edge_index, edge_map, num_node_feat,
                            prepared_params):
    """hidden_states: [total, mem_token*dim] -> [total, mem_token, dim]."""
    total = hidden_states.shape[0]
    node_em = hidden_states[:num_node_feat]              # [N, 256] already entity-major
    edge_feat = hidden_states[num_node_feat:]            # [F, 256]
    xe_em = edge_feat[edge_map]                          # [E, 256] layer-invariant gather
    static = _build_static(num_node_feat, edge_index[0], edge_index[1])
    for p in prepared_params:
        node_em = _layer_call(node_em, xe_em, static, p)
    out = jnp.concatenate([node_em, edge_feat], axis=0)
    return out.reshape(total, MEM_TOKEN, DIM)


# ----------------------------------------------------------------------------
# Pure-JAX reference (faithful to the PyTorch semantics) for verification.
# ----------------------------------------------------------------------------
def gofa_layer_ref(x, edge_index, xe, params):
    src, dst = edge_index[0], edge_index[1]
    n_nodes = x.shape[0]
    n_edges = xe.shape[0]
    residual = x

    def rms(t, w):
        var = jnp.mean(t * t, axis=-1, keepdims=True)
        return t * lax.rsqrt(var + RMS_EPS) * w.reshape(1, 1, -1)

    xn = rms(x, params["w_xnorm"])
    xen = rms(xe, params["w_xenorm"])
    qkv = xn @ params["w_qkv"]
    q, k, v = jnp.split(qkv, 3, axis=-1)
    ekv = xen @ params["w_e"]
    ek, ev = jnp.split(ekv, 2, axis=-1)

    q_e = q[dst]
    k_e = k[src] + ek
    v_e = v[src] + ev

    cos, sin = _rotary_tables()

    def rot_half(t):
        th = t.reshape(n_edges, MEM_TOKEN, HEAD, D_MODEL)
        rh = jnp.concatenate([-th[..., D_MODEL // 2:], th[..., :D_MODEL // 2]], -1)
        return rh.reshape(n_edges, MEM_TOKEN, DIM)

    q_e = q_e * cos[None] + rot_half(q_e) * sin[None]
    k_e = k_e * cos[None] + rot_half(k_e) * sin[None]

    scores = (q_e * k_e).reshape(n_edges, MEM_TOKEN, HEAD, D_MODEL).sum(-1)
    scores = scores / math.sqrt(D_MODEL)                                # [E, L, H]
    seg_max = jax.ops.segment_max(scores, dst, num_segments=n_nodes)
    ex = jnp.exp(scores - seg_max[dst])
    denom = jax.ops.segment_sum(ex, dst, num_segments=n_nodes)[dst] + SOFTMAX_EPS
    alpha = ex / denom
    msg = (v_e.reshape(n_edges, MEM_TOKEN, HEAD, D_MODEL) * alpha[..., None])
    msg = msg.reshape(n_edges, MEM_TOKEN, DIM)
    agg = jax.ops.segment_sum(msg, dst, num_segments=n_nodes)

    out = residual + agg @ params["w_o"]
    residual2 = out
    on = rms(out, params["w_postnorm"])
    hidden = jax.nn.silu(on @ params["w_gate"]) * (on @ params["w_up"])
    return residual2 + hidden @ params["w_down"]


def gofa_gnn_forward_ref(hidden_states, edge_index, edge_map, num_node_feat,
                         layer_params):
    total = hidden_states.shape[0]
    mem = hidden_states.reshape(total, MEM_TOKEN, DIM)
    for params in layer_params:
        gnn_input = mem[:num_node_feat]
        gnn_edge_input = mem[num_node_feat:][edge_map]
        out = gofa_layer_ref(gnn_input, edge_index, gnn_edge_input, params)
        mem = jnp.concatenate([out, mem[num_node_feat:]], axis=0)
    return mem


# ----------------------------------------------------------------------------
# Main
# ----------------------------------------------------------------------------
if __name__ == "__main__":
    key = jax.random.PRNGKey(0)
    params_key, data_key = jax.random.split(key)

    N_NODES = 8          # graph.num_node_feat
    N_EDGE_FEAT = 5      # distinct edge feature rows
    N_EDGES = 16
    TOTAL = N_NODES + N_EDGE_FEAT

    dk = jax.random.split(data_key, 4)
    hidden_states = jax.random.normal(dk[0], (TOTAL, MEM_TOKEN * DIM), jnp.float32)
    src = jax.random.randint(dk[1], (N_EDGES,), 0, N_NODES, dtype=jnp.int32)
    dst = jax.random.randint(dk[2], (N_EDGES,), 0, N_NODES, dtype=jnp.int32)
    edge_index = jnp.stack([src, dst])
    edge_map = jax.random.randint(dk[3], (N_EDGES,), 0, N_EDGE_FEAT, dtype=jnp.int32)

    std = 0.05
    layer_params = []
    lkeys = jax.random.split(params_key, NUM_LAYERS)
    for li in range(NUM_LAYERS):
        ks = jax.random.split(lkeys[li], 9)
        layer_params.append(dict(
            w_xnorm=1.0 + 0.1 * jax.random.normal(ks[0], (1, DIM), jnp.float32),
            w_xenorm=1.0 + 0.1 * jax.random.normal(ks[1], (1, DIM), jnp.float32),
            w_postnorm=1.0 + 0.1 * jax.random.normal(ks[2], (1, DIM), jnp.float32),
            w_qkv=std * jax.random.normal(ks[3], (DIM, 3 * DIM), jnp.float32),
            w_e=std * jax.random.normal(ks[4], (DIM, 2 * DIM), jnp.float32),
            w_o=std * jax.random.normal(ks[5], (DIM, DIM), jnp.float32),
            w_gate=std * jax.random.normal(ks[6], (DIM, INTERMEDIATE), jnp.float32),
            w_up=std * jax.random.normal(ks[7], (DIM, INTERMEDIATE), jnp.float32),
            w_down=std * jax.random.normal(ks[8], (INTERMEDIATE, DIM), jnp.float32),
        ))

    # Hoisted host-side parameter preparation (rotary / kron folding done once).
    prepared = [prepare_layer_params(p) for p in layer_params]

    out = gofa_gnn_forward_pallas(hidden_states, edge_index, edge_map, N_NODES,
                                  prepared)
    out = jax.block_until_ready(out)

    ref = gofa_gnn_forward_ref(hidden_states, edge_index, edge_map, N_NODES,
                               layer_params)
    assert out.shape == (TOTAL, MEM_TOKEN, DIM)
    max_err = float(jnp.max(jnp.abs(out - ref)))
    assert jnp.allclose(out, ref, rtol=1e-4, atol=1e-4), max_err
    print("KERNEL_OK")
</pallas_src>

<mosaic_0001>
module attributes {stable_mosaic.version = 11 : i64} {
  func.func @_gofa_layer_kernel(%arg0: memref<8x256xf32, #tpu.memory_space<vmem>>, %arg1: memref<16x256xf32, #tpu.memory_space<vmem>>, %arg2: memref<16x8xf32, #tpu.memory_space<vmem>>, %arg3: memref<16x8xf32, #tpu.memory_space<vmem>>, %arg4: memref<8x16xf32, #tpu.memory_space<vmem>>, %arg5: memref<16x256xf32, #tpu.memory_space<vmem>>, %arg6: memref<32x256xf32, #tpu.memory_space<vmem>>, %arg7: memref<256x32xf32, #tpu.memory_space<vmem>>, %arg8: memref<256x256xf32, #tpu.memory_space<vmem>>, %arg9: memref<256x32xf32, #tpu.memory_space<vmem>>, %arg10: memref<32x256xf32, #tpu.memory_space<vmem>>, %arg11: memref<1x256xf32, #tpu.memory_space<vmem>>, %arg12: memref<1x256xf32, #tpu.memory_space<vmem>>, %arg13: memref<1x256xf32, #tpu.memory_space<vmem>>, %arg14: memref<256x768xf32, #tpu.memory_space<vmem>>, %arg15: memref<256x512xf32, #tpu.memory_space<vmem>>, %arg16: memref<256x256xf32, #tpu.memory_space<vmem>>, %arg17: memref<256x1024xf32, #tpu.memory_space<vmem>>, %arg18: memref<512x256xf32, #tpu.memory_space<vmem>>, %arg19: memref<8x256xf32, #tpu.memory_space<vmem>>) attributes {dimension_semantics = [], scalar_prefetch = 0 : i64, scratch_operands = 0 : i64, tpu.core_type = #tpu.core_type<tc>} {
    %c0 = arith.constant 0 : index
    %c0_0 = arith.constant 0 : index
    %0 = vector.load %arg8[%c0, %c0_0] : memref<256x256xf32, #tpu.memory_space<vmem>>, vector<256x256xf32>
    %c0_1 = arith.constant 0 : index
    %c0_2 = arith.constant 0 : index
    %1 = vector.load %arg0[%c0_1, %c0_2] : memref<8x256xf32, #tpu.memory_space<vmem>>, vector<8x256xf32>
    %c0_3 = arith.constant 0 : index
    %c0_4 = arith.constant 0 : index
    %2 = vector.load %arg11[%c0_3, %c0_4] : memref<1x256xf32, #tpu.memory_space<vmem>>, vector<1x256xf32>
    %3 = arith.mulf %1, %1 : vector<8x256xf32>
    %cst = arith.constant dense<0.000000e+00> : vector<8x256xf32>
    %4 = tpu.matmul %3, %0, %cst {dimension_numbers = #tpu.dot_dimension_numbers<[1], [0], [0], [1], [0, 0, 1, 1], [], []>} : vector<8x256xf32>, vector<256x256xf32>, vector<8x256xf32> -> vector<8x256xf32>
    %cst_5 = arith.constant 9.99999997E-7 : f32
    %5 = vector.broadcast %cst_5 : f32 to vector<8x256xf32>
    %6 = arith.addf %4, %5 : vector<8x256xf32>
    %7 = math.rsqrt %6 : vector<8x256xf32>
    %8 = arith.mulf %1, %7 : vector<8x256xf32>
    %9 = vector.broadcast %2 : vector<1x256xf32> to vector<8x256xf32>
    %10 = arith.mulf %8, %9 : vector<8x256xf32>
    %c0_6 = arith.constant 0 : index
    %c0_7 = arith.constant 0 : index
    %11 = vector.load %arg1[%c0_6, %c0_7] : memref<16x256xf32, #tpu.memory_space<vmem>>, vector<16x256xf32>
    %c0_8 = arith.constant 0 : index
    %c0_9 = arith.constant 0 : index
    %12 = vector.load %arg12[%c0_8, %c0_9] : memref<1x256xf32, #tpu.memory_space<vmem>>, vector<1x256xf32>
    %13 = arith.mulf %11, %11 : vector<16x256xf32>
    %cst_10 = arith.constant dense<0.000000e+00> : vector<16x256xf32>
    %14 = tpu.matmul %13, %0, %cst_10 {dimension_numbers = #tpu.dot_dimension_numbers<[1], [0], [0], [1], [0, 0, 1, 1], [], []>} : vector<16x256xf32>, vector<256x256xf32>, vector<16x256xf32> -> vector<16x256xf32>
    %cst_11 = arith.constant 9.99999997E-7 : f32
    %15 = vector.broadcast %cst_11 : f32 to vector<16x256xf32>
    %16 = arith.addf %14, %15 : vector<16x256xf32>
    %17 = math.rsqrt %16 : vector<16x256xf32>
    %18 = arith.mulf %11, %17 : vector<16x256xf32>
    %19 = vector.broadcast %12 : vector<1x256xf32> to vector<16x256xf32>
    %20 = arith.mulf %18, %19 : vector<16x256xf32>
    %c0_12 = arith.constant 0 : index
    %c0_13 = arith.constant 0 : index
    %21 = vector.load %arg14[%c0_12, %c0_13] : memref<256x768xf32, #tpu.memory_space<vmem>>, vector<256x768xf32>
    %cst_14 = arith.constant dense<0.000000e+00> : vector<8x768xf32>
    %22 = tpu.matmul %10, %21, %cst_14 {dimension_numbers = #tpu.dot_dimension_numbers<[1], [0], [0], [1], [0, 0, 1, 1], [], []>} : vector<8x256xf32>, vector<256x768xf32>, vector<8x768xf32> -> vector<8x768xf32>
    %23 = vector.extract_strided_slice %22 {offsets = [0, 0], sizes = [8, 256], strides = [1, 1]} : vector<8x768xf32> to vector<8x256xf32>
    %24 = vector.extract_strided_slice %22 {offsets = [0, 256], sizes = [8, 512], strides = [1, 1]} : vector<8x768xf32> to vector<8x512xf32>
    %c0_15 = arith.constant 0 : index
    %c0_16 = arith.constant 0 : index
    %25 = vector.load %arg15[%c0_15, %c0_16] : memref<256x512xf32, #tpu.memory_space<vmem>>, vector<256x512xf32>
    %cst_17 = arith.constant dense<0.000000e+00> : vector<16x512xf32>
    %26 = tpu.matmul %20, %25, %cst_17 {dimension_numbers = #tpu.dot_dimension_numbers<[1], [0], [0], [1], [0, 0, 1, 1], [], []>} : vector<16x256xf32>, vector<256x512xf32>, vector<16x512xf32> -> vector<16x512xf32>
    %c0_18 = arith.constant 0 : index
    %c0_19 = arith.constant 0 : index
    %27 = vector.load %arg2[%c0_18, %c0_19] : memref<16x8xf32, #tpu.memory_space<vmem>>, vector<16x8xf32>
    %c0_20 = arith.constant 0 : index
    %c0_21 = arith.constant 0 : index
    %28 = vector.load %arg3[%c0_20, %c0_21] : memref<16x8xf32, #tpu.memory_space<vmem>>, vector<16x8xf32>
    %c0_22 = arith.constant 0 : index
    %c0_23 = arith.constant 0 : index
    %29 = vector.load %arg4[%c0_22, %c0_23] : memref<8x16xf32, #tpu.memory_space<vmem>>, vector<8x16xf32>
    %cst_24 = arith.constant dense<0.000000e+00> : vector<16x256xf32>
    %30 = tpu.matmul %27, %23, %cst_24 {dimension_numbers = #tpu.dot_dimension_numbers<[1], [0], [0], [1], [0, 0, 1, 1], [], []>} : vector<16x8xf32>, vector<8x256xf32>, vector<16x256xf32> -> vector<16x256xf32>
    %cst_25 = arith.constant dense<0.000000e+00> : vector<16x512xf32>
    %31 = tpu.matmul %28, %24, %cst_25 {dimension_numbers = #tpu.dot_dimension_numbers<[1], [0], [0], [1], [0, 0, 1, 1], [], []>} : vector<16x8xf32>, vector<8x512xf32>, vector<16x512xf32> -> vector<16x512xf32>
    %32 = arith.addf %31, %26 : vector<16x512xf32>
    %33 = vector.extract_strided_slice %32 {offsets = [0, 0], sizes = [16, 256], strides = [1, 1]} : vector<16x512xf32> to vector<16x256xf32>
    %34 = vector.extract_strided_slice %32 {offsets = [0, 256], sizes = [16, 256], strides = [1, 1]} : vector<16x512xf32> to vector<16x256xf32>
    %35 = arith.mulf %30, %33 : vector<16x256xf32>
    %c0_26 = arith.constant 0 : index
    %c0_27 = arith.constant 0 : index
    %36 = vector.load %arg9[%c0_26, %c0_27] : memref<256x32xf32, #tpu.memory_space<vmem>>, vector<256x32xf32>
    %cst_28 = arith.constant dense<0.000000e+00> : vector<16x32xf32>
    %37 = tpu.matmul %35, %36, %cst_28 {dimension_numbers = #tpu.dot_dimension_numbers<[1], [0], [0], [1], [0, 0, 1, 1], [], []>} : vector<16x256xf32>, vector<256x32xf32>, vector<16x32xf32> -> vector<16x32xf32>
    %c0_29 = arith.constant 0 : index
    %c0_30 = arith.constant 0 : index
    %38 = vector.load %arg5[%c0_29, %c0_30] : memref<16x256xf32, #tpu.memory_space<vmem>>, vector<16x256xf32>
    %c0_31 = arith.constant 0 : index
    %c0_32 = arith.constant 0 : index
    %39 = vector.load %arg6[%c0_31, %c0_32] : memref<32x256xf32, #tpu.memory_space<vmem>>, vector<32x256xf32>
    %cst_33 = arith.constant dense<0.000000e+00> : vector<16x256xf32>
    %40 = tpu.matmul %37, %39, %cst_33 {dimension_numbers = #tpu.dot_dimension_numbers<[1], [0], [0], [1], [0, 0, 1, 1], [], []>} : vector<16x32xf32>, vector<32x256xf32>, vector<16x256xf32> -> vector<16x256xf32>
    %41 = arith.mulf %38, %40 : vector<16x256xf32>
    %cst_34 = arith.constant 1.000000e+00 : f32
    %42 = vector.broadcast %cst_34 : f32 to vector<16x256xf32>
    %43 = arith.subf %38, %42 : vector<16x256xf32>
    %cst_35 = arith.constant 1.000000e+30 : f32
    %44 = vector.broadcast %cst_35 : f32 to vector<16x256xf32>
    %45 = arith.mulf %43, %44 : vector<16x256xf32>
    %46 = arith.addf %41, %45 : vector<16x256xf32>
    %cst_36 = arith.constant dense<0xFF800000> : vector<256xf32>
    %47 = vector.multi_reduction <maximumf>, %46, %cst_36 [0] : vector<16x256xf32> to vector<256xf32>
    %48 = vector.shape_cast %47 : vector<256xf32> to vector<1x256xf32>
    %49 = vector.broadcast %48 : vector<1x256xf32> to vector<16x256xf32>
    %50 = arith.mulf %38, %49 : vector<16x256xf32>
    %c0_37 = arith.constant 0 : index
    %c0_38 = arith.constant 0 : index
    %51 = vector.load %arg7[%c0_37, %c0_38] : memref<256x32xf32, #tpu.memory_space<vmem>>, vector<256x32xf32>
    %cst_39 = arith.constant dense<0.000000e+00> : vector<16x32xf32>
    %52 = tpu.matmul %50, %51, %cst_39 {dimension_numbers = #tpu.dot_dimension_numbers<[1], [0], [0], [1], [0, 0, 1, 1], [], []>} : vector<16x256xf32>, vector<256x32xf32>, vector<16x32xf32> -> vector<16x32xf32>
    %53 = arith.subf %37, %52 : vector<16x32xf32>
    %54 = math.exp %53 : vector<16x32xf32>
    %cst_40 = arith.constant dense<0.000000e+00> : vector<8x32xf32>
    %55 = tpu.matmul %29, %54, %cst_40 {dimension_numbers = #tpu.dot_dimension_numbers<[1], [0], [0], [1], [0, 0, 1, 1], [], []>} : vector<8x16xf32>, vector<16x32xf32>, vector<8x32xf32> -> vector<8x32xf32>
    %cst_41 = arith.constant dense<0.000000e+00> : vector<16x32xf32>
    %56 = tpu.matmul %27, %55, %cst_41 {dimension_numbers = #tpu.dot_dimension_numbers<[1], [0], [0], [1], [0, 0, 1, 1], [], []>} : vector<16x8xf32>, vector<8x32xf32>, vector<16x32xf32> -> vector<16x32xf32>
    %cst_42 = arith.constant 1.000000e-16 : f32
    %57 = vector.broadcast %cst_42 : f32 to vector<16x32xf32>
    %58 = arith.addf %56, %57 : vector<16x32xf32>
    %59 = arith.divf %54, %58 : vector<16x32xf32>
    %c0_43 = arith.constant 0 : index
    %c0_44 = arith.constant 0 : index
    %60 = vector.load %arg10[%c0_43, %c0_44] : memref<32x256xf32, #tpu.memory_space<vmem>>, vector<32x256xf32>
    %cst_45 = arith.constant dense<0.000000e+00> : vector<16x256xf32>
    %61 = tpu.matmul %59, %60, %cst_45 {dimension_numbers = #tpu.dot_dimension_numbers<[1], [0], [0], [1], [0, 0, 1, 1], [], []>} : vector<16x32xf32>, vector<32x256xf32>, vector<16x256xf32> -> vector<16x256xf32>
    %62 = arith.mulf %34, %61 : vector<16x256xf32>
    %cst_46 = arith.constant dense<0.000000e+00> : vector<8x256xf32>
    %63 = tpu.matmul %29, %62, %cst_46 {dimension_numbers = #tpu.dot_dimension_numbers<[1], [0], [0], [1], [0, 0, 1, 1], [], []>} : vector<8x16xf32>, vector<16x256xf32>, vector<8x256xf32> -> vector<8x256xf32>
    %c0_47 = arith.constant 0 : index
    %c0_48 = arith.constant 0 : index
    %64 = vector.load %arg16[%c0_47, %c0_48] : memref<256x256xf32, #tpu.memory_space<vmem>>, vector<256x256xf32>
    %cst_49 = arith.constant dense<0.000000e+00> : vector<8x256xf32>
    %65 = tpu.matmul %63, %64, %cst_49 {dimension_numbers = #tpu.dot_dimension_numbers<[1], [0], [0], [1], [0, 0, 1, 1], [], []>} : vector<8x256xf32>, vector<256x256xf32>, vector<8x256xf32> -> vector<8x256xf32>
    %66 = arith.addf %1, %65 : vector<8x256xf32>
    %c0_50 = arith.constant 0 : index
    %c0_51 = arith.constant 0 : index
    %67 = vector.load %arg13[%c0_50, %c0_51] : memref<1x256xf32, #tpu.memory_space<vmem>>, vector<1x256xf32>
    %68 = arith.mulf %66, %66 : vector<8x256xf32>
    %cst_52 = arith.constant dense<0.000000e+00> : vector<8x256xf32>
    %69 = tpu.matmul %68, %0, %cst_52 {dimension_numbers = #tpu.dot_dimension_numbers<[1], [0], [0], [1], [0, 0, 1, 1], [], []>} : vector<8x256xf32>, vector<256x256xf32>, vector<8x256xf32> -> vector<8x256xf32>
    %cst_53 = arith.constant 9.99999997E-7 : f32
    %70 = vector.broadcast %cst_53 : f32 to vector<8x256xf32>
    %71 = arith.addf %69, %70 : vector<8x256xf32>
    %72 = math.rsqrt %71 : vector<8x256xf32>
    %73 = arith.mulf %66, %72 : vector<8x256xf32>
    %74 = vector.broadcast %67 : vector<1x256xf32> to vector<8x256xf32>
    %75 = arith.mulf %73, %74 : vector<8x256xf32>
    %c0_54 = arith.constant 0 : index
    %c0_55 = arith.constant 0 : index
    %76 = vector.load %arg17[%c0_54, %c0_55] : memref<256x1024xf32, #tpu.memory_space<vmem>>, vector<256x1024xf32>
    %cst_56 = arith.constant dense<0.000000e+00> : vector<8x1024xf32>
    %77 = tpu.matmul %75, %76, %cst_56 {dimension_numbers = #tpu.dot_dimension_numbers<[1], [0], [0], [1], [0, 0, 1, 1], [], []>} : vector<8x256xf32>, vector<256x1024xf32>, vector<8x1024xf32> -> vector<8x1024xf32>
    %78 = vector.extract_strided_slice %77 {offsets = [0, 0], sizes = [8, 512], strides = [1, 1]} : vector<8x1024xf32> to vector<8x512xf32>
    %79 = vector.extract_strided_slice %77 {offsets = [0, 512], sizes = [8, 512], strides = [1, 1]} : vector<8x1024xf32> to vector<8x512xf32>
    %cst_57 = arith.constant 0.000000e+00 : f32
    %80 = vector.broadcast %cst_57 : f32 to vector<8x512xf32>
    %81 = arith.subf %80, %78 : vector<8x512xf32>
    %82 = math.exp %81 : vector<8x512xf32>
    %cst_58 = arith.constant 1.000000e+00 : f32
    %83 = vector.broadcast %cst_58 : f32 to vector<8x512xf32>
    %84 = arith.addf %83, %82 : vector<8x512xf32>
    %cst_59 = arith.constant 1.000000e+00 : f32
    %85 = vector.broadcast %cst_59 : f32 to vector<8x512xf32>
    %86 = arith.divf %85, %84 : vector<8x512xf32>
    %87 = arith.mulf %78, %86 : vector<8x512xf32>
    %88 = arith.mulf %87, %79 : vector<8x512xf32>
    %c0_60 = arith.constant 0 : index
    %c0_61 = arith.constant 0 : index
    %89 = vector.load %arg18[%c0_60, %c0_61] : memref<512x256xf32, #tpu.memory_space<vmem>>, vector<512x256xf32>
    %cst_62 = arith.constant dense<0.000000e+00> : vector<8x256xf32>
    %90 = tpu.matmul %88, %89, %cst_62 {dimension_numbers = #tpu.dot_dimension_numbers<[1], [0], [0], [1], [0, 0, 1, 1], [], []>} : vector<8x512xf32>, vector<512x256xf32>, vector<8x256xf32> -> vector<8x256xf32>
    %91 = arith.addf %66, %90 : vector<8x256xf32>
    %c0_63 = arith.constant 0 : index
    %c0_64 = arith.constant 0 : index
    %92 = vector.load %arg19[%c0_63, %c0_64] : memref<8x256xf32, #tpu.memory_space<vmem>>, vector<8x256xf32>
    tpu.vector_store %arg19[%c0_63, %c0_64], %91 {strides = array<i32>} : memref<8x256xf32, #tpu.memory_space<vmem>>, vector<8x256xf32>,
    return
  }
}

</mosaic_0001>

<llo_original>
// kernel: tile.14
$region0: #{tile.14}
  %s0 = inlined_call_operand.vmem [shape: f32[32,8,32], index: 0, kind: input, shape index: {}]
  %s1 = inlined_call_operand.vmem [shape: f32[32,256], index: 1, kind: output, shape index: {}]
  %v2 = vld [vmem:[%s0] ss:$4 sm:$0xff]
  %vm3 = vcmask 261120
  %4 = vst.msk [vmem:[%s1] ss:$8 sm:$0x3] %vm3, %v2
  %s5 = scalar_lea.vmem %s1, 4294967281
  %6 = vst.msk [vmem:[%s5] ss:$8 sm:$0xc] %vm3, %v2
  %s7 = scalar_lea.vmem %s1, 4294967266
  %8 = vst.msk [vmem:[%s7] ss:$8 sm:$0x30] %vm3, %v2
  %s9 = scalar_lea.vmem %s1, 4294967251
  %10 = vst.msk [vmem:[%s9] ss:$8 sm:$0xc0] %vm3, %v2
  %s11 = scalar_lea.vmem %s0, 32
  %v12 = vld [vmem:[%s11] ss:$4 sm:$0xff]
  %vm13 = vcmask 261120
  %s14 = scalar_lea.vmem %s1, 4
  %15 = vst.msk [vmem:[%s14] ss:$8 sm:$0x3] %vm13, %v12
  %s16 = scalar_lea.vmem %s1, 4294967285
  %17 = vst.msk [vmem:[%s16] ss:$8 sm:$0xc] %vm13, %v12
  %s18 = scalar_lea.vmem %s1, 4294967270
  %19 = vst.msk [vmem:[%s18] ss:$8 sm:$0x30] %vm13, %v12
  %s20 = scalar_lea.vmem %s1, 4294967255
  %21 = vst.msk [vmem:[%s20] ss:$8 sm:$0xc0] %vm13, %v12
  %s22 = scalar_lea.vmem %s0, 64
  %v23 = vld [vmem:[%s22] ss:$4 sm:$0xff]
  %vm24 = vcmask 261120
  %s25 = scalar_lea.vmem %s1, 16
  %26 = vst.msk [vmem:[%s25] ss:$8 sm:$0x3] %vm24, %v23
  %s27 = scalar_lea.vmem %s1, 1
  %28 = vst.msk [vmem:[%s27] ss:$8 sm:$0xc] %vm24, %v23
  %s29 = scalar_lea.vmem %s1, 4294967282
  %30 = vst.msk [vmem:[%s29] ss:$8 sm:$0x30] %vm24, %v23
  %s31 = scalar_lea.vmem %s1, 4294967267
  %32 = vst.msk [vmem:[%s31] ss:$8 sm:$0xc0] %vm24, %v23
  %s33 = scalar_lea.vmem %s0, 96
  %v34 = vld [vmem:[%s33] ss:$4 sm:$0xff]
  %vm35 = vcmask 261120
  %s36 = scalar_lea.vmem %s1, 20
  %37 = vst.msk [vmem:[%s36] ss:$8 sm:$0x3] %vm35, %v34
  %s38 = scalar_lea.vmem %s1, 5
  %39 = vst.msk [vmem:[%s38] ss:$8 sm:$0xc] %vm35, %v34
  %s40 = scalar_lea.vmem %s1, 4294967286
  %41 = vst.msk [vmem:[%s40] ss:$8 sm:$0x30] %vm35, %v34
  %s42 = scalar_lea.vmem %s1, 4294967271
  %43 = vst.msk [vmem:[%s42] ss:$8 sm:$0xc0] %vm35, %v34
  %s44 = scalar_lea.vmem %s0, 128
  %v45 = vld [vmem:[%s44] ss:$4 sm:$0xff]
  %vm46 = vcmask 261120
  %s47 = scalar_lea.vmem %s1, 32
  %48 = vst.msk [vmem:[%s47] ss:$8 sm:$0x3] %vm46, %v45
  %s49 = scalar_lea.vmem %s1, 17
  %50 = vst.msk [vmem:[%s49] ss:$8 sm:$0xc] %vm46, %v45
  %s51 = scalar_lea.vmem %s1, 2
  %52 = vst.msk [vmem:[%s51] ss:$8 sm:$0x30] %vm46, %v45
  %s53 = scalar_lea.vmem %s1, 4294967283
  %54 = vst.msk [vmem:[%s53] ss:$8 sm:$0xc0] %vm46, %v45
  %s55 = scalar_lea.vmem %s0, 160
  %v56 = vld [vmem:[%s55] ss:$4 sm:$0xff]
  %vm57 = vcmask 261120
  %s58 = scalar_lea.vmem %s1, 36
  %59 = vst.msk [vmem:[%s58] ss:$8 sm:$0x3] %vm57, %v56
  %s60 = scalar_lea.vmem %s1, 21
  %61 = vst.msk [vmem:[%s60] ss:$8 sm:$0xc] %vm57, %v56
  %s62 = scalar_lea.vmem %s1, 6
  %63 = vst.msk [vmem:[%s62] ss:$8 sm:$0x30] %vm57, %v56
  %s64 = scalar_lea.vmem %s1, 4294967287
  %65 = vst.msk [vmem:[%s64] ss:$8 sm:$0xc0] %vm57, %v56
  %s66 = scalar_lea.vmem %s0, 192
  %v67 = vld [vmem:[%s66] ss:$4 sm:$0xff]
  %vm68 = vcmask 261120
  %s69 = scalar_lea.vmem %s1, 48
  %70 = vst.msk [vmem:[%s69] ss:$8 sm:$0x3] %vm68, %v67
  %s71 = scalar_lea.vmem %s1, 33
  %72 = vst.msk [vmem:[%s71] ss:$8 sm:$0xc] %vm68, %v67
  %s73 = scalar_lea.vmem %s1, 18
  %74 = vst.msk [vmem:[%s73] ss:$8 sm:$0x30] %vm68, %v67
  %s75 = scalar_lea.vmem %s1, 3
  %76 = vst.msk [vmem:[%s75] ss:$8 sm:$0xc0] %vm68, %v67
  %s77 = scalar_lea.vmem %s0, 224
  %v78 = vld [vmem:[%s77] ss:$4 sm:$0xff]
  %vm79 = vcmask 261120
  %s80 = scalar_lea.vmem %s1, 52
  %81 = vst.msk [vmem:[%s80] ss:$8 sm:$0x3] %vm79, %v78
  %s82 = scalar_lea.vmem %s1, 37
  %83 = vst.msk [vmem:[%s82] ss:$8 sm:$0xc] %vm79, %v78
  %s84 = scalar_lea.vmem %s1, 22
  %85 = vst.msk [vmem:[%s84] ss:$8 sm:$0x30] %vm79, %v78
  %s86 = scalar_lea.vmem %s1, 7
  %87 = vst.msk [vmem:[%s86] ss:$8 sm:$0xc0] %vm79, %v78
  %s88 = scalar_lea.vmem %s0, 3
  %v89 = vld [vmem:[%s88] ss:$8 sm:$0xf]
  %s90 = scalar_lea.vmem %s0, 3
  %v91 = vld [vmem:[%s90] ss:$8 sm:$0xf0]
  %vm92 = vcmask 1047556
  %v93 = vsel %vm92, %v91, %v89
  %94 = vrot.lane.b32.xlu0 %v93, 96
  %v95 = vpop.permute.xlu0 %94
  %vm96 = vcmask 1048320
  %97 = vst.msk [vmem:[%s1] sm:$0xff] %vm96, %v95
  %s98 = scalar_lea.vmem %s0, 131
  %v99 = vld [vmem:[%s98] ss:$8 sm:$0xf]
  %s100 = scalar_lea.vmem %s0, 131
  %v101 = vld [vmem:[%s100] ss:$8 sm:$0xf0]
  %vm102 = vcmask 1047556
  %v103 = vsel %vm102, %v101, %v99
  %104 = vrot.lane.b32.xlu0 %v103, 96
  %v105 = vpop.permute.xlu0 %104
  %vm106 = vcmask 1048320
  %s107 = scalar_lea.vmem %s1, 32
  %108 = vst.msk [vmem:[%s107] sm:$0xff] %vm106, %v105
  %s109 = scalar_lea.vmem %s0, 7
  %v110 = vld [vmem:[%s109] ss:$8 sm:$0xf]
  %s111 = scalar_lea.vmem %s0, 7
  %v112 = vld [vmem:[%s111] ss:$8 sm:$0xf0]
  %vm113 = vcmask 1047556
  %v114 = vsel %vm113, %v112, %v110
  %115 = vrot.lane.b32.xlu0 %v114, 96
  %v116 = vpop.permute.xlu0 %115
  %vm117 = vcmask 1048320
  %s118 = scalar_lea.vmem %s1, 8
  %119 = vst.msk [vmem:[%s118] sm:$0xff] %vm117, %v116
  %s120 = scalar_lea.vmem %s0, 135
  %v121 = vld [vmem:[%s120] ss:$8 sm:$0xf]
  %s122 = scalar_lea.vmem %s0, 135
  %v123 = vld [vmem:[%s122] ss:$8 sm:$0xf0]
  %vm124 = vcmask 1047556
  %v125 = vsel %vm124, %v123, %v121
  %126 = vrot.lane.b32.xlu0 %v125, 96
  %v127 = vpop.permute.xlu0 %126
  %vm128 = vcmask 1048320
  %s129 = scalar_lea.vmem %s1, 40
  %130 = vst.msk [vmem:[%s129] sm:$0xff] %vm128, %v127
  %s131 = scalar_lea.vmem %s0, 67
  %v132 = vld [vmem:[%s131] ss:$8 sm:$0xf]
  %s133 = scalar_lea.vmem %s0, 67
  %v134 = vld [vmem:[%s133] ss:$8 sm:$0xf0]
  %vm135 = vcmask 1047556
  %v136 = vsel %vm135, %v134, %v132
  %137 = vrot.lane.b32.xlu0 %v136, 96
  %v138 = vpop.permute.xlu0 %137
  %vm139 = vcmask 1048320
  %s140 = scalar_lea.vmem %s1, 16
  %141 = vst.msk [vmem:[%s140] sm:$0xff] %vm139, %v138
  %s142 = scalar_lea.vmem %s0, 195
  %v143 = vld [vmem:[%s142] ss:$8 sm:$0xf]
  %s144 = scalar_lea.vmem %s0, 195
  %v145 = vld [vmem:[%s144] ss:$8 sm:$0xf0]
  %vm146 = vcmask 1047556
  %v147 = vsel %vm146, %v145, %v143
  %148 = vrot.lane.b32.xlu0 %v147, 96
  %v149 = vpop.permute.xlu0 %148
  %vm150 = vcmask 1048320
  %s151 = scalar_lea.vmem %s1, 48
  %152 = vst.msk [vmem:[%s151] sm:$0xff] %vm150, %v149
  %s153 = scalar_lea.vmem %s0, 71
  %v154 = vld [vmem:[%s153] ss:$8 sm:$0xf]
  %s155 = scalar_lea.vmem %s0, 71
  %v156 = vld [vmem:[%s155] ss:$8 sm:$0xf0]
  %vm157 = vcmask 1047556
  %v158 = vsel %vm157, %v156, %v154
  %159 = vrot.lane.b32.xlu0 %v158, 96
  %v160 = vpop.permute.xlu0 %159
  %vm161 = vcmask 1048320
  %s162 = scalar_lea.vmem %s1, 24
  %163 = vst.msk [vmem:[%s162] sm:$0xff] %vm161, %v160
  %s164 = scalar_lea.vmem %s0, 199
  %v165 = vld [vmem:[%s164] ss:$8 sm:$0xf]
  %s166 = scalar_lea.vmem %s0, 199
  %v167 = vld [vmem:[%s166] ss:$8 sm:$0xf0]
  %vm168 = vcmask 1047556
  %v169 = vsel %vm168, %v167, %v165
  %170 = vrot.lane.b32.xlu0 %v169, 96
  %v171 = vpop.permute.xlu0 %170
  %vm172 = vcmask 1048320
  %s173 = scalar_lea.vmem %s1, 56
  %174 = vst.msk [vmem:[%s173] sm:$0xff] %vm172, %v171
  %s175 = scalar_lea.vmem %s0, 2
  %v176 = vld [vmem:[%s175] ss:$8 sm:$0xf]
  %s177 = scalar_lea.vmem %s0, 2
  %v178 = vld [vmem:[%s177] ss:$8 sm:$0xf0]
  %vm179 = vcmask 1047556
  %v180 = vsel %vm179, %v178, %v176
  %181 = vrot.lane.b32.xlu0 %v180, 64
  %v182 = vpop.permute.xlu0 %181
  %vm183 = vcmask 785920
  %184 = vst.msk [vmem:[%s1] sm:$0xff] %vm183, %v182
  %s185 = scalar_lea.vmem %s0, 130
  %v186 = vld [vmem:[%s185] ss:$8 sm:$0xf]
  %s187 = scalar_lea.vmem %s0, 130
  %v188 = vld [vmem:[%s187] ss:$8 sm:$0xf0]
  %vm189 = vcmask 1047556
  %v190 = vsel %vm189, %v188, %v186
  %191 = vrot.lane.b32.xlu0 %v190, 64
  %v192 = vpop.permute.xlu0 %191
  %vm193 = vcmask 785920
  %s194 = scalar_lea.vmem %s1, 32
  %195 = vst.msk [vmem:[%s194] sm:$0xff] %vm193, %v192
  %s196 = scalar_lea.vmem %s0, 6
  %v197 = vld [vmem:[%s196] ss:$8 sm:$0xf]
  %s198 = scalar_lea.vmem %s0, 6
  %v199 = vld [vmem:[%s198] ss:$8 sm:$0xf0]
  %vm200 = vcmask 1047556
  %v201 = vsel %vm200, %v199, %v197
  %202 = vrot.lane.b32.xlu0 %v201, 64
  %v203 = vpop.permute.xlu0 %202
  %vm204 = vcmask 785920
  %s205 = scalar_lea.vmem %s1, 8
  %206 = vst.msk [vmem:[%s205] sm:$0xff] %vm204, %v203
  %s207 = scalar_lea.vmem %s0, 134
  %v208 = vld [vmem:[%s207] ss:$8 sm:$0xf]
  %s209 = scalar_lea.vmem %s0, 134
  %v210 = vld [vmem:[%s209] ss:$8 sm:$0xf0]
  %vm211 = vcmask 1047556
  %v212 = vsel %vm211, %v210, %v208
  %213 = vrot.lane.b32.xlu0 %v212, 64
  %v214 = vpop.permute.xlu0 %213
  %vm215 = vcmask 785920
  %s216 = scalar_lea.vmem %s1, 40
  %217 = vst.msk [vmem:[%s216] sm:$0xff] %vm215, %v214
  %s218 = scalar_lea.vmem %s0, 66
  %v219 = vld [vmem:[%s218] ss:$8 sm:$0xf]
  %s220 = scalar_lea.vmem %s0, 66
  %v221 = vld [vmem:[%s220] ss:$8 sm:$0xf0]
  %vm222 = vcmask 1047556
  %v223 = vsel %vm222, %v221, %v219
  %224 = vrot.lane.b32.xlu0 %v223, 64
  %v225 = vpop.permute.xlu0 %224
  %vm226 = vcmask 785920
  %s227 = scalar_lea.vmem %s1, 16
  %228 = vst.msk [vmem:[%s227] sm:$0xff] %vm226, %v225
  %s229 = scalar_lea.vmem %s0, 194
  %v230 = vld [vmem:[%s229] ss:$8 sm:$0xf]
  %s231 = scalar_lea.vmem %s0, 194
  %v232 = vld [vmem:[%s231] ss:$8 sm:$0xf0]
  %vm233 = vcmask 1047556
  %v234 = vsel %vm233, %v232, %v230
  %235 = vrot.lane.b32.xlu0 %v234, 64
  %v236 = vpop.permute.xlu0 %235
  %vm237 = vcmask 785920
  %s238 = scalar_lea.vmem %s1, 48
  %239 = vst.msk [vmem:[%s238] sm:$0xff] %vm237, %v236
  %s240 = scalar_lea.vmem %s0, 70
  %v241 = vld [vmem:[%s240] ss:$8 sm:$0xf]
  %s242 = scalar_lea.vmem %s0, 70
  %v243 = vld [vmem:[%s242] ss:$8 sm:$0xf0]
  %vm244 = vcmask 1047556
  %v245 = vsel %vm244, %v243, %v241
  %246 = vrot.lane.b32.xlu0 %v245, 64
  %v247 = vpop.permute.xlu0 %246
  %vm248 = vcmask 785920
  %s249 = scalar_lea.vmem %s1, 24
  %250 = vst.msk [vmem:[%s249] sm:$0xff] %vm248, %v247
  %s251 = scalar_lea.vmem %s0, 198
  %v252 = vld [vmem:[%s251] ss:$8 sm:$0xf]
  %s253 = scalar_lea.vmem %s0, 198
  %v254 = vld [vmem:[%s253] ss:$8 sm:$0xf0]
  %vm255 = vcmask 1047556
  %v256 = vsel %vm255, %v254, %v252
  %257 = vrot.lane.b32.xlu0 %v256, 64
  %v258 = vpop.permute.xlu0 %257
  %vm259 = vcmask 785920
  %s260 = scalar_lea.vmem %s1, 56
  %261 = vst.msk [vmem:[%s260] sm:$0xff] %vm259, %v258
  %s262 = scalar_lea.vmem %s0, 1
  %v263 = vld [vmem:[%s262] ss:$8 sm:$0xf]
  %s264 = scalar_lea.vmem %s0, 1
  %v265 = vld [vmem:[%s264] ss:$8 sm:$0xf0]
  %vm266 = vcmask 1047556
  %v267 = vsel %vm266, %v265, %v263
  %268 = vrot.lane.b32.xlu0 %v267, 32
  %v269 = vpop.permute.xlu0 %268
  %vm270 = vcmask 523520
  %271 = vst.msk [vmem:[%s1] sm:$0xff] %vm270, %v269
  %s272 = scalar_lea.vmem %s0, 129
  %v273 = vld [vmem:[%s272] ss:$8 sm:$0xf]
  %s274 = scalar_lea.vmem %s0, 129
  %v275 = vld [vmem:[%s274] ss:$8 sm:$0xf0]
  %vm276 = vcmask 1047556
  %v277 = vsel %vm276, %v275, %v273
  %278 = vrot.lane.b32.xlu0 %v277, 32
  %v279 = vpop.permute.xlu0 %278
  %vm280 = vcmask 523520
  %s281 = scalar_lea.vmem %s1, 32
  %282 = vst.msk [vmem:[%s281] sm:$0xff] %vm280, %v279
  %s283 = scalar_lea.vmem %s0, 5
  %v284 = vld [vmem:[%s283] ss:$8 sm:$0xf]
  %s285 = scalar_lea.vmem %s0, 5
  %v286 = vld [vmem:[%s285] ss:$8 sm:$0xf0]
  %vm287 = vcmask 1047556
  %v288 = vsel %vm287, %v286, %v284
  %289 = vrot.lane.b32.xlu0 %v288, 32
  %v290 = vpop.permute.xlu0 %289
  %vm291 = vcmask 523520
  %s292 = scalar_lea.vmem %s1, 8
  %293 = vst.msk [vmem:[%s292] sm:$0xff] %vm291, %v290
  %s294 = scalar_lea.vmem %s0, 133
  %v295 = vld [vmem:[%s294] ss:$8 sm:$0xf]
  %s296 = scalar_lea.vmem %s0, 133
  %v297 = vld [vmem:[%s296] ss:$8 sm:$0xf0]
  %vm298 = vcmask 1047556
  %v299 = vsel %vm298, %v297, %v295
  %300 = vrot.lane.b32.xlu0 %v299, 32
  %v301 = vpop.permute.xlu0 %300
  %vm302 = vcmask 523520
  %s303 = scalar_lea.vmem %s1, 40
  %304 = vst.msk [vmem:[%s303] sm:$0xff] %vm302, %v301
  %s305 = scalar_lea.vmem %s0, 65
  %v306 = vld [vmem:[%s305] ss:$8 sm:$0xf]
  %s307 = scalar_lea.vmem %s0, 65
  %v308 = vld [vmem:[%s307] ss:$8 sm:$0xf0]
  %vm309 = vcmask 1047556
  %v310 = vsel %vm309, %v308, %v306
  %311 = vrot.lane.b32.xlu0 %v310, 32
  %v312 = vpop.permute.xlu0 %311
  %vm313 = vcmask 523520
  %s314 = scalar_lea.vmem %s1, 16
  %315 = vst.msk [vmem:[%s314] sm:$0xff] %vm313, %v312
  %s316 = scalar_lea.vmem %s0, 193
  %v317 = vld [vmem:[%s316] ss:$8 sm:$0xf]
  %s318 = scalar_lea.vmem %s0, 193
  %v319 = vld [vmem:[%s318] ss:$8 sm:$0xf0]
  %vm320 = vcmask 1047556
  %v321 = vsel %vm320, %v319, %v317
  %322 = vrot.lane.b32.xlu0 %v321, 32
  %v323 = vpop.permute.xlu0 %322
  %vm324 = vcmask 523520
  %s325 = scalar_lea.vmem %s1, 48
  %326 = vst.msk [vmem:[%s325] sm:$0xff] %vm324, %v323
  %s327 = scalar_lea.vmem %s0, 69
  %v328 = vld [vmem:[%s327] ss:$8 sm:$0xf]
  %s329 = scalar_lea.vmem %s0, 69
  %v330 = vld [vmem:[%s329] ss:$8 sm:$0xf0]
  %vm331 = vcmask 1047556
  %v332 = vsel %vm331, %v330, %v328
  %333 = vrot.lane.b32.xlu0 %v332, 32
  %v334 = vpop.permute.xlu0 %333
  %vm335 = vcmask 523520
  %s336 = scalar_lea.vmem %s1, 24
  %337 = vst.msk [vmem:[%s336] sm:$0xff] %vm335, %v334
  %s338 = scalar_lea.vmem %s0, 197
  %v339 = vld [vmem:[%s338] ss:$8 sm:$0xf]
  %s340 = scalar_lea.vmem %s0, 197
  %v341 = vld [vmem:[%s340] ss:$8 sm:$0xf0]
  %vm342 = vcmask 1047556
  %v343 = vsel %vm342, %v341, %v339
  %344 = vrot.lane.b32.xlu0 %v343, 32
  %v345 = vpop.permute.xlu0 %344
  %vm346 = vcmask 523520
  %s347 = scalar_lea.vmem %s1, 56
  %348 = vst.msk [vmem:[%s347] sm:$0xff] %vm346, %v345

// kernel: gofa_gnn_forward_pallas.2
$region0: #{gofa_gnn_forward_pallas.2}
  #allocation0 [shape = 'u32[]', space=smem, size = 0x4, offset = 0x4, fixed_abs, tag = 'smem constant byte address 0x4 - core index']
  #allocation1 [shape = 'u32[144,128]{1,0:T(1,128)}', space=vmem, size = 0x12000, scoped, tag = 'internal scratch']
  %s0 = inlined_call_operand.vmem [shape: f32[8,256], index: 0, kind: input, shape index: {}, may-alias: {0,19}]
  %s1 = inlined_call_operand.vmem [shape: f32[16,256], index: 1, kind: input, shape index: {}]
  %s2 = inlined_call_operand.vmem [shape: f32[16,8], index: 2, kind: input, shape index: {}]
  %s3 = inlined_call_operand.vmem [shape: f32[16,8], index: 3, kind: input, shape index: {}]
  %s4 = inlined_call_operand.vmem [shape: f32[8,16], index: 4, kind: input, shape index: {}]
  %s5 = inlined_call_operand.vmem [shape: f32[16,256], index: 5, kind: input, shape index: {}]
  %s6 = inlined_call_operand.vmem [shape: f32[32,256], index: 6, kind: input, shape index: {}]
  %s7 = inlined_call_operand.vmem [shape: f32[256,32], index: 7, kind: input, shape index: {}]
  %s8 = inlined_call_operand.vmem [shape: f32[256,256], index: 8, kind: input, shape index: {}]
  %s9 = inlined_call_operand.vmem [shape: f32[256,32], index: 9, kind: input, shape index: {}]
  %s10 = inlined_call_operand.vmem [shape: f32[32,256], index: 10, kind: input, shape index: {}]
  %s11 = inlined_call_operand.vmem [shape: f32[1,256], index: 11, kind: input, shape index: {}]
  %s12 = inlined_call_operand.vmem [shape: f32[1,256], index: 12, kind: input, shape index: {}]
  %s13 = inlined_call_operand.vmem [shape: f32[1,256], index: 13, kind: input, shape index: {}]
  %s14 = inlined_call_operand.vmem [shape: f32[256,768], index: 14, kind: input, shape index: {}]
  %s15 = inlined_call_operand.vmem [shape: f32[256,512], index: 15, kind: input, shape index: {}]
  %s16 = inlined_call_operand.vmem [shape: f32[256,256], index: 16, kind: input, shape index: {}]
  %s17 = inlined_call_operand.vmem [shape: f32[256,1024], index: 17, kind: input, shape index: {}]
  %s18 = inlined_call_operand.vmem [shape: f32[512,256], index: 18, kind: input, shape index: {}]
  %s19 = inlined_call_operand.vmem [shape: f32[8,256], index: 19, kind: output, shape index: {}, may-alias: {0,19}]
  %s20 = sld [smem:[#allocation0]]
  $region86: #{gofa_gnn_forward_pallas.2} parent=0
    _
  %s22 = ssub.s32 1, %s20
  %s23 = scalar_select 0, %s22, %s20
  // Predicated region
  $region2: #{gofa_gnn_forward_pallas.2} parent=0 // pred_check
    _
  $region3: #{gofa_gnn_forward_pallas.2} parent=0 // pred_check_branch
    %25 = sbr.rel (0) target = $region5
  $region4: #{gofa_gnn_forward_pallas.2} parent=0 // pred_region
    _
  $region5: #{gofa_gnn_forward_pallas.2} parent=0 // pred_fallthru
    _
  // Predicated region
  $region6: #{gofa_gnn_forward_pallas.2} parent=0 // pred_check
    _
  $region7: #{gofa_gnn_forward_pallas.2} parent=0 // pred_check_branch
    %27 = sbr.rel (0) target = $region9
  $region8: #{gofa_gnn_forward_pallas.2} parent=0 // pred_region
    _
  $region9: #{gofa_gnn_forward_pallas.2} parent=0 // pred_fallthru
    _
  // Predicated region
  $region10: #{gofa_gnn_forward_pallas.2} parent=0 // pred_check
    _
  $region11: #{gofa_gnn_forward_pallas.2} parent=0 // pred_check_branch
    %29 = sbr.rel (0) target = $region13
  $region12: #{gofa_gnn_forward_pallas.2} parent=0 // pred_region
    _
  $region13: #{gofa_gnn_forward_pallas.2} parent=0 // pred_fallthru
    _
  // Predicated region
  $region14: #{gofa_gnn_forward_pallas.2} parent=0 // pred_check
    _
  $region15: #{gofa_gnn_forward_pallas.2} parent=0 // pred_check_branch
    %31 = sbr.rel (0) target = $region17
  $region16: #{gofa_gnn_forward_pallas.2} parent=0 // pred_region
    _
  $region17: #{gofa_gnn_forward_pallas.2} parent=0 // pred_fallthru
    _
  // Predicated region
  $region18: #{gofa_gnn_forward_pallas.2} parent=0 // pred_check
    _
  $region19: #{gofa_gnn_forward_pallas.2} parent=0 // pred_check_branch
    %33 = sbr.rel (0) target = $region21
  $region20: #{gofa_gnn_forward_pallas.2} parent=0 // pred_region
    _
  $region21: #{gofa_gnn_forward_pallas.2} parent=0 // pred_fallthru
    _
  // Predicated region
  $region22: #{gofa_gnn_forward_pallas.2} parent=0 // pred_check
    _
  $region23: #{gofa_gnn_forward_pallas.2} parent=0 // pred_check_branch
    %35 = sbr.rel (0) target = $region25
  $region24: #{gofa_gnn_forward_pallas.2} parent=0 // pred_region
    _
  $region25: #{gofa_gnn_forward_pallas.2} parent=0 // pred_fallthru
    _
  // Predicated region
  $region26: #{gofa_gnn_forward_pallas.2} parent=0 // pred_check
    _
  $region27: #{gofa_gnn_forward_pallas.2} parent=0 // pred_check_branch
    %37 = sbr.rel (0) target = $region29
  $region28: #{gofa_gnn_forward_pallas.2} parent=0 // pred_region
    _
  $region29: #{gofa_gnn_forward_pallas.2} parent=0 // pred_fallthru
    _
  // Predicated region
  $region30: #{gofa_gnn_forward_pallas.2} parent=0 // pred_check
    _
  $region31: #{gofa_gnn_forward_pallas.2} parent=0 // pred_check_branch
    %39 = sbr.rel (0) target = $region33
  $region32: #{gofa_gnn_forward_pallas.2} parent=0 // pred_region
    _
  $region33: #{gofa_gnn_forward_pallas.2} parent=0 // pred_fallthru
    _
  // Predicated region
  $region34: #{gofa_gnn_forward_pallas.2} parent=0 // pred_check
    _
  $region35: #{gofa_gnn_forward_pallas.2} parent=0 // pred_check_branch
    %41 = sbr.rel (0) target = $region37
  $region36: #{gofa_gnn_forward_pallas.2} parent=0 // pred_region
    _
  $region37: #{gofa_gnn_forward_pallas.2} parent=0 // pred_fallthru
    _
  // Predicated region
  $region38: #{gofa_gnn_forward_pallas.2} parent=0 // pred_check
    _
  $region39: #{gofa_gnn_forward_pallas.2} parent=0 // pred_check_branch
    %43 = sbr.rel (0) target = $region41
  $region40: #{gofa_gnn_forward_pallas.2} parent=0 // pred_region
    _
  $region41: #{gofa_gnn_forward_pallas.2} parent=0 // pred_fallthru
    _
  // Predicated region
  $region42: #{gofa_gnn_forward_pallas.2} parent=0 // pred_check
    _
  $region43: #{gofa_gnn_forward_pallas.2} parent=0 // pred_check_branch
    %45 = sbr.rel (0) target = $region45
  $region44: #{gofa_gnn_forward_pallas.2} parent=0 // pred_region
    _
  $region45: #{gofa_gnn_forward_pallas.2} parent=0 // pred_fallthru
    _
  // Predicated region
  $region46: #{gofa_gnn_forward_pallas.2} parent=0 // pred_check
    _
  $region47: #{gofa_gnn_forward_pallas.2} parent=0 // pred_check_branch
    %47 = sbr.rel (0) target = $region49
  $region48: #{gofa_gnn_forward_pallas.2} parent=0 // pred_region
    _
  $region49: #{gofa_gnn_forward_pallas.2} parent=0 // pred_fallthru
    _
  // Predicated region
  $region50: #{gofa_gnn_forward_pallas.2} parent=0 // pred_check
    _
  $region51: #{gofa_gnn_forward_pallas.2} parent=0 // pred_check_branch
    %49 = sbr.rel (0) target = $region53
  $region52: #{gofa_gnn_forward_pallas.2} parent=0 // pred_region
    _
  $region53: #{gofa_gnn_forward_pallas.2} parent=0 // pred_fallthru
    _
  // Predicated region
  $region54: #{gofa_gnn_forward_pallas.2} parent=0 // pred_check
    _
  $region55: #{gofa_gnn_forward_pallas.2} parent=0 // pred_check_branch
    %51 = sbr.rel (0) target = $region57
  $region56: #{gofa_gnn_forward_pallas.2} parent=0 // pred_region
    _
  $region57: #{gofa_gnn_forward_pallas.2} parent=0 // pred_fallthru
    _
  // Predicated region
  $region58: #{gofa_gnn_forward_pallas.2} parent=0 // pred_check
    _
  $region59: #{gofa_gnn_forward_pallas.2} parent=0 // pred_check_branch
    %53 = sbr.rel (0) target = $region61
  $region60: #{gofa_gnn_forward_pallas.2} parent=0 // pred_region
    _
  $region61: #{gofa_gnn_forward_pallas.2} parent=0 // pred_fallthru
    _
  // Predicated region
  $region62: #{gofa_gnn_forward_pallas.2} parent=0 // pred_check
    _
  $region63: #{gofa_gnn_forward_pallas.2} parent=0 // pred_check_branch
    %55 = sbr.rel (0) target = $region65
  $region64: #{gofa_gnn_forward_pallas.2} parent=0 // pred_region
    _
  $region65: #{gofa_gnn_forward_pallas.2} parent=0 // pred_fallthru
    _
  // Predicated region
  $region66: #{gofa_gnn_forward_pallas.2} parent=0 // pred_check
    _
  $region67: #{gofa_gnn_forward_pallas.2} parent=0 // pred_check_branch
    %57 = sbr.rel (0) target = $region69
  $region68: #{gofa_gnn_forward_pallas.2} parent=0 // pred_region
    _
  $region69: #{gofa_gnn_forward_pallas.2} parent=0 // pred_fallthru
    _
  // Predicated region
  $region70: #{gofa_gnn_forward_pallas.2} parent=0 // pred_check
    _
  $region71: #{gofa_gnn_forward_pallas.2} parent=0 // pred_check_branch
    %59 = sbr.rel (0) target = $region73
  $region72: #{gofa_gnn_forward_pallas.2} parent=0 // pred_region
    _
  $region73: #{gofa_gnn_forward_pallas.2} parent=0 // pred_fallthru
    _
  // Predicated region
  $region74: #{gofa_gnn_forward_pallas.2} parent=0 // pred_check
    _
  $region75: #{gofa_gnn_forward_pallas.2} parent=0 // pred_check_branch
    %61 = sbr.rel (0) target = $region77
  $region76: #{gofa_gnn_forward_pallas.2} parent=0 // pred_region
    _
  $region77: #{gofa_gnn_forward_pallas.2} parent=0 // pred_fallthru
    _
  %v62 = vld [vmem:[%s8] sm:$0xff]
  %v63 = vld [vmem:[%s8 + $0x8] sm:$0xff]
  %v64 = vld [vmem:[%s8 + $0x10] sm:$0xff]
  %v65 = vld [vmem:[%s8 + $0x18] sm:$0xff]
  %v66 = vld [vmem:[%s8 + $0x20] sm:$0xff]
  %v67 = vld [vmem:[%s8 + $0x28] sm:$0xff]
  %v68 = vld [vmem:[%s8 + $0x30] sm:$0xff]
  %v69 = vld [vmem:[%s8 + $0x38] sm:$0xff]
  %v70 = vld [vmem:[%s8 + $0x40] sm:$0xff]
  %v71 = vld [vmem:[%s8 + $0x48] sm:$0xff]
  %v72 = vld [vmem:[%s8 + $0x50] sm:$0xff]
  %v73 = vld [vmem:[%s8 + $0x58] sm:$0xff]
  %v74 = vld [vmem:[%s8 + $0x60] sm:$0xff]
  %v75 = vld [vmem:[%s8 + $0x68] sm:$0xff]
  %v76 = vld [vmem:[%s8 + $0x70] sm:$0xff]
  %v77 = vld [vmem:[%s8 + $0x78] sm:$0xff]
  %v78 = vld [vmem:[%s8 + $0x80] sm:$0xff]
  %v79 = vld [vmem:[%s8 + $0x88] sm:$0xff]
  %v80 = vld [vmem:[%s8 + $0x90] sm:$0xff]
  %v81 = vld [vmem:[%s8 + $0x98] sm:$0xff]
  %v82 = vld [vmem:[%s8 + $0xa0] sm:$0xff]
  %v83 = vld [vmem:[%s8 + $0xa8] sm:$0xff]
  %v84 = vld [vmem:[%s8 + $0xb0] sm:$0xff]
  %v85 = vld [vmem:[%s8 + $0xb8] sm:$0xff]
  %v86 = vld [vmem:[%s8 + $0xc0] sm:$0xff]
  %v87 = vld [vmem:[%s8 + $0xc8] sm:$0xff]
  %v88 = vld [vmem:[%s8 + $0xd0] sm:$0xff]
  %v89 = vld [vmem:[%s8 + $0xd8] sm:$0xff]
  %v90 = vld [vmem:[%s8 + $0xe0] sm:$0xff]
  %v91 = vld [vmem:[%s8 + $0xe8] sm:$0xff]
  %v92 = vld [vmem:[%s8 + $0xf0] sm:$0xff]
  %v93 = vld [vmem:[%s8 + $0xf8] sm:$0xff]
  %v94 = vld [vmem:[%s8 + $0x100] sm:$0xff]
  %v95 = vld [vmem:[%s8 + $0x108] sm:$0xff]
  %v96 = vld [vmem:[%s8 + $0x110] sm:$0xff]
  %v97 = vld [vmem:[%s8 + $0x118] sm:$0xff]
  %v98 = vld [vmem:[%s8 + $0x120] sm:$0xff]
  %v99 = vld [vmem:[%s8 + $0x128] sm:$0xff]
  %v100 = vld [vmem:[%s8 + $0x130] sm:$0xff]
  %v101 = vld [vmem:[%s8 + $0x138] sm:$0xff]
  %v102 = vld [vmem:[%s8 + $0x140] sm:$0xff]
  %v103 = vld [vmem:[%s8 + $0x148] sm:$0xff]
  %v104 = vld [vmem:[%s8 + $0x150] sm:$0xff]
  %v105 = vld [vmem:[%s8 + $0x158] sm:$0xff]
  %v106 = vld [vmem:[%s8 + $0x160] sm:$0xff]
  %v107 = vld [vmem:[%s8 + $0x168] sm:$0xff]
  %v108 = vld [vmem:[%s8 + $0x170] sm:$0xff]
  %v109 = vld [vmem:[%s8 + $0x178] sm:$0xff]
  %v110 = vld [vmem:[%s8 + $0x180] sm:$0xff]
  %v111 = vld [vmem:[%s8 + $0x188] sm:$0xff]
  %v112 = vld [vmem:[%s8 + $0x190] sm:$0xff]
  %v113 = vld [vmem:[%s8 + $0x198] sm:$0xff]
  %v114 = vld [vmem:[%s8 + $0x1a0] sm:$0xff]
  %v115 = vld [vmem:[%s8 + $0x1a8] sm:$0xff]
  %v116 = vld [vmem:[%s8 + $0x1b0] sm:$0xff]
  %v117 = vld [vmem:[%s8 + $0x1b8] sm:$0xff]
  %v118 = vld [vmem:[%s8 + $0x1c0] sm:$0xff]
  %v119 = vld [vmem:[%s8 + $0x1c8] sm:$0xff]
  %v120 = vld [vmem:[%s8 + $0x1d0] sm:$0xff]
  %v121 = vld [vmem:[%s8 + $0x1d8] sm:$0xff]
  %v122 = vld [vmem:[%s8 + $0x1e0] sm:$0xff]
  %v123 = vld [vmem:[%s8 + $0x1e8] sm:$0xff]
  %v124 = vld [vmem:[%s8 + $0x1f0] sm:$0xff]
  %v125 = vld [vmem:[%s8 + $0x1f8] sm:$0xff]
  %v126 = vld [vmem:[%s0] sm:$0xff]
  %v127 = vld [vmem:[%s0 + $0x8] sm:$0xff]
  %v128 = vld [vmem:[%s11] sm:$0x3]
  %v129 = vmul.f32 %v126, %v126
  %v130 = vmul.f32 %v127, %v127
  %131 = vmatprep.subr.mxu0 %v63
  %132 = vmatpush1.msra.mxu0 %v62
  %133 = vmatprep.subr.mxu0 %v65
  %134 = vmatpush1.msra.mxu0 %v64
  %135 = vmatprep.subr.mxu0 %v67
  %136 = vmatpush1.msra.mxu0 %v66
  %137 = vmatprep.subr.mxu0 %v69
  %138 = vmatpush1.msra.mxu0 %v68
  %139 = vmatprep.subr.mxu0 %v71
  %140 = vmatpush1.msra.mxu0 %v70
  %141 = vmatprep.subr.mxu0 %v73
  %142 = vmatpush1.msra.mxu0 %v72
  %143 = vmatprep.subr.mxu0 %v75
  %144 = vmatpush1.msra.mxu0 %v74
  %145 = vmatprep.subr.mxu0 %v77
  %146 = vmatpush1.msra.mxu0 %v76
  %147 = vmatprep.subr.mxu0 %v79
  %148 = vmatpush1.msra.mxu0 %v78
  %149 = vmatprep.subr.mxu0 %v81
  %150 = vmatpush1.msra.mxu0 %v80
  %151 = vmatprep.subr.mxu0 %v83
  %152 = vmatpush1.msra.mxu0 %v82
  %153 = vmatprep.subr.mxu0 %v85
  %154 = vmatpush1.msra.mxu0 %v84
  %155 = vmatprep.subr.mxu0 %v87
  %156 = vmatpush1.msra.mxu0 %v86
  %157 = vmatprep.subr.mxu0 %v89
  %158 = vmatpush1.msra.mxu0 %v88
  %159 = vmatprep.subr.mxu0 %v91
  %160 = vmatpush1.msra.mxu0 %v90
  %161 = vmatprep.subr.mxu0 %v93
  %162 = vmatpush1.msra.mxu0 %v92
  %163 = vmatprep.subr.mxu0 %v95
  %164 = vmatpush1.msra.mxu0 %v94
  %165 = vmatprep.subr.mxu0 %v97
  %166 = vmatpush1.msra.mxu0 %v96
  %167 = vmatprep.subr.mxu0 %v99
  %168 = vmatpush1.msra.mxu0 %v98
  %169 = vmatprep.subr.mxu0 %v101
  %170 = vmatpush1.msra.mxu0 %v100
  %171 = vmatprep.subr.mxu0 %v103
  %172 = vmatpush1.msra.mxu0 %v102
  %173 = vmatprep.subr.mxu0 %v105
  %174 = vmatpush1.msra.mxu0 %v104
  %175 = vmatprep.subr.mxu0 %v107
  %176 = vmatpush1.msra.mxu0 %v106
  %177 = vmatprep.subr.mxu0 %v109
  %178 = vmatpush1.msra.mxu0 %v108
  %179 = vmatprep.subr.mxu0 %v111
  %180 = vmatpush1.msra.mxu0 %v110
  %181 = vmatprep.subr.mxu0 %v113
  %182 = vmatpush1.msra.mxu0 %v112
  %183 = vmatprep.subr.mxu0 %v115
  %184 = vmatpush1.msra.mxu0 %v114
  %185 = vmatprep.subr.mxu0 %v117
  %186 = vmatpush1.msra.mxu0 %v116
  %187 = vmatprep.subr.mxu0 %v119
  %188 = vmatpush1.msra.mxu0 %v118
  %189 = vmatprep.subr.mxu0 %v121
  %190 = vmatpush1.msra.mxu0 %v120
  %191 = vmatprep.subr.mxu0 %v123
  %192 = vmatpush1.msra.mxu0 %v122
  %193 = vmatprep.subr.mxu0 %v125
  %194 = vmatpush1.msra.mxu0 %v124
  %195 = vmatprep.mubr.f32.mxu0 %v130
  %196 = vmatmul.mubr.f32.gmra.mrb[0].mxu0 %v129
  %v197 = vpop.f32.mrb[0].mxu0
  %v198 = vadd.f32 1e-06, %v197
  %v199 = vpop.f32.mrb[0].mxu0
  %v200 = vadd.f32 1e-06, %v199
  %201 = vdwg.mxu0
  %v202 = vrsqrt.pop %v198
  %v203 = vrsqrt.pop %v200
  %v204 = vmul.f32 %v126, %v202
  %v205 = vmul.f32 %v127, %v203
  %v207 = vlaneseq
  %v208 = vshrl.u32 %v207, 7
  %v209 = vsub.s32 0, %v208
  %v210 = vrot.slane %v128, %v209
  %v211 = vlaneseq
  %v212 = vshrl.u32 %v211, 7
  %v213 = vsub.s32 1, %v212
  %v214 = vrot.slane %v128, %v213
  %v217 = vmul.f32 %v204, %v210
  %v218 = vmul.f32 %v205, %v214
  %v219 = vld [vmem:[%s1] sm:$0xff]
  %v220 = vld [vmem:[%s1 + $0x8] sm:$0xff]
  %v221 = vld [vmem:[%s1 + $0x10] sm:$0xff]
  %v222 = vld [vmem:[%s1 + $0x18] sm:$0xff]
  %v223 = vld [vmem:[%s12] sm:$0x3]
  %v224 = vmul.f32 %v219, %v219
  %v225 = vmul.f32 %v220, %v220
  %v226 = vmul.f32 %v221, %v221
  %v227 = vmul.f32 %v222, %v222
  %228 = vmatprep.subr.mxu0 %v63
  %229 = vmatpush1.msra.mxu0 %v62
  %230 = vmatprep.subr.mxu0 %v65
  %231 = vmatpush1.msra.mxu0 %v64
  %232 = vmatprep.subr.mxu0 %v67
  %233 = vmatpush1.msra.mxu0 %v66
  %234 = vmatprep.subr.mxu0 %v69
  %235 = vmatpush1.msra.mxu0 %v68
  %236 = vmatprep.subr.mxu0 %v71
  %237 = vmatpush1.msra.mxu0 %v70
  %238 = vmatprep.subr.mxu0 %v73
  %239 = vmatpush1.msra.mxu0 %v72
  %240 = vmatprep.subr.mxu0 %v75
  %241 = vmatpush1.msra.mxu0 %v74
  %242 = vmatprep.subr.mxu0 %v77
  %243 = vmatpush1.msra.mxu0 %v76
  %244 = vmatprep.subr.mxu0 %v79
  %245 = vmatpush1.msra.mxu0 %v78
  %246 = vmatprep.subr.mxu0 %v81
  %247 = vmatpush1.msra.mxu0 %v80
  %248 = vmatprep.subr.mxu0 %v83
  %249 = vmatpush1.msra.mxu0 %v82
  %250 = vmatprep.subr.mxu0 %v85
  %251 = vmatpush1.msra.mxu0 %v84
  %252 = vmatprep.subr.mxu0 %v87
  %253 = vmatpush1.msra.mxu0 %v86
  %254 = vmatprep.subr.mxu0 %v89
  %255 = vmatpush1.msra.mxu0 %v88
  %256 = vmatprep.subr.mxu0 %v91
  %257 = vmatpush1.msra.mxu0 %v90
  %258 = vmatprep.subr.mxu0 %v93
  %259 = vmatpush1.msra.mxu0 %v92
  %260 = vmatprep.subr.mxu0 %v95
  %261 = vmatpush1.msra.mxu0 %v94
  %262 = vmatprep.subr.mxu0 %v97
  %263 = vmatpush1.msra.mxu0 %v96
  %264 = vmatprep.subr.mxu0 %v99
  %265 = vmatpush1.msra.mxu0 %v98
  %266 = vmatprep.subr.mxu0 %v101
  %267 = vmatpush1.msra.mxu0 %v100
  %268 = vmatprep.subr.mxu0 %v103
  %269 = vmatpush1.msra.mxu0 %v102
  %270 = vmatprep.subr.mxu0 %v105
  %271 = vmatpush1.msra.mxu0 %v104
  %272 = vmatprep.subr.mxu0 %v107
  %273 = vmatpush1.msra.mxu0 %v106
  %274 = vmatprep.subr.mxu0 %v109
  %275 = vmatpush1.msra.mxu0 %v108
  %276 = vmatprep.subr.mxu0 %v111
  %277 = vmatpush1.msra.mxu0 %v110
  %278 = vmatprep.subr.mxu0 %v113
  %279 = vmatpush1.msra.mxu0 %v112
  %280 = vmatprep.subr.mxu0 %v115
  %281 = vmatpush1.msra.mxu0 %v114
  %282 = vmatprep.subr.mxu0 %v117
  %283 = vmatpush1.msra.mxu0 %v116
  %284 = vmatprep.subr.mxu0 %v119
  %285 = vmatpush1.msra.mxu0 %v118
  %286 = vmatprep.subr.mxu0 %v121
  %287 = vmatpush1.msra.mxu0 %v120
  %288 = vmatprep.subr.mxu0 %v123
  %289 = vmatpush1.msra.mxu0 %v122
  %290 = vmatprep.subr.mxu0 %v125
  %291 = vmatpush1.msra.mxu0 %v124
  %292 = vmatprep.mubr.f32.mxu0 %v225
  %293 = vmatmul.mubr.f32.gmra.mrb[0].mxu0 %v224
  %v294 = vpop.f32.mrb[0].mxu0
  %v295 = vadd.f32 1e-06, %v294
  %v296 = vpop.f32.mrb[0].mxu0
  %v297 = vadd.f32 1e-06, %v296
  %298 = vmatprep.mubr.f32.mxu0 %v227
  %299 = vmatmul.mubr.f32.gmra.mrb[0].mxu0 %v226
  %v300 = vpop.f32.mrb[0].mxu0
  %v301 = vadd.f32 1e-06, %v300
  %v302 = vpop.f32.mrb[0].mxu0
  %v303 = vadd.f32 1e-06, %v302
  %304 = vdwg.mxu0
  %v305 = vrsqrt.pop %v295
  %v306 = vrsqrt.pop %v297
  %v307 = vrsqrt.pop %v301
  %v308 = vrsqrt.pop %v303
  %v309 = vmul.f32 %v219, %v305
  %v310 = vmul.f32 %v220, %v306
  %v311 = vmul.f32 %v221, %v307
  %v312 = vmul.f32 %v222, %v308
  %v314 = vlaneseq
  %v315 = vshrl.u32 %v314, 7
  %v316 = vsub.s32 0, %v315
  %v317 = vrot.slane %v223, %v316
  %v318 = vlaneseq
  %v319 = vshrl.u32 %v318, 7
  %v320 = vsub.s32 1, %v319
  %v321 = vrot.slane %v223, %v320
  %v324 = vmul.f32 %v309, %v317
  %v325 = vmul.f32 %v310, %v321
  %v326 = vmul.f32 %v311, %v317
  %v327 = vmul.f32 %v312, %v321
  %v328 = vld [vmem:[%s14] sm:$0xff]
  %v329 = vld [vmem:[%s14 + $0x8] sm:$0xff]
  %v330 = vld [vmem:[%s14 + $0x10] sm:$0xff]
  %v331 = vld [vmem:[%s14 + $0x18] sm:$0xff]
  %v332 = vld [vmem:[%s14 + $0x20] sm:$0xff]
  %v333 = vld [vmem:[%s14 + $0x28] sm:$0xff]
  %v334 = vld [vmem:[%s14 + $0x30] sm:$0xff]
  %v335 = vld [vmem:[%s14 + $0x38] sm:$0xff]
  %v336 = vld [vmem:[%s14 + $0x40] sm:$0xff]
  %v337 = vld [vmem:[%s14 + $0x48] sm:$0xff]
  %v338 = vld [vmem:[%s14 + $0x50] sm:$0xff]
  %v339 = vld [vmem:[%s14 + $0x58] sm:$0xff]
  %v340 = vld [vmem:[%s14 + $0x60] sm:$0xff]
  %v341 = vld [vmem:[%s14 + $0x68] sm:$0xff]
  %v342 = vld [vmem:[%s14 + $0x70] sm:$0xff]
  %v343 = vld [vmem:[%s14 + $0x78] sm:$0xff]
  %v344 = vld [vmem:[%s14 + $0x80] sm:$0xff]
  %v345 = vld [vmem:[%s14 + $0x88] sm:$0xff]
  %v346 = vld [vmem:[%s14 + $0x90] sm:$0xff]
  %v347 = vld [vmem:[%s14 + $0x98] sm:$0xff]
  %v348 = vld [vmem:[%s14 + $0xa0] sm:$0xff]
  %v349 = vld [vmem:[%s14 + $0xa8] sm:$0xff]
  %v350 = vld [vmem:[%s14 + $0xb0] sm:$0xff]
  %v351 = vld [vmem:[%s14 + $0xb8] sm:$0xff]
  %v352 = vld [vmem:[%s14 + $0xc0] sm:$0xff]
  %v353 = vld [vmem:[%s14 + $0xc8] sm:$0xff]
  %v354 = vld [vmem:[%s14 + $0xd0] sm:$0xff]
  %v355 = vld [vmem:[%s14 + $0xd8] sm:$0xff]
  %v356 = vld [vmem:[%s14 + $0xe0] sm:$0xff]
  %v357 = vld [vmem:[%s14 + $0xe8] sm:$0xff]
  %v358 = vld [vmem:[%s14 + $0xf0] sm:$0xff]
  %v359 = vld [vmem:[%s14 + $0xf8] sm:$0xff]
  %v360 = vld [vmem:[%s14 + $0x100] sm:$0xff]
  %v361 = vld [vmem:[%s14 + $0x108] sm:$0xff]
  %v362 = vld [vmem:[%s14 + $0x110] sm:$0xff]
  %v363 = vld [vmem:[%s14 + $0x118] sm:$0xff]
  %v364 = vld [vmem:[%s14 + $0x120] sm:$0xff]
  %v365 = vld [vmem:[%s14 + $0x128] sm:$0xff]
  %v366 = vld [vmem:[%s14 + $0x130] sm:$0xff]
  %v367 = vld [vmem:[%s14 + $0x138] sm:$0xff]
  %v368 = vld [vmem:[%s14 + $0x140] sm:$0xff]
  %v369 = vld [vmem:[%s14 + $0x148] sm:$0xff]
  %v370 = vld [vmem:[%s14 + $0x150] sm:$0xff]
  %v371 = vld [vmem:[%s14 + $0x158] sm:$0xff]
  %v372 = vld [vmem:[%s14 + $0x160] sm:$0xff]
  %v373 = vld [vmem:[%s14 + $0x168] sm:$0xff]
  %v374 = vld [vmem:[%s14 + $0x170] sm:$0xff]
  %v375 = vld [vmem:[%s14 + $0x178] sm:$0xff]
  %v376 = vld [vmem:[%s14 + $0x180] sm:$0xff]
  %v377 = vld [vmem:[%s14 + $0x188] sm:$0xff]
  %v378 = vld [vmem:[%s14 + $0x190] sm:$0xff]
  %v379 = vld [vmem:[%s14 + $0x198] sm:$0xff]
  %v380 = vld [vmem:[%s14 + $0x1a0] sm:$0xff]
  %v381 = vld [vmem:[%s14 + $0x1a8] sm:$0xff]
  %v382 = vld [vmem:[%s14 + $0x1b0] sm:$0xff]
  %v383 = vld [vmem:[%s14 + $0x1b8] sm:$0xff]
  %v384 = vld [vmem:[%s14 + $0x1c0] sm:$0xff]
  %v385 = vld [vmem:[%s14 + $0x1c8] sm:$0xff]
  %v386 = vld [vmem:[%s14 + $0x1d0] sm:$0xff]
  %v387 = vld [vmem:[%s14 + $0x1d8] sm:$0xff]
  %v388 = vld [vmem:[%s14 + $0x1e0] sm:$0xff]
  %v389 = vld [vmem:[%s14 + $0x1e8] sm:$0xff]
  %v390 = vld [vmem:[%s14 + $0x1f0] sm:$0xff]
  %v391 = vld [vmem:[%s14 + $0x1f8] sm:$0xff]
  %v392 = vld [vmem:[%s14 + $0x200] sm:$0xff]
  %v393 = vld [vmem:[%s14 + $0x208] sm:$0xff]
  %v394 = vld [vmem:[%s14 + $0x210] sm:$0xff]
  %v395 = vld [vmem:[%s14 + $0x218] sm:$0xff]
  %v396 = vld [vmem:[%s14 + $0x220] sm:$0xff]
  %v397 = vld [vmem:[%s14 + $0x228] sm:$0xff]
  %v398 = vld [vmem:[%s14 + $0x230] sm:$0xff]
  %v399 = vld [vmem:[%s14 + $0x238] sm:$0xff]
  %v400 = vld [vmem:[%s14 + $0x240] sm:$0xff]
  %v401 = vld [vmem:[%s14 + $0x248] sm:$0xff]
  %v402 = vld [vmem:[%s14 + $0x250] sm:$0xff]
  %v403 = vld [vmem:[%s14 + $0x258] sm:$0xff]
  %v404 = vld [vmem:[%s14 + $0x260] sm:$0xff]
  %v405 = vld [vmem:[%s14 + $0x268] sm:$0xff]
  %v406 = vld [vmem:[%s14 + $0x270] sm:$0xff]
  %v407 = vld [vmem:[%s14 + $0x278] sm:$0xff]
  %v408 = vld [vmem:[%s14 + $0x280] sm:$0xff]
  %v409 = vld [vmem:[%s14 + $0x288] sm:$0xff]
  %v410 = vld [vmem:[%s14 + $0x290] sm:$0xff]
  %v411 = vld [vmem:[%s14 + $0x298] sm:$0xff]
  %v412 = vld [vmem:[%s14 + $0x2a0] sm:$0xff]
  %v413 = vld [vmem:[%s14 + $0x2a8] sm:$0xff]
  %v414 = vld [vmem:[%s14 + $0x2b0] sm:$0xff]
  %v415 = vld [vmem:[%s14 + $0x2b8] sm:$0xff]
  %v416 = vld [vmem:[%s14 + $0x2c0] sm:$0xff]
  %v417 = vld [vmem:[%s14 + $0x2c8] sm:$0xff]
  %v418 = vld [vmem:[%s14 + $0x2d0] sm:$0xff]
  %v419 = vld [vmem:[%s14 + $0x2d8] sm:$0xff]
  %v420 = vld [vmem:[%s14 + $0x2e0] sm:$0xff]
  %v421 = vld [vmem:[%s14 + $0x2e8] sm:$0xff]
  %v422 = vld [vmem:[%s14 + $0x2f0] sm:$0xff]
  %v423 = vld [vmem:[%s14 + $0x2f8] sm:$0xff]
  %v424 = vld [vmem:[%s14 + $0x300] sm:$0xff]
  %v425 = vld [vmem:[%s14 + $0x308] sm:$0xff]
  %v426 = vld [vmem:[%s14 + $0x310] sm:$0xff]
  %v427 = vld [vmem:[%s14 + $0x318] sm:$0xff]
  %v428 = vld [vmem:[%s14 + $0x320] sm:$0xff]
  %v429 = vld [vmem:[%s14 + $0x328] sm:$0xff]
  %v430 = vld [vmem:[%s14 + $0x330] sm:$0xff]
  %v431 = vld [vmem:[%s14 + $0x338] sm:$0xff]
  %v432 = vld [vmem:[%s14 + $0x340] sm:$0xff]
  %v433 = vld [vmem:[%s14 + $0x348] sm:$0xff]
  %v434 = vld [vmem:[%s14 + $0x350] sm:$0xff]
  %v435 = vld [vmem:[%s14 + $0x358] sm:$0xff]
  %v436 = vld [vmem:[%s14 + $0x360] sm:$0xff]
  %v437 = vld [vmem:[%s14 + $0x368] sm:$0xff]
  %v438 = vld [vmem:[%s14 + $0x370] sm:$0xff]
  %v439 = vld [vmem:[%s14 + $0x378] sm:$0xff]
  %v440 = vld [vmem:[%s14 + $0x380] sm:$0xff]
  %v441 = vld [vmem:[%s14 + $0x388] sm:$0xff]
  %v442 = vld [vmem:[%s14 + $0x390] sm:$0xff]
  %v443 = vld [vmem:[%s14 + $0x398] sm:$0xff]
  %v444 = vld [vmem:[%s14 + $0x3a0] sm:$0xff]
  %v445 = vld [vmem:[%s14 + $0x3a8] sm:$0xff]
  %v446 = vld [vmem:[%s14 + $0x3b0] sm:$0xff]
  %v447 = vld [vmem:[%s14 + $0x3b8] sm:$0xff]
  %v448 = vld [vmem:[%s14 + $0x3c0] sm:$0xff]
  %v449 = vld [vmem:[%s14 + $0x3c8] sm:$0xff]
  %v450 = vld [vmem:[%s14 + $0x3d0] sm:$0xff]
  %v451 = vld [vmem:[%s14 + $0x3d8] sm:$0xff]
  %v452 = vld [vmem:[%s14 + $0x3e0] sm:$0xff]
  %v453 = vld [vmem:[%s14 + $0x3e8] sm:$0xff]
  %v454 = vld [vmem:[%s14 + $0x3f0] sm:$0xff]
  %v455 = vld [vmem:[%s14 + $0x3f8] sm:$0xff]
  %v456 = vld [vmem:[%s14 + $0x400] sm:$0xff]
  %v457 = vld [vmem:[%s14 + $0x408] sm:$0xff]
  %v458 = vld [vmem:[%s14 + $0x410] sm:$0xff]
  %v459 = vld [vmem:[%s14 + $0x418] sm:$0xff]
  %v460 = vld [vmem:[%s14 + $0x420] sm:$0xff]
  %v461 = vld [vmem:[%s14 + $0x428] sm:$0xff]
  %v462 = vld [vmem:[%s14 + $0x430] sm:$0xff]
  %v463 = vld [vmem:[%s14 + $0x438] sm:$0xff]
  %v464 = vld [vmem:[%s14 + $0x440] sm:$0xff]
  %v465 = vld [vmem:[%s14 + $0x448] sm:$0xff]
  %v466 = vld [vmem:[%s14 + $0x450] sm:$0xff]
  %v467 = vld [vmem:[%s14 + $0x458] sm:$0xff]
  %v468 = vld [vmem:[%s14 + $0x460] sm:$0xff]
  %v469 = vld [vmem:[%s14 + $0x468] sm:$0xff]
  %v470 = vld [vmem:[%s14 + $0x470] sm:$0xff]
  %v471 = vld [vmem:[%s14 + $0x478] sm:$0xff]
  %v472 = vld [vmem:[%s14 + $0x480] sm:$0xff]
  %v473 = vld [vmem:[%s14 + $0x488] sm:$0xff]
  %v474 = vld [vmem:[%s14 + $0x490] sm:$0xff]
  %v475 = vld [vmem:[%s14 + $0x498] sm:$0xff]
  %v476 = vld [vmem:[%s14 + $0x4a0] sm:$0xff]
  %v477 = vld [vmem:[%s14 + $0x4a8] sm:$0xff]
  %v478 = vld [vmem:[%s14 + $0x4b0] sm:$0xff]
  %v479 = vld [vmem:[%s14 + $0x4b8] sm:$0xff]
  %v480 = vld [vmem:[%s14 + $0x4c0] sm:$0xff]
  %v481 = vld [vmem:[%s14 + $0x4c8] sm:$0xff]
  %v482 = vld [vmem:[%s14 + $0x4d0] sm:$0xff]
  %v483 = vld [vmem:[%s14 + $0x4d8] sm:$0xff]
  %v484 = vld [vmem:[%s14 + $0x4e0] sm:$0xff]
  %v485 = vld [vmem:[%s14 + $0x4e8] sm:$0xff]
  %v486 = vld [vmem:[%s14 + $0x4f0] sm:$0xff]
  %v487 = vld [vmem:[%s14 + $0x4f8] sm:$0xff]
  %v488 = vld [vmem:[%s14 + $0x500] sm:$0xff]
  %v489 = vld [vmem:[%s14 + $0x508] sm:$0xff]
  %v490 = vld [vmem:[%s14 + $0x510] sm:$0xff]
  %v491 = vld [vmem:[%s14 + $0x518] sm:$0xff]
  %v492 = vld [vmem:[%s14 + $0x520] sm:$0xff]
  %v493 = vld [vmem:[%s14 + $0x528] sm:$0xff]
  %v494 = vld [vmem:[%s14 + $0x530] sm:$0xff]
  %v495 = vld [vmem:[%s14 + $0x538] sm:$0xff]
  %v496 = vld [vmem:[%s14 + $0x540] sm:$0xff]
  %v497 = vld [vmem:[%s14 + $0x548] sm:$0xff]
  %v498 = vld [vmem:[%s14 + $0x550] sm:$0xff]
  %v499 = vld [vmem:[%s14 + $0x558] sm:$0xff]
  %v500 = vld [vmem:[%s14 + $0x560] sm:$0xff]
  %v501 = vld [vmem:[%s14 + $0x568] sm:$0xff]
  %v502 = vld [vmem:[%s14 + $0x570] sm:$0xff]
  %v503 = vld [vmem:[%s14 + $0x578] sm:$0xff]
  %v504 = vld [vmem:[%s14 + $0x580] sm:$0xff]
  %v505 = vld [vmem:[%s14 + $0x588] sm:$0xff]
  %v506 = vld [vmem:[%s14 + $0x590] sm:$0xff]
  %v507 = vld [vmem:[%s14 + $0x598] sm:$0xff]
  %v508 = vld [vmem:[%s14 + $0x5a0] sm:$0xff]
  %v509 = vld [vmem:[%s14 + $0x5a8] sm:$0xff]
  %v510 = vld [vmem:[%s14 + $0x5b0] sm:$0xff]
  %v511 = vld [vmem:[%s14 + $0x5b8] sm:$0xff]
  %v512 = vld [vmem:[%s14 + $0x5c0] sm:$0xff]
  %v513 = vld [vmem:[%s14 + $0x5c8] sm:$0xff]
  %v514 = vld [vmem:[%s14 + $0x5d0] sm:$0xff]
  %v515 = vld [vmem:[%s14 + $0x5d8] sm:$0xff]
  %v516 = vld [vmem:[%s14 + $0x5e0] sm:$0xff]
  %v517 = vld [vmem:[%s14 + $0x5e8] sm:$0xff]
  %v518 = vld [vmem:[%s14 + $0x5f0] sm:$0xff]
  %v519 = vld [vmem:[%s14 + $0x5f8] sm:$0xff]
  %520 = vmatprep.subr.mxu0 %v329
  %521 = vmatpush1.msra.mxu0 %v328
  %522 = vmatprep.subr.mxu0 %v335
  %523 = vmatpush1.msra.mxu0 %v334
  %524 = vmatprep.subr.mxu0 %v341
  %525 = vmatpush1.msra.mxu0 %v340
  %526 = vmatprep.subr.mxu0 %v347
  %527 = vmatpush1.msra.mxu0 %v346
  %528 = vmatprep.subr.mxu0 %v353
  %529 = vmatpush1.msra.mxu0 %v352
  %530 = vmatprep.subr.mxu0 %v359
  %531 = vmatpush1.msra.mxu0 %v358
  %532 = vmatprep.subr.mxu0 %v365
  %533 = vmatpush1.msra.mxu0 %v364
  %534 = vmatprep.subr.mxu0 %v371
  %535 = vmatpush1.msra.mxu0 %v370
  %536 = vmatprep.subr.mxu0 %v377
  %537 = vmatpush1.msra.mxu0 %v376
  %538 = vmatprep.subr.mxu0 %v383
  %539 = vmatpush1.msra.mxu0 %v382
  %540 = vmatprep.subr.mxu0 %v389
  %541 = vmatpush1.msra.mxu0 %v388
  %542 = vmatprep.subr.mxu0 %v395
  %543 = vmatpush1.msra.mxu0 %v394
  %544 = vmatprep.subr.mxu0 %v401
  %545 = vmatpush1.msra.mxu0 %v400
  %546 = vmatprep.subr.mxu0 %v407
  %547 = vmatpush1.msra.mxu0 %v406
  %548 = vmatprep.subr.mxu0 %v413
  %549 = vmatpush1.msra.mxu0 %v412
  %550 = vmatprep.subr.mxu0 %v419
  %551 = vmatpush1.msra.mxu0 %v418
  %552 = vmatprep.subr.mxu0 %v425
  %553 = vmatpush1.msra.mxu0 %v424
  %554 = vmatprep.subr.mxu0 %v431
  %555 = vmatpush1.msra.mxu0 %v430
  %556 = vmatprep.subr.mxu0 %v437
  %557 = vmatpush1.msra.mxu0 %v436
  %558 = vmatprep.subr.mxu0 %v443
  %559 = vmatpush1.msra.mxu0 %v442
  %560 = vmatprep.subr.mxu0 %v449
  %561 = vmatpush1.msra.mxu0 %v448
  %562 = vmatprep.subr.mxu0 %v455
  %563 = vmatpush1.msra.mxu0 %v454
  %564 = vmatprep.subr.mxu0 %v461
  %565 = vmatpush1.msra.mxu0 %v460
  %566 = vmatprep.subr.mxu0 %v467
  %567 = vmatpush1.msra.mxu0 %v466
  %568 = vmatprep.subr.mxu0 %v473
  %569 = vmatpush1.msra.mxu0 %v472
  %570 = vmatprep.subr.mxu0 %v479
  %571 = vmatpush1.msra.mxu0 %v478
  %572 = vmatprep.subr.mxu0 %v485
  %573 = vmatpush1.msra.mxu0 %v484
  %574 = vmatprep.subr.mxu0 %v491
  %575 = vmatpush1.msra.mxu0 %v490
  %576 = vmatprep.subr.mxu0 %v497
  %577 = vmatpush1.msra.mxu0 %v496
  %578 = vmatprep.subr.mxu0 %v503
  %579 = vmatpush1.msra.mxu0 %v502
  %580 = vmatprep.subr.mxu0 %v509
  %581 = vmatpush1.msra.mxu0 %v508
  %582 = vmatprep.subr.mxu0 %v515
  %583 = vmatpush1.msra.mxu0 %v514
  %584 = vmatprep.mubr.f32.mxu0 %v218
  %585 = vmatmul.mubr.f32.gmra.mrb[0].mxu0 %v217
  %v586 = vpop.f32.mrb[0].mxu0
  %v587 = vadd.f32 0.0, %v586
  %v588 = vpop.f32.mrb[0].mxu0
  %v589 = vadd.f32 0.0, %v588
  %590 = vdwg.mxu0
  %591 = vmatprep.subr.mxu0 %v331
  %592 = vmatpush1.msra.mxu0 %v330
  %593 = vmatprep.subr.mxu0 %v337
  %594 = vmatpush1.msra.mxu0 %v336
  %595 = vmatprep.subr.mxu0 %v343
  %596 = vmatpush1.msra.mxu0 %v342
  %597 = vmatprep.subr.mxu0 %v349
  %598 = vmatpush1.msra.mxu0 %v348
  %599 = vmatprep.subr.mxu0 %v355
  %600 = vmatpush1.msra.mxu0 %v354
  %601 = vmatprep.subr.mxu0 %v361
  %602 = vmatpush1.msra.mxu0 %v360
  %603 = vmatprep.subr.mxu0 %v367
  %604 = vmatpush1.msra.mxu0 %v366
  %605 = vmatprep.subr.mxu0 %v373
  %606 = vmatpush1.msra.mxu0 %v372
  %607 = vmatprep.subr.mxu0 %v379
  %608 = vmatpush1.msra.mxu0 %v378
  %609 = vmatprep.subr.mxu0 %v385
  %610 = vmatpush1.msra.mxu0 %v384
  %611 = vmatprep.subr.mxu0 %v391
  %612 = vmatpush1.msra.mxu0 %v390
  %613 = vmatprep.subr.mxu0 %v397
  %614 = vmatpush1.msra.mxu0 %v396
  %615 = vmatprep.subr.mxu0 %v403
  %616 = vmatpush1.msra.mxu0 %v402
  %617 = vmatprep.subr.mxu0 %v409
  %618 = vmatpush1.msra.mxu0 %v408
  %619 = vmatprep.subr.mxu0 %v415
  %620 = vmatpush1.msra.mxu0 %v414
  %621 = vmatprep.subr.mxu0 %v421
  %622 = vmatpush1.msra.mxu0 %v420
  %623 = vmatprep.subr.mxu0 %v427
  %624 = vmatpush1.msra.mxu0 %v426
  %625 = vmatprep.subr.mxu0 %v433
  %626 = vmatpush1.msra.mxu0 %v432
  %627 = vmatprep.subr.mxu0 %v439
  %628 = vmatpush1.msra.mxu0 %v438
  %629 = vmatprep.subr.mxu0 %v445
  %630 = vmatpush1.msra.mxu0 %v444
  %631 = vmatprep.subr.mxu0 %v451
  %632 = vmatpush1.msra.mxu0 %v450
  %633 = vmatprep.subr.mxu0 %v457
  %634 = vmatpush1.msra.mxu0 %v456
  %635 = vmatprep.subr.mxu0 %v463
  %636 = vmatpush1.msra.mxu0 %v462
  %637 = vmatprep.subr.mxu0 %v469
  %638 = vmatpush1.msra.mxu0 %v468
  %639 = vmatprep.subr.mxu0 %v475
  %640 = vmatpush1.msra.mxu0 %v474
  %641 = vmatprep.subr.mxu0 %v481
  %642 = vmatpush1.msra.mxu0 %v480
  %643 = vmatprep.subr.mxu0 %v487
  %644 = vmatpush1.msra.mxu0 %v486
  %645 = vmatprep.subr.mxu0 %v493
  %646 = vmatpush1.msra.mxu0 %v492
  %647 = vmatprep.subr.mxu0 %v499
  %648 = vmatpush1.msra.mxu0 %v498
  %649 = vmatprep.subr.mxu0 %v505
  %650 = vmatpush1.msra.mxu0 %v504
  %651 = vmatprep.subr.mxu0 %v511
  %652 = vmatpush1.msra.mxu0 %v510
  %653 = vmatprep.subr.mxu0 %v517
  %654 = vmatpush1.msra.mxu0 %v516
  %655 = vmatprep.mubr.f32.mxu0 %v218
  %656 = vmatmul.mubr.f32.gmra.mrb[0].mxu0 %v217
  %v657 = vpop.f32.mrb[0].mxu0
  %v658 = vadd.f32 0.0, %v657
  %v659 = vpop.f32.mrb[0].mxu0
  %v660 = vadd.f32 0.0, %v659
  %661 = vdwg.mxu0
  %662 = vmatprep.subr.mxu0 %v333
  %663 = vmatpush1.msra.mxu0 %v332
  %664 = vmatprep.subr.mxu0 %v339
  %665 = vmatpush1.msra.mxu0 %v338
  %666 = vmatprep.subr.mxu0 %v345
  %667 = vmatpush1.msra.mxu0 %v344
  %668 = vmatprep.subr.mxu0 %v351
  %669 = vmatpush1.msra.mxu0 %v350
  %670 = vmatprep.subr.mxu0 %v357
  %671 = vmatpush1.msra.mxu0 %v356
  %672 = vmatprep.subr.mxu0 %v363
  %673 = vmatpush1.msra.mxu0 %v362
  %674 = vmatprep.subr.mxu0 %v369
  %675 = vmatpush1.msra.mxu0 %v368
  %676 = vmatprep.subr.mxu0 %v375
  %677 = vmatpush1.msra.mxu0 %v374
  %678 = vmatprep.subr.mxu0 %v381
  %679 = vmatpush1.msra.mxu0 %v380
  %680 = vmatprep.subr.mxu0 %v387
  %681 = vmatpush1.msra.mxu0 %v386
  %682 = vmatprep.subr.mxu0 %v393
  %683 = vmatpush1.msra.mxu0 %v392
  %684 = vmatprep.subr.mxu0 %v399
  %685 = vmatpush1.msra.mxu0 %v398
  %686 = vmatprep.subr.mxu0 %v405
  %687 = vmatpush1.msra.mxu0 %v404
  %688 = vmatprep.subr.mxu0 %v411
  %689 = vmatpush1.msra.mxu0 %v410
  %690 = vmatprep.subr.mxu0 %v417
  %691 = vmatpush1.msra.mxu0 %v416
  %692 = vmatprep.subr.mxu0 %v423
  %693 = vmatpush1.msra.mxu0 %v422
  %694 = vmatprep.subr.mxu0 %v429
  %695 = vmatpush1.msra.mxu0 %v428
  %696 = vmatprep.subr.mxu0 %v435
  %697 = vmatpush1.msra.mxu0 %v434
  %698 = vmatprep.subr.mxu0 %v441
  %699 = vmatpush1.msra.mxu0 %v440
  %700 = vmatprep.subr.mxu0 %v447
  %701 = vmatpush1.msra.mxu0 %v446
  %702 = vmatprep.subr.mxu0 %v453
  %703 = vmatpush1.msra.mxu0 %v452
  %704 = vmatprep.subr.mxu0 %v459
  %705 = vmatpush1.msra.mxu0 %v458
  %706 = vmatprep.subr.mxu0 %v465
  %707 = vmatpush1.msra.mxu0 %v464
  %708 = vmatprep.subr.mxu0 %v471
  %709 = vmatpush1.msra.mxu0 %v470
  %710 = vmatprep.subr.mxu0 %v477
  %711 = vmatpush1.msra.mxu0 %v476
  %712 = vmatprep.subr.mxu0 %v483
  %713 = vmatpush1.msra.mxu0 %v482
  %714 = vmatprep.subr.mxu0 %v489
  %715 = vmatpush1.msra.mxu0 %v488
  %716 = vmatprep.subr.mxu0 %v495
  %717 = vmatpush1.msra.mxu0 %v494
  %718 = vmatprep.subr.mxu0 %v501
  %719 = vmatpush1.msra.mxu0 %v500
  %720 = vmatprep.subr.mxu0 %v507
  %721 = vmatpush1.msra.mxu0 %v506
  %722 = vmatprep.subr.mxu0 %v513
  %723 = vmatpush1.msra.mxu0 %v512
  %724 = vmatprep.subr.mxu0 %v519
  %725 = vmatpush1.msra.mxu0 %v518
  %726 = vmatprep.mubr.f32.mxu0 %v218
  %727 = vmatmul.mubr.f32.gmra.mrb[0].mxu0 %v217
  %v728 = vpop.f32.mrb[0].mxu0
  %v729 = vadd.f32 0.0, %v728
  %v730 = vpop.f32.mrb[0].mxu0
  %v731 = vadd.f32 0.0, %v730
  %732 = vdwg.mxu0
  %v733 = vld [vmem:[%s15] sm:$0xff]
  %v734 = vld [vmem:[%s15 + $0x8] sm:$0xff]
  %v735 = vld [vmem:[%s15 + $0x10] sm:$0xff]
  %v736 = vld [vmem:[%s15 + $0x18] sm:$0xff]
  %v737 = vld [vmem:[%s15 + $0x20] sm:$0xff]
  %v738 = vld [vmem:[%s15 + $0x28] sm:$0xff]
  %v739 = vld [vmem:[%s15 + $0x30] sm:$0xff]
  %v740 = vld [vmem:[%s15 + $0x38] sm:$0xff]
  %v741 = vld [vmem:[%s15 + $0x40] sm:$0xff]
  %v742 = vld [vmem:[%s15 + $0x48] sm:$0xff]
  %v743 = vld [vmem:[%s15 + $0x50] sm:$0xff]
  %v744 = vld [vmem:[%s15 + $0x58] sm:$0xff]
  %v745 = vld [vmem:[%s15 + $0x60] sm:$0xff]
  %v746 = vld [vmem:[%s15 + $0x68] sm:$0xff]
  %v747 = vld [vmem:[%s15 + $0x70] sm:$0xff]
  %v748 = vld [vmem:[%s15 + $0x78] sm:$0xff]
  %v749 = vld [vmem:[%s15 + $0x80] sm:$0xff]
  %v750 = vld [vmem:[%s15 + $0x88] sm:$0xff]
  %v751 = vld [vmem:[%s15 + $0x90] sm:$0xff]
  %v752 = vld [vmem:[%s15 + $0x98] sm:$0xff]
  %v753 = vld [vmem:[%s15 + $0xa0] sm:$0xff]
  %v754 = vld [vmem:[%s15 + $0xa8] sm:$0xff]
  %v755 = vld [vmem:[%s15 + $0xb0] sm:$0xff]
  %v756 = vld [vmem:[%s15 + $0xb8] sm:$0xff]
  %v757 = vld [vmem:[%s15 + $0xc0] sm:$0xff]
  %v758 = vld [vmem:[%s15 + $0xc8] sm:$0xff]
  %v759 = vld [vmem:[%s15 + $0xd0] sm:$0xff]
  %v760 = vld [vmem:[%s15 + $0xd8] sm:$0xff]
  %v761 = vld [vmem:[%s15 + $0xe0] sm:$0xff]
  %v762 = vld [vmem:[%s15 + $0xe8] sm:$0xff]
  %v763 = vld [vmem:[%s15 + $0xf0] sm:$0xff]
  %v764 = vld [vmem:[%s15 + $0xf8] sm:$0xff]
  %v765 = vld [vmem:[%s15 + $0x100] sm:$0xff]
  %v766 = vld [vmem:[%s15 + $0x108] sm:$0xff]
  %v767 = vld [vmem:[%s15 + $0x110] sm:$0xff]
  %v768 = vld [vmem:[%s15 + $0x118] sm:$0xff]
  %v769 = vld [vmem:[%s15 + $0x120] sm:$0xff]
  %v770 = vld [vmem:[%s15 + $0x128] sm:$0xff]
  %v771 = vld [vmem:[%s15 + $0x130] sm:$0xff]
  %v772 = vld [vmem:[%s15 + $0x138] sm:$0xff]
  %v773 = vld [vmem:[%s15 + $0x140] sm:$0xff]
  %v774 = vld [vmem:[%s15 + $0x148] sm:$0xff]
  %v775 = vld [vmem:[%s15 + $0x150] sm:$0xff]
  %v776 = vld [vmem:[%s15 + $0x158] sm:$0xff]
  %v777 = vld [vmem:[%s15 + $0x160] sm:$0xff]
  %v778 = vld [vmem:[%s15 + $0x168] sm:$0xff]
  %v779 = vld [vmem:[%s15 + $0x170] sm:$0xff]
  %v780 = vld [vmem:[%s15 + $0x178] sm:$0xff]
  %v781 = vld [vmem:[%s15 + $0x180] sm:$0xff]
  %v782 = vld [vmem:[%s15 + $0x188] sm:$0xff]
  %v783 = vld [vmem:[%s15 + $0x190] sm:$0xff]
  %v784 = vld [vmem:[%s15 + $0x198] sm:$0xff]
  %v785 = vld [vmem:[%s15 + $0x1a0] sm:$0xff]
  %v786 = vld [vmem:[%s15 + $0x1a8] sm:$0xff]
  %v787 = vld [vmem:[%s15 + $0x1b0] sm:$0xff]
  %v788 = vld [vmem:[%s15 + $0x1b8] sm:$0xff]
  %v789 = vld [vmem:[%s15 + $0x1c0] sm:$0xff]
  %v790 = vld [vmem:[%s15 + $0x1c8] sm:$0xff]
  %v791 = vld [vmem:[%s15 + $0x1d0] sm:$0xff]
  %v792 = vld [vmem:[%s15 + $0x1d8] sm:$0xff]
  %v793 = vld [vmem:[%s15 + $0x1e0] sm:$0xff]
  %v794 = vld [vmem:[%s15 + $0x1e8] sm:$0xff]
  %v795 = vld [vmem:[%s15 + $0x1f0] sm:$0xff]
  %v796 = vld [vmem:[%s15 + $0x1f8] sm:$0xff]
  %v797 = vld [vmem:[%s15 + $0x200] sm:$0xff]
  %v798 = vld [vmem:[%s15 + $0x208] sm:$0xff]
  %v799 = vld [vmem:[%s15 + $0x210] sm:$0xff]
  %v800 = vld [vmem:[%s15 + $0x218] sm:$0xff]
  %v801 = vld [vmem:[%s15 + $0x220] sm:$0xff]
  %v802 = vld [vmem:[%s15 + $0x228] sm:$0xff]
  %v803 = vld [vmem:[%s15 + $0x230] sm:$0xff]
  %v804 = vld [vmem:[%s15 + $0x238] sm:$0xff]
  %v805 = vld [vmem:[%s15 + $0x240] sm:$0xff]
  %v806 = vld [vmem:[%s15 + $0x248] sm:$0xff]
  %v807 = vld [vmem:[%s15 + $0x250] sm:$0xff]
  %v808 = vld [vmem:[%s15 + $0x258] sm:$0xff]
  %v809 = vld [vmem:[%s15 + $0x260] sm:$0xff]
  %v810 = vld [vmem:[%s15 + $0x268] sm:$0xff]
  %v811 = vld [vmem:[%s15 + $0x270] sm:$0xff]
  %v812 = vld [vmem:[%s15 + $0x278] sm:$0xff]
  %v813 = vld [vmem:[%s15 + $0x280] sm:$0xff]
  %v814 = vld [vmem:[%s15 + $0x288] sm:$0xff]
  %v815 = vld [vmem:[%s15 + $0x290] sm:$0xff]
  %v816 = vld [vmem:[%s15 + $0x298] sm:$0xff]
  %v817 = vld [vmem:[%s15 + $0x2a0] sm:$0xff]
  %v818 = vld [vmem:[%s15 + $0x2a8] sm:$0xff]
  %v819 = vld [vmem:[%s15 + $0x2b0] sm:$0xff]
  %v820 = vld [vmem:[%s15 + $0x2b8] sm:$0xff]
  %v821 = vld [vmem:[%s15 + $0x2c0] sm:$0xff]
  %v822 = vld [vmem:[%s15 + $0x2c8] sm:$0xff]
  %v823 = vld [vmem:[%s15 + $0x2d0] sm:$0xff]
  %v824 = vld [vmem:[%s15 + $0x2d8] sm:$0xff]
  %v825 = vld [vmem:[%s15 + $0x2e0] sm:$0xff]
  %v826 = vld [vmem:[%s15 + $0x2e8] sm:$0xff]
  %v827 = vld [vmem:[%s15 + $0x2f0] sm:$0xff]
  %v828 = vld [vmem:[%s15 + $0x2f8] sm:$0xff]
  %v829 = vld [vmem:[%s15 + $0x300] sm:$0xff]
  %v830 = vld [vmem:[%s15 + $0x308] sm:$0xff]
  %v831 = vld [vmem:[%s15 + $0x310] sm:$0xff]
  %v832 = vld [vmem:[%s15 + $0x318] sm:$0xff]
  %v833 = vld [vmem:[%s15 + $0x320] sm:$0xff]
  %v834 = vld [vmem:[%s15 + $0x328] sm:$0xff]
  %v835 = vld [vmem:[%s15 + $0x330] sm:$0xff]
  %v836 = vld [vmem:[%s15 + $0x338] sm:$0xff]
  %v837 = vld [vmem:[%s15 + $0x340] sm:$0xff]
  %v838 = vld [vmem:[%s15 + $0x348] sm:$0xff]
  %v839 = vld [vmem:[%s15 + $0x350] sm:$0xff]
  %v840 = vld [vmem:[%s15 + $0x358] sm:$0xff]
  %v841 = vld [vmem:[%s15 + $0x360] sm:$0xff]
  %v842 = vld [vmem:[%s15 + $0x368] sm:$0xff]
  %v843 = vld [vmem:[%s15 + $0x370] sm:$0xff]
  %v844 = vld [vmem:[%s15 + $0x378] sm:$0xff]
  %v845 = vld [vmem:[%s15 + $0x380] sm:$0xff]
  %v846 = vld [vmem:[%s15 + $0x388] sm:$0xff]
  %v847 = vld [vmem:[%s15 + $0x390] sm:$0xff]
  %v848 = vld [vmem:[%s15 + $0x398] sm:$0xff]
  %v849 = vld [vmem:[%s15 + $0x3a0] sm:$0xff]
  %v850 = vld [vmem:[%s15 + $0x3a8] sm:$0xff]
  %v851 = vld [vmem:[%s15 + $0x3b0] sm:$0xff]
  %v852 = vld [vmem:[%s15 + $0x3b8] sm:$0xff]
  %v853 = vld [vmem:[%s15 + $0x3c0] sm:$0xff]
  %v854 = vld [vmem:[%s15 + $0x3c8] sm:$0xff]
  %v855 = vld [vmem:[%s15 + $0x3d0] sm:$0xff]
  %v856 = vld [vmem:[%s15 + $0x3d8] sm:$0xff]
  %v857 = vld [vmem:[%s15 + $0x3e0] sm:$0xff]
  %v858 = vld [vmem:[%s15 + $0x3e8] sm:$0xff]
  %v859 = vld [vmem:[%s15 + $0x3f0] sm:$0xff]
  %v860 = vld [vmem:[%s15 + $0x3f8] sm:$0xff]
  %861 = vmatprep.subr.mxu0 %v734
  %862 = vmatpush1.msra.mxu0 %v733
  %863 = vmatprep.subr.mxu0 %v738
  %864 = vmatpush1.msra.mxu0 %v737
  %865 = vmatprep.subr.mxu0 %v742
  %866 = vmatpush1.msra.mxu0 %v741
  %867 = vmatprep.subr.mxu0 %v746
  %868 = vmatpush1.msra.mxu0 %v745
  %869 = vmatprep.subr.mxu0 %v750
  %870 = vmatpush1.msra.mxu0 %v749
  %871 = vmatprep.subr.mxu0 %v754
  %872 = vmatpush1.msra.mxu0 %v753
  %873 = vmatprep.subr.mxu0 %v758
  %874 = vmatpush1.msra.mxu0 %v757
  %875 = vmatprep.subr.mxu0 %v762
  %876 = vmatpush1.msra.mxu0 %v761
  %877 = vmatprep.subr.mxu0 %v766
  %878 = vmatpush1.msra.mxu0 %v765
  %879 = vmatprep.subr.mxu0 %v770
  %880 = vmatpush1.msra.mxu0 %v769
  %881 = vmatprep.subr.mxu0 %v774
  %882 = vmatpush1.msra.mxu0 %v773
  %883 = vmatprep.subr.mxu0 %v778
  %884 = vmatpush1.msra.mxu0 %v777
  %885 = vmatprep.subr.mxu0 %v782
  %886 = vmatpush1.msra.mxu0 %v781
  %887 = vmatprep.subr.mxu0 %v786
  %888 = vmatpush1.msra.mxu0 %v785
  %889 = vmatprep.subr.mxu0 %v790
  %890 = vmatpush1.msra.mxu0 %v789
  %891 = vmatprep.subr.mxu0 %v794
  %892 = vmatpush1.msra.mxu0 %v793
  %893 = vmatprep.subr.mxu0 %v798
  %894 = vmatpush1.msra.mxu0 %v797
  %895 = vmatprep.subr.mxu0 %v802
  %896 = vmatpush1.msra.mxu0 %v801
  %897 = vmatprep.subr.mxu0 %v806
  %898 = vmatpush1.msra.mxu0 %v805
  %899 = vmatprep.subr.mxu0 %v810
  %900 = vmatpush1.msra.mxu0 %v809
  %901 = vmatprep.subr.mxu0 %v814
  %902 = vmatpush1.msra.mxu0 %v813
  %903 = vmatprep.subr.mxu0 %v818
  %904 = vmatpush1.msra.mxu0 %v817
  %905 = vmatprep.subr.mxu0 %v822
  %906 = vmatpush1.msra.mxu0 %v821
  %907 = vmatprep.subr.mxu0 %v826
  %908 = vmatpush1.msra.mxu0 %v825
  %909 = vmatprep.subr.mxu0 %v830
  %910 = vmatpush1.msra.mxu0 %v829
  %911 = vmatprep.subr.mxu0 %v834
  %912 = vmatpush1.msra.mxu0 %v833
  %913 = vmatprep.subr.mxu0 %v838
  %914 = vmatpush1.msra.mxu0 %v837
  %915 = vmatprep.subr.mxu0 %v842
  %916 = vmatpush1.msra.mxu0 %v841
  %917 = vmatprep.subr.mxu0 %v846
  %918 = vmatpush1.msra.mxu0 %v845
  %919 = vmatprep.subr.mxu0 %v850
  %920 = vmatpush1.msra.mxu0 %v849
  %921 = vmatprep.subr.mxu0 %v854
  %922 = vmatpush1.msra.mxu0 %v853
  %923 = vmatprep.subr.mxu0 %v858
  %924 = vmatpush1.msra.mxu0 %v857
  %925 = vmatprep.mubr.f32.mxu0 %v325
  %926 = vmatmul.mubr.f32.gmra.mrb[0].mxu0 %v324
  %v927 = vpop.f32.mrb[0].mxu0
  %v928 = vadd.f32 0.0, %v927
  %v929 = vpop.f32.mrb[0].mxu0
  %v930 = vadd.f32 0.0, %v929
  %931 = vmatprep.mubr.f32.mxu0 %v327
  %932 = vmatmul.mubr.f32.gmra.mrb[0].mxu0 %v326
  %v933 = vpop.f32.mrb[0].mxu0
  %v934 = vadd.f32 0.0, %v933
  %v935 = vpop.f32.mrb[0].mxu0
  %v936 = vadd.f32 0.0, %v935
  %937 = vdwg.mxu0
  %938 = vmatprep.subr.mxu0 %v736
  %939 = vmatpush1.msra.mxu0 %v735
  %940 = vmatprep.subr.mxu0 %v740
  %941 = vmatpush1.msra.mxu0 %v739
  %942 = vmatprep.subr.mxu0 %v744
  %943 = vmatpush1.msra.mxu0 %v743
  %944 = vmatprep.subr.mxu0 %v748
  %945 = vmatpush1.msra.mxu0 %v747
  %946 = vmatprep.subr.mxu0 %v752
  %947 = vmatpush1.msra.mxu0 %v751
  %948 = vmatprep.subr.mxu0 %v756
  %949 = vmatpush1.msra.mxu0 %v755
  %950 = vmatprep.subr.mxu0 %v760
  %951 = vmatpush1.msra.mxu0 %v759
  %952 = vmatprep.subr.mxu0 %v764
  %953 = vmatpush1.msra.mxu0 %v763
  %954 = vmatprep.subr.mxu0 %v768
  %955 = vmatpush1.msra.mxu0 %v767
  %956 = vmatprep.subr.mxu0 %v772
  %957 = vmatpush1.msra.mxu0 %v771
  %958 = vmatprep.subr.mxu0 %v776
  %959 = vmatpush1.msra.mxu0 %v775
  %960 = vmatprep.subr.mxu0 %v780
  %961 = vmatpush1.msra.mxu0 %v779
  %962 = vmatprep.subr.mxu0 %v784
  %963 = vmatpush1.msra.mxu0 %v783
  %964 = vmatprep.subr.mxu0 %v788
  %965 = vmatpush1.msra.mxu0 %v787
  %966 = vmatprep.subr.mxu0 %v792
  %967 = vmatpush1.msra.mxu0 %v791
  %968 = vmatprep.subr.mxu0 %v796
  %969 = vmatpush1.msra.mxu0 %v795
  %970 = vmatprep.subr.mxu0 %v800
  %971 = vmatpush1.msra.mxu0 %v799
  %972 = vmatprep.subr.mxu0 %v804
  %973 = vmatpush1.msra.mxu0 %v803
  %974 = vmatprep.subr.mxu0 %v808
  %975 = vmatpush1.msra.mxu0 %v807
  %976 = vmatprep.subr.mxu0 %v812
  %977 = vmatpush1.msra.mxu0 %v811
  %978 = vmatprep.subr.mxu0 %v816
  %979 = vmatpush1.msra.mxu0 %v815
  %980 = vmatprep.subr.mxu0 %v820
  %981 = vmatpush1.msra.mxu0 %v819
  %982 = vmatprep.subr.mxu0 %v824
  %983 = vmatpush1.msra.mxu0 %v823
  %984 = vmatprep.subr.mxu0 %v828
  %985 = vmatpush1.msra.mxu0 %v827
  %986 = vmatprep.subr.mxu0 %v832
  %987 = vmatpush1.msra.mxu0 %v831
  %988 = vmatprep.subr.mxu0 %v836
  %989 = vmatpush1.msra.mxu0 %v835
  %990 = vmatprep.subr.mxu0 %v840
  %991 = vmatpush1.msra.mxu0 %v839
  %992 = vmatprep.subr.mxu0 %v844
  %993 = vmatpush1.msra.mxu0 %v843
  %994 = vmatprep.subr.mxu0 %v848
  %995 = vmatpush1.msra.mxu0 %v847
  %996 = vmatprep.subr.mxu0 %v852
  %997 = vmatpush1.msra.mxu0 %v851
  %998 = vmatprep.subr.mxu0 %v856
  %999 = vmatpush1.msra.mxu0 %v855
  %1000 = vmatprep.subr.mxu0 %v860
  %1001 = vmatpush1.msra.mxu0 %v859
  %1002 = vmatprep.mubr.f32.mxu0 %v325
  %1003 = vmatmul.mubr.f32.gmra.mrb[0].mxu0 %v324
  %v1004 = vpop.f32.mrb[0].mxu0
  %v1005 = vadd.f32 0.0, %v1004
  %v1006 = vpop.f32.mrb[0].mxu0
  %v1007 = vadd.f32 0.0, %v1006
  %1008 = vmatprep.mubr.f32.mxu0 %v327
  %1009 = vmatmul.mubr.f32.gmra.mrb[0].mxu0 %v326
  %v1010 = vpop.f32.mrb[0].mxu0
  %v1011 = vadd.f32 0.0, %v1010
  %v1012 = vpop.f32.mrb[0].mxu0
  %v1013 = vadd.f32 0.0, %v1012
  %1014 = vdwg.mxu0
  %v1015 = vld [vmem:[%s2] sm:$0xff]
  %v1016 = vld [vmem:[%s2 + $0x8] sm:$0xff]
  %v1017 = vld [vmem:[%s3] sm:$0xff]
  %v1018 = vld [vmem:[%s3 + $0x8] sm:$0xff]
  %v1019 = vld [vmem:[%s4] sm:$0xff]
  %vm1020 = vcmask 64512
  %v1022 = vsel %vm1020, %v1015, 0
  %v1025 = vsel %vm1020, %v1016, 0
  %1027 = vmatprep.subr.mxu0 %v589
  %1028 = vmatpush1.msra.mxu0 %v587
  %1029 = vmatprep.subr.mxu0 0.0
  %1030 = vmatpush1.msra.mxu0 0.0
  %1031 = vmatprep.subr.mxu0 0.0
  %1032 = vmatpush1.msra.mxu0 0.0
  %1033 = vmatprep.subr.mxu0 0.0
  %1034 = vmatpush1.msra.mxu0 0.0
  %1035 = vmatprep.subr.mxu0 0.0
  %1036 = vmatpush1.msra.mxu0 0.0
  %1037 = vmatprep.subr.mxu0 0.0
  %1038 = vmatpush1.msra.mxu0 0.0
  %1039 = vmatprep.subr.mxu0 0.0
  %1040 = vmatpush1.msra.mxu0 0.0
  %1041 = vmatprep.subr.mxu0 0.0
  %1042 = vmatpush1.msra.mxu0 0.0
  %1043 = vmatprep.subr.mxu0 0.0
  %1044 = vmatpush1.msra.mxu0 0.0
  %1045 = vmatprep.subr.mxu0 0.0
  %1046 = vmatpush1.msra.mxu0 0.0
  %1047 = vmatprep.subr.mxu0 0.0
  %1048 = vmatpush1.msra.mxu0 0.0
  %1049 = vmatprep.subr.mxu0 0.0
  %1050 = vmatpush1.msra.mxu0 0.0
  %1051 = vmatprep.subr.mxu0 0.0
  %1052 = vmatpush1.msra.mxu0 0.0
  %1053 = vmatprep.subr.mxu0 0.0
  %1054 = vmatpush1.msra.mxu0 0.0
  %1055 = vmatprep.subr.mxu0 0.0
  %1056 = vmatpush1.msra.mxu0 0.0
  %1057 = vmatprep.subr.mxu0 0.0
  %1058 = vmatpush1.msra.mxu0 0.0
  %1059 = vmatprep.subr.mxu0 0.0
  %1060 = vmatpush1.msra.mxu0 0.0
  %1061 = vmatprep.subr.mxu0 0.0
  %1062 = vmatpush1.msra.mxu0 0.0
  %1063 = vmatprep.subr.mxu0 0.0
  %1064 = vmatpush1.msra.mxu0 0.0
  %1065 = vmatprep.subr.mxu0 0.0
  %1066 = vmatpush1.msra.mxu0 0.0
  %1067 = vmatprep.subr.mxu0 0.0
  %1068 = vmatpush1.msra.mxu0 0.0
  %1069 = vmatprep.subr.mxu0 0.0
  %1070 = vmatpush1.msra.mxu0 0.0
  %1071 = vmatprep.subr.mxu0 0.0
  %1072 = vmatpush1.msra.mxu0 0.0
  %1073 = vmatprep.subr.mxu0 0.0
  %1074 = vmatpush1.msra.mxu0 0.0
  %1075 = vmatprep.subr.mxu0 0.0
  %1076 = vmatpush1.msra.mxu0 0.0
  %1077 = vmatprep.subr.mxu0 0.0
  %1078 = vmatpush1.msra.mxu0 0.0
  %1079 = vmatprep.subr.mxu0 0.0
  %1080 = vmatpush1.msra.mxu0 0.0
  %1081 = vmatprep.subr.mxu0 0.0
  %1082 = vmatpush1.msra.mxu0 0.0
  %1083 = vmatprep.subr.mxu0 0.0
  %1084 = vmatpush1.msra.mxu0 0.0
  %1085 = vmatprep.subr.mxu0 0.0
  %1086 = vmatpush1.msra.mxu0 0.0
  %1087 = vmatprep.subr.mxu0 0.0
  %1088 = vmatpush1.msra.mxu0 0.0
  %1089 = vmatprep.subr.mxu0 0.0
  %1090 = vmatpush1.msra.mxu0 0.0
  %1091 = vmatprep.mubr.f32.mxu0 0.0
  %1092 = vmatmul.mubr.f32.gmra.mrb[0].mxu0 %v1022
  %v1093 = vpop.f32.mrb[0].mxu0
  %v1094 = vadd.f32 0.0, %v1093
  %v1095 = vpop.f32.mrb[0].mxu0
  %v1096 = vadd.f32 0.0, %v1095
  %1097 = vmatprep.mubr.f32.mxu0 0.0
  %1098 = vmatmul.mubr.f32.gmra.mrb[0].mxu0 %v1025
  %v1099 = vpop.f32.mrb[0].mxu0
  %v1100 = vadd.f32 0.0, %v1099
  %v1101 = vpop.f32.mrb[0].mxu0
  %v1102 = vadd.f32 0.0, %v1101
  %1103 = vdwg.mxu0
  %v1105 = vsel %vm1020, %v1017, 0
  %v1108 = vsel %vm1020, %v1018, 0
  %1110 = vmatprep.subr.mxu0 %v660
  %1111 = vmatpush1.msra.mxu0 %v658
  %1112 = vmatprep.subr.mxu0 0.0
  %1113 = vmatpush1.msra.mxu0 0.0
  %1114 = vmatprep.subr.mxu0 0.0
  %1115 = vmatpush1.msra.mxu0 0.0
  %1116 = vmatprep.subr.mxu0 0.0
  %1117 = vmatpush1.msra.mxu0 0.0
  %1118 = vmatprep.subr.mxu0 0.0
  %1119 = vmatpush1.msra.mxu0 0.0
  %1120 = vmatprep.subr.mxu0 0.0
  %1121 = vmatpush1.msra.mxu0 0.0
  %1122 = vmatprep.subr.mxu0 0.0
  %1123 = vmatpush1.msra.mxu0 0.0
  %1124 = vmatprep.subr.mxu0 0.0
  %1125 = vmatpush1.msra.mxu0 0.0
  %1126 = vmatprep.subr.mxu0 0.0
  %1127 = vmatpush1.msra.mxu0 0.0
  %1128 = vmatprep.subr.mxu0 0.0
  %1129 = vmatpush1.msra.mxu0 0.0
  %1130 = vmatprep.subr.mxu0 0.0
  %1131 = vmatpush1.msra.mxu0 0.0
  %1132 = vmatprep.subr.mxu0 0.0
  %1133 = vmatpush1.msra.mxu0 0.0
  %1134 = vmatprep.subr.mxu0 0.0
  %1135 = vmatpush1.msra.mxu0 0.0
  %1136 = vmatprep.subr.mxu0 0.0
  %1137 = vmatpush1.msra.mxu0 0.0
  %1138 = vmatprep.subr.mxu0 0.0
  %1139 = vmatpush1.msra.mxu0 0.0
  %1140 = vmatprep.subr.mxu0 0.0
  %1141 = vmatpush1.msra.mxu0 0.0
  %1142 = vmatprep.subr.mxu0 0.0
  %1143 = vmatpush1.msra.mxu0 0.0
  %1144 = vmatprep.subr.mxu0 0.0
  %1145 = vmatpush1.msra.mxu0 0.0
  %1146 = vmatprep.subr.mxu0 0.0
  %1147 = vmatpush1.msra.mxu0 0.0
  %1148 = vmatprep.subr.mxu0 0.0
  %1149 = vmatpush1.msra.mxu0 0.0
  %1150 = vmatprep.subr.mxu0 0.0
  %1151 = vmatpush1.msra.mxu0 0.0
  %1152 = vmatprep.subr.mxu0 0.0
  %1153 = vmatpush1.msra.mxu0 0.0
  %1154 = vmatprep.subr.mxu0 0.0
  %1155 = vmatpush1.msra.mxu0 0.0
  %1156 = vmatprep.subr.mxu0 0.0
  %1157 = vmatpush1.msra.mxu0 0.0
  %1158 = vmatprep.subr.mxu0 0.0
  %1159 = vmatpush1.msra.mxu0 0.0
  %1160 = vmatprep.subr.mxu0 0.0
  %1161 = vmatpush1.msra.mxu0 0.0
  %1162 = vmatprep.subr.mxu0 0.0
  %1163 = vmatpush1.msra.mxu0 0.0
  %1164 = vmatprep.subr.mxu0 0.0
  %1165 = vmatpush1.msra.mxu0 0.0
  %1166 = vmatprep.subr.mxu0 0.0
  %1167 = vmatpush1.msra.mxu0 0.0
  %1168 = vmatprep.subr.mxu0 0.0
  %1169 = vmatpush1.msra.mxu0 0.0
  %1170 = vmatprep.subr.mxu0 0.0
  %1171 = vmatpush1.msra.mxu0 0.0
  %1172 = vmatprep.subr.mxu0 0.0
  %1173 = vmatpush1.msra.mxu0 0.0
  %1174 = vmatprep.mubr.f32.mxu0 0.0
  %1175 = vmatmul.mubr.f32.gmra.mrb[0].mxu0 %v1105
  %v1176 = vpop.f32.mrb[0].mxu0
  %v1177 = vadd.f32 %v928, %v1176
  %v1178 = vpop.f32.mrb[0].mxu0
  %v1179 = vadd.f32 %v930, %v1178
  %1180 = vmatprep.mubr.f32.mxu0 0.0
  %1181 = vmatmul.mubr.f32.gmra.mrb[0].mxu0 %v1108
  %v1182 = vpop.f32.mrb[0].mxu0
  %v1183 = vadd.f32 %v934, %v1182
  %v1184 = vpop.f32.mrb[0].mxu0
  %v1185 = vadd.f32 %v936, %v1184
  %1186 = vdwg.mxu0
  %1187 = vmatprep.subr.mxu0 %v731
  %1188 = vmatpush1.msra.mxu0 %v729
  %1189 = vmatprep.subr.mxu0 0.0
  %1190 = vmatpush1.msra.mxu0 0.0
  %1191 = vmatprep.subr.mxu0 0.0
  %1192 = vmatpush1.msra.mxu0 0.0
  %1193 = vmatprep.subr.mxu0 0.0
  %1194 = vmatpush1.msra.mxu0 0.0
  %1195 = vmatprep.subr.mxu0 0.0
  %1196 = vmatpush1.msra.mxu0 0.0
  %1197 = vmatprep.subr.mxu0 0.0
  %1198 = vmatpush1.msra.mxu0 0.0
  %1199 = vmatprep.subr.mxu0 0.0
  %1200 = vmatpush1.msra.mxu0 0.0
  %1201 = vmatprep.subr.mxu0 0.0
  %1202 = vmatpush1.msra.mxu0 0.0
  %1203 = vmatprep.subr.mxu0 0.0
  %1204 = vmatpush1.msra.mxu0 0.0
  %1205 = vmatprep.subr.mxu0 0.0
  %1206 = vmatpush1.msra.mxu0 0.0
  %1207 = vmatprep.subr.mxu0 0.0
  %1208 = vmatpush1.msra.mxu0 0.0
  %1209 = vmatprep.subr.mxu0 0.0
  %1210 = vmatpush1.msra.mxu0 0.0
  %1211 = vmatprep.subr.mxu0 0.0
  %1212 = vmatpush1.msra.mxu0 0.0
  %1213 = vmatprep.subr.mxu0 0.0
  %1214 = vmatpush1.msra.mxu0 0.0
  %1215 = vmatprep.subr.mxu0 0.0
  %1216 = vmatpush1.msra.mxu0 0.0
  %1217 = vmatprep.subr.mxu0 0.0
  %1218 = vmatpush1.msra.mxu0 0.0
  %1219 = vmatprep.subr.mxu0 0.0
  %1220 = vmatpush1.msra.mxu0 0.0
  %1221 = vmatprep.subr.mxu0 0.0
  %1222 = vmatpush1.msra.mxu0 0.0
  %1223 = vmatprep.subr.mxu0 0.0
  %1224 = vmatpush1.msra.mxu0 0.0
  %1225 = vmatprep.subr.mxu0 0.0
  %1226 = vmatpush1.msra.mxu0 0.0
  %1227 = vmatprep.subr.mxu0 0.0
  %1228 = vmatpush1.msra.mxu0 0.0
  %1229 = vmatprep.subr.mxu0 0.0
  %1230 = vmatpush1.msra.mxu0 0.0
  %1231 = vmatprep.subr.mxu0 0.0
  %1232 = vmatpush1.msra.mxu0 0.0
  %1233 = vmatprep.subr.mxu0 0.0
  %1234 = vmatpush1.msra.mxu0 0.0
  %1235 = vmatprep.subr.mxu0 0.0
  %1236 = vmatpush1.msra.mxu0 0.0
  %1237 = vmatprep.subr.mxu0 0.0
  %1238 = vmatpush1.msra.mxu0 0.0
  %1239 = vmatprep.subr.mxu0 0.0
  %1240 = vmatpush1.msra.mxu0 0.0
  %1241 = vmatprep.subr.mxu0 0.0
  %1242 = vmatpush1.msra.mxu0 0.0
  %1243 = vmatprep.subr.mxu0 0.0
  %1244 = vmatpush1.msra.mxu0 0.0
  %1245 = vmatprep.subr.mxu0 0.0
  %1246 = vmatpush1.msra.mxu0 0.0
  %1247 = vmatprep.subr.mxu0 0.0
  %1248 = vmatpush1.msra.mxu0 0.0
  %1249 = vmatprep.subr.mxu0 0.0
  %1250 = vmatpush1.msra.mxu0 0.0
  %1251 = vmatprep.mubr.f32.mxu0 0.0
  %1252 = vmatmul.mubr.f32.gmra.mrb[0].mxu0 %v1105
  %v1253 = vpop.f32.mrb[0].mxu0
  %v1254 = vadd.f32 %v1005, %v1253
  %v1255 = vpop.f32.mrb[0].mxu0
  %v1256 = vadd.f32 %v1007, %v1255
  %1257 = vmatprep.mubr.f32.mxu0 0.0
  %1258 = vmatmul.mubr.f32.gmra.mrb[0].mxu0 %v1108
  %v1259 = vpop.f32.mrb[0].mxu0
  %v1260 = vadd.f32 %v1011, %v1259
  %v1261 = vpop.f32.mrb[0].mxu0
  %v1262 = vadd.f32 %v1013, %v1261
  %1263 = vdwg.mxu0
  %v1264 = vmul.f32 %v1094, %v1177
  %v1265 = vmul.f32 %v1096, %v1179
  %v1266 = vmul.f32 %v1100, %v1183
  %v1267 = vmul.f32 %v1102, %v1185
  %v1268 = vld [vmem:[%s9] sm:$0xff]
  %v1269 = vld [vmem:[%s9 + $0x8] sm:$0xff]
  %v1270 = vld [vmem:[%s9 + $0x10] sm:$0xff]
  %v1271 = vld [vmem:[%s9 + $0x18] sm:$0xff]
  %v1272 = vld [vmem:[%s9 + $0x20] sm:$0xff]
  %v1273 = vld [vmem:[%s9 + $0x28] sm:$0xff]
  %v1274 = vld [vmem:[%s9 + $0x30] sm:$0xff]
  %v1275 = vld [vmem:[%s9 + $0x38] sm:$0xff]
  %v1276 = vld [vmem:[%s9 + $0x40] sm:$0xff]
  %v1277 = vld [vmem:[%s9 + $0x48] sm:$0xff]
  %v1278 = vld [vmem:[%s9 + $0x50] sm:$0xff]
  %v1279 = vld [vmem:[%s9 + $0x58] sm:$0xff]
  %v1280 = vld [vmem:[%s9 + $0x60] sm:$0xff]
  %v1281 = vld [vmem:[%s9 + $0x68] sm:$0xff]
  %v1282 = vld [vmem:[%s9 + $0x70] sm:$0xff]
  %v1283 = vld [vmem:[%s9 + $0x78] sm:$0xff]
  %v1284 = vld [vmem:[%s9 + $0x80] sm:$0xff]
  %v1285 = vld [vmem:[%s9 + $0x88] sm:$0xff]
  %v1286 = vld [vmem:[%s9 + $0x90] sm:$0xff]
  %v1287 = vld [vmem:[%s9 + $0x98] sm:$0xff]
  %v1288 = vld [vmem:[%s9 + $0xa0] sm:$0xff]
  %v1289 = vld [vmem:[%s9 + $0xa8] sm:$0xff]
  %v1290 = vld [vmem:[%s9 + $0xb0] sm:$0xff]
  %v1291 = vld [vmem:[%s9 + $0xb8] sm:$0xff]
  %v1292 = vld [vmem:[%s9 + $0xc0] sm:$0xff]
  %v1293 = vld [vmem:[%s9 + $0xc8] sm:$0xff]
  %v1294 = vld [vmem:[%s9 + $0xd0] sm:$0xff]
  %v1295 = vld [vmem:[%s9 + $0xd8] sm:$0xff]
  %v1296 = vld [vmem:[%s9 + $0xe0] sm:$0xff]
  %v1297 = vld [vmem:[%s9 + $0xe8] sm:$0xff]
  %v1298 = vld [vmem:[%s9 + $0xf0] sm:$0xff]
  %v1299 = vld [vmem:[%s9 + $0xf8] sm:$0xff]
  %1300 = vmatprep.subr.mxu0 0.0
  %1301 = vmatpush1.msra.mxu0 %v1268
  %1302 = vmatprep.subr.mxu0 0.0
  %1303 = vmatpush1.msra.mxu0 %v1269
  %1304 = vmatprep.subr.mxu0 0.0
  %1305 = vmatpush1.msra.mxu0 %v1270
  %1306 = vmatprep.subr.mxu0 0.0
  %1307 = vmatpush1.msra.mxu0 %v1271
  %1308 = vmatprep.subr.mxu0 0.0
  %1309 = vmatpush1.msra.mxu0 %v1272
  %1310 = vmatprep.subr.mxu0 0.0
  %1311 = vmatpush1.msra.mxu0 %v1273
  %1312 = vmatprep.subr.mxu0 0.0
  %1313 = vmatpush1.msra.mxu0 %v1274
  %1314 = vmatprep.subr.mxu0 0.0
  %1315 = vmatpush1.msra.mxu0 %v1275
  %1316 = vmatprep.subr.mxu0 0.0
  %1317 = vmatpush1.msra.mxu0 %v1276
  %1318 = vmatprep.subr.mxu0 0.0
  %1319 = vmatpush1.msra.mxu0 %v1277
  %1320 = vmatprep.subr.mxu0 0.0
  %1321 = vmatpush1.msra.mxu0 %v1278
  %1322 = vmatprep.subr.mxu0 0.0
  %1323 = vmatpush1.msra.mxu0 %v1279
  %1324 = vmatprep.subr.mxu0 0.0
  %1325 = vmatpush1.msra.mxu0 %v1280
  %1326 = vmatprep.subr.mxu0 0.0
  %1327 = vmatpush1.msra.mxu0 %v1281
  %1328 = vmatprep.subr.mxu0 0.0
  %1329 = vmatpush1.msra.mxu0 %v1282
  %1330 = vmatprep.subr.mxu0 0.0
  %1331 = vmatpush1.msra.mxu0 %v1283
  %1332 = vmatprep.subr.mxu0 0.0
  %1333 = vmatpush1.msra.mxu0 %v1284
  %1334 = vmatprep.subr.mxu0 0.0
  %1335 = vmatpush1.msra.mxu0 %v1285
  %1336 = vmatprep.subr.mxu0 0.0
  %1337 = vmatpush1.msra.mxu0 %v1286
  %1338 = vmatprep.subr.mxu0 0.0
  %1339 = vmatpush1.msra.mxu0 %v1287
  %1340 = vmatprep.subr.mxu0 0.0
  %1341 = vmatpush1.msra.mxu0 %v1288
  %1342 = vmatprep.subr.mxu0 0.0
  %1343 = vmatpush1.msra.mxu0 %v1289
  %1344 = vmatprep.subr.mxu0 0.0
  %1345 = vmatpush1.msra.mxu0 %v1290
  %1346 = vmatprep.subr.mxu0 0.0
  %1347 = vmatpush1.msra.mxu0 %v1291
  %1348 = vmatprep.subr.mxu0 0.0
  %1349 = vmatpush1.msra.mxu0 %v1292
  %1350 = vmatprep.subr.mxu0 0.0
  %1351 = vmatpush1.msra.mxu0 %v1293
  %1352 = vmatprep.subr.mxu0 0.0
  %1353 = vmatpush1.msra.mxu0 %v1294
  %1354 = vmatprep.subr.mxu0 0.0
  %1355 = vmatpush1.msra.mxu0 %v1295
  %1356 = vmatprep.subr.mxu0 0.0
  %1357 = vmatpush1.msra.mxu0 %v1296
  %1358 = vmatprep.subr.mxu0 0.0
  %1359 = vmatpush1.msra.mxu0 %v1297
  %1360 = vmatprep.subr.mxu0 0.0
  %1361 = vmatpush1.msra.mxu0 %v1298
  %1362 = vmatprep.subr.mxu0 0.0
  %1363 = vmatpush1.msra.mxu0 %v1299
  %1364 = vmatprep.mubr.f32.mxu0 %v1265
  %1365 = vmatmul.mubr.f32.gmra.mrb[0].mxu0 %v1264
  %v1366 = vpop.f32.mrb[0].mxu0
  %v1367 = vadd.f32 0.0, %v1366
  %v1368 = vpop.f32.mrb[0].mxu0
  %1369 = vmatprep.mubr.f32.mxu0 %v1267
  %1370 = vmatmul.mubr.f32.gmra.mrb[0].mxu0 %v1266
  %v1371 = vpop.f32.mrb[0].mxu0
  %v1372 = vadd.f32 0.0, %v1371
  %v1373 = vpop.f32.mrb[0].mxu0
  %1374 = vdwg.mxu0
  %v1375 = vld [vmem:[%s5] sm:$0xff]
  %v1376 = vld [vmem:[%s5 + $0x8] sm:$0xff]
  %v1377 = vld [vmem:[%s5 + $0x10] sm:$0xff]
  %v1378 = vld [vmem:[%s5 + $0x18] sm:$0xff]
  %v1379 = vld [vmem:[%s6] sm:$0xff]
  %v1380 = vld [vmem:[%s6 + $0x8] sm:$0xff]
  %v1381 = vld [vmem:[%s6 + $0x10] sm:$0xff]
  %v1382 = vld [vmem:[%s6 + $0x18] sm:$0xff]
  %v1383 = vld [vmem:[%s6 + $0x20] sm:$0xff]
  %v1384 = vld [vmem:[%s6 + $0x28] sm:$0xff]
  %v1385 = vld [vmem:[%s6 + $0x30] sm:$0xff]
  %v1386 = vld [vmem:[%s6 + $0x38] sm:$0xff]
  %vm1387 = vcmask 261120
  %v1389 = vsel %vm1387, %v1367, 0
  %v1392 = vsel %vm1387, %v1372, 0
  %1394 = vmatprep.subr.mxu0 %v1380
  %1395 = vmatpush1.msra.mxu0 %v1379
  %1396 = vmatprep.subr.mxu0 %v1382
  %1397 = vmatpush1.msra.mxu0 %v1381
  %1398 = vmatprep.subr.mxu0 %v1384
  %1399 = vmatpush1.msra.mxu0 %v1383
  %1400 = vmatprep.subr.mxu0 %v1386
  %1401 = vmatpush1.msra.mxu0 %v1385
  %1402 = vmatprep.subr.mxu0 0.0
  %1403 = vmatpush1.msra.mxu0 0.0
  %1404 = vmatprep.subr.mxu0 0.0
  %1405 = vmatpush1.msra.mxu0 0.0
  %1406 = vmatprep.subr.mxu0 0.0
  %1407 = vmatpush1.msra.mxu0 0.0
  %1408 = vmatprep.subr.mxu0 0.0
  %1409 = vmatpush1.msra.mxu0 0.0
  %1410 = vmatprep.subr.mxu0 0.0
  %1411 = vmatpush1.msra.mxu0 0.0
  %1412 = vmatprep.subr.mxu0 0.0
  %1413 = vmatpush1.msra.mxu0 0.0
  %1414 = vmatprep.subr.mxu0 0.0
  %1415 = vmatpush1.msra.mxu0 0.0
  %1416 = vmatprep.subr.mxu0 0.0
  %1417 = vmatpush1.msra.mxu0 0.0
  %1418 = vmatprep.subr.mxu0 0.0
  %1419 = vmatpush1.msra.mxu0 0.0
  %1420 = vmatprep.subr.mxu0 0.0
  %1421 = vmatpush1.msra.mxu0 0.0
  %1422 = vmatprep.subr.mxu0 0.0
  %1423 = vmatpush1.msra.mxu0 0.0
  %1424 = vmatprep.subr.mxu0 0.0
  %1425 = vmatpush1.msra.mxu0 0.0
  %1426 = vmatprep.subr.mxu0 0.0
  %1427 = vmatpush1.msra.mxu0 0.0
  %1428 = vmatprep.subr.mxu0 0.0
  %1429 = vmatpush1.msra.mxu0 0.0
  %1430 = vmatprep.subr.mxu0 0.0
  %1431 = vmatpush1.msra.mxu0 0.0
  %1432 = vmatprep.subr.mxu0 0.0
  %1433 = vmatpush1.msra.mxu0 0.0
  %1434 = vmatprep.subr.mxu0 0.0
  %1435 = vmatpush1.msra.mxu0 0.0
  %1436 = vmatprep.subr.mxu0 0.0
  %1437 = vmatpush1.msra.mxu0 0.0
  %1438 = vmatprep.subr.mxu0 0.0
  %1439 = vmatpush1.msra.mxu0 0.0
  %1440 = vmatprep.subr.mxu0 0.0
  %1441 = vmatpush1.msra.mxu0 0.0
  %1442 = vmatprep.subr.mxu0 0.0
  %1443 = vmatpush1.msra.mxu0 0.0
  %1444 = vmatprep.subr.mxu0 0.0
  %1445 = vmatpush1.msra.mxu0 0.0
  %1446 = vmatprep.subr.mxu0 0.0
  %1447 = vmatpush1.msra.mxu0 0.0
  %1448 = vmatprep.subr.mxu0 0.0
  %1449 = vmatpush1.msra.mxu0 0.0
  %1450 = vmatprep.subr.mxu0 0.0
  %1451 = vmatpush1.msra.mxu0 0.0
  %1452 = vmatprep.subr.mxu0 0.0
  %1453 = vmatpush1.msra.mxu0 0.0
  %1454 = vmatprep.subr.mxu0 0.0
  %1455 = vmatpush1.msra.mxu0 0.0
  %1456 = vmatprep.subr.mxu0 0.0
  %1457 = vmatpush1.msra.mxu0 0.0
  %1458 = vmatprep.mubr.f32.mxu0 0.0
  %1459 = vmatmul.mubr.f32.gmra.mrb[0].mxu0 %v1389
  %v1460 = vpop.f32.mrb[0].mxu0
  %v1461 = vadd.f32 0.0, %v1460
  %v1462 = vpop.f32.mrb[0].mxu0
  %v1463 = vadd.f32 0.0, %v1462
  %1464 = vmatprep.mubr.f32.mxu0 0.0
  %1465 = vmatmul.mubr.f32.gmra.mrb[0].mxu0 %v1392
  %v1466 = vpop.f32.mrb[0].mxu0
  %v1467 = vadd.f32 0.0, %v1466
  %v1468 = vpop.f32.mrb[0].mxu0
  %v1469 = vadd.f32 0.0, %v1468
  %1470 = vdwg.mxu0
  %v1471 = vmul.f32 %v1375, %v1461
  %v1472 = vmul.f32 %v1376, %v1463
  %v1473 = vmul.f32 %v1377, %v1467
  %v1474 = vmul.f32 %v1378, %v1469
  %v1475 = vsub.f32 %v1375, 1.0
  %v1476 = vsub.f32 %v1376, 1.0
  %v1477 = vsub.f32 %v1377, 1.0
  %v1478 = vsub.f32 %v1378, 1.0
  %v1479 = vmul.f32 %v1475, 1e+30
  %v1480 = vmul.f32 %v1476, 1e+30
  %v1481 = vmul.f32 %v1477, 1e+30
  %v1482 = vmul.f32 %v1478, 1e+30
  %v1483 = vadd.f32 %v1471, %v1479
  %v1484 = vadd.f32 %v1472, %v1480
  %v1485 = vadd.f32 %v1473, %v1481
  %v1486 = vadd.f32 %v1474, %v1482
  %v1487 = vmax.f32 %v1483, %v1485
  %v1488 = vrot.slane %v1487, 4
  %v1489 = vmax.f32 %v1487, %v1488
  %v1490 = vrot.slane %v1489, 2
  %v1491 = vmax.f32 %v1489, %v1490
  %v1492 = vrot.slane %v1491, 1
  %v1493 = vmax.f32 %v1491, %v1492
  %v1494 = vmax.f32 %v1484, %v1486
  %v1495 = vrot.slane %v1494, 4
  %v1496 = vmax.f32 %v1494, %v1495
  %v1497 = vrot.slane %v1496, 2
  %v1498 = vmax.f32 %v1496, %v1497
  %v1499 = vrot.slane %v1498, 1
  %v1500 = vmax.f32 %v1498, %v1499
  %v1501 = vmul.f32 %v1375, %v1493
  %v1502 = vmul.f32 %v1376, %v1500
  %v1503 = vmul.f32 %v1377, %v1493
  %v1504 = vmul.f32 %v1378, %v1500
  %v1505 = vld [vmem:[%s7] sm:$0xff]
  %v1506 = vld [vmem:[%s7 + $0x8] sm:$0xff]
  %v1507 = vld [vmem:[%s7 + $0x10] sm:$0xff]
  %v1508 = vld [vmem:[%s7 + $0x18] sm:$0xff]
  %v1509 = vld [vmem:[%s7 + $0x20] sm:$0xff]
  %v1510 = vld [vmem:[%s7 + $0x28] sm:$0xff]
  %v1511 = vld [vmem:[%s7 + $0x30] sm:$0xff]
  %v1512 = vld [vmem:[%s7 + $0x38] sm:$0xff]
  %v1513 = vld [vmem:[%s7 + $0x40] sm:$0xff]
  %v1514 = vld [vmem:[%s7 + $0x48] sm:$0xff]
  %v1515 = vld [vmem:[%s7 + $0x50] sm:$0xff]
  %v1516 = vld [vmem:[%s7 + $0x58] sm:$0xff]
  %v1517 = vld [vmem:[%s7 + $0x60] sm:$0xff]
  %v1518 = vld [vmem:[%s7 + $0x68] sm:$0xff]
  %v1519 = vld [vmem:[%s7 + $0x70] sm:$0xff]
  %v1520 = vld [vmem:[%s7 + $0x78] sm:$0xff]
  %v1521 = vld [vmem:[%s7 + $0x80] sm:$0xff]
  %v1522 = vld [vmem:[%s7 + $0x88] sm:$0xff]
  %v1523 = vld [vmem:[%s7 + $0x90] sm:$0xff]
  %v1524 = vld [vmem:[%s7 + $0x98] sm:$0xff]
  %v1525 = vld [vmem:[%s7 + $0xa0] sm:$0xff]
  %v1526 = vld [vmem:[%s7 + $0xa8] sm:$0xff]
  %v1527 = vld [vmem:[%s7 + $0xb0] sm:$0xff]
  %v1528 = vld [vmem:[%s7 + $0xb8] sm:$0xff]
  %v1529 = vld [vmem:[%s7 + $0xc0] sm:$0xff]
  %v1530 = vld [vmem:[%s7 + $0xc8] sm:$0xff]
  %v1531 = vld [vmem:[%s7 + $0xd0] sm:$0xff]
  %v1532 = vld [vmem:[%s7 + $0xd8] sm:$0xff]
  %v1533 = vld [vmem:[%s7 + $0xe0] sm:$0xff]
  %v1534 = vld [vmem:[%s7 + $0xe8] sm:$0xff]
  %v1535 = vld [vmem:[%s7 + $0xf0] sm:$0xff]
  %v1536 = vld [vmem:[%s7 + $0xf8] sm:$0xff]
  %1537 = vmatprep.subr.mxu0 0.0
  %1538 = vmatpush1.msra.mxu0 %v1505
  %1539 = vmatprep.subr.mxu0 0.0
  %1540 = vmatpush1.msra.mxu0 %v1506
  %1541 = vmatprep.subr.mxu0 0.0
  %1542 = vmatpush1.msra.mxu0 %v1507
  %1543 = vmatprep.subr.mxu0 0.0
  %1544 = vmatpush1.msra.mxu0 %v1508
  %1545 = vmatprep.subr.mxu0 0.0
  %1546 = vmatpush1.msra.mxu0 %v1509
  %1547 = vmatprep.subr.mxu0 0.0
  %1548 = vmatpush1.msra.mxu0 %v1510
  %1549 = vmatprep.subr.mxu0 0.0
  %1550 = vmatpush1.msra.mxu0 %v1511
  %1551 = vmatprep.subr.mxu0 0.0
  %1552 = vmatpush1.msra.mxu0 %v1512
  %1553 = vmatprep.subr.mxu0 0.0
  %1554 = vmatpush1.msra.mxu0 %v1513
  %1555 = vmatprep.subr.mxu0 0.0
  %1556 = vmatpush1.msra.mxu0 %v1514
  %1557 = vmatprep.subr.mxu0 0.0
  %1558 = vmatpush1.msra.mxu0 %v1515
  %1559 = vmatprep.subr.mxu0 0.0
  %1560 = vmatpush1.msra.mxu0 %v1516
  %1561 = vmatprep.subr.mxu0 0.0
  %1562 = vmatpush1.msra.mxu0 %v1517
  %1563 = vmatprep.subr.mxu0 0.0
  %1564 = vmatpush1.msra.mxu0 %v1518
  %1565 = vmatprep.subr.mxu0 0.0
  %1566 = vmatpush1.msra.mxu0 %v1519
  %1567 = vmatprep.subr.mxu0 0.0
  %1568 = vmatpush1.msra.mxu0 %v1520
  %1569 = vmatprep.subr.mxu0 0.0
  %1570 = vmatpush1.msra.mxu0 %v1521
  %1571 = vmatprep.subr.mxu0 0.0
  %1572 = vmatpush1.msra.mxu0 %v1522
  %1573 = vmatprep.subr.mxu0 0.0
  %1574 = vmatpush1.msra.mxu0 %v1523
  %1575 = vmatprep.subr.mxu0 0.0
  %1576 = vmatpush1.msra.mxu0 %v1524
  %1577 = vmatprep.subr.mxu0 0.0
  %1578 = vmatpush1.msra.mxu0 %v1525
  %1579 = vmatprep.subr.mxu0 0.0
  %1580 = vmatpush1.msra.mxu0 %v1526
  %1581 = vmatprep.subr.mxu0 0.0
  %1582 = vmatpush1.msra.mxu0 %v1527
  %1583 = vmatprep.subr.mxu0 0.0
  %1584 = vmatpush1.msra.mxu0 %v1528
  %1585 = vmatprep.subr.mxu0 0.0
  %1586 = vmatpush1.msra.mxu0 %v1529
  %1587 = vmatprep.subr.mxu0 0.0
  %1588 = vmatpush1.msra.mxu0 %v1530
  %1589 = vmatprep.subr.mxu0 0.0
  %1590 = vmatpush1.msra.mxu0 %v1531
  %1591 = vmatprep.subr.mxu0 0.0
  %1592 = vmatpush1.msra.mxu0 %v1532
  %1593 = vmatprep.subr.mxu0 0.0
  %1594 = vmatpush1.msra.mxu0 %v1533
  %1595 = vmatprep.subr.mxu0 0.0
  %1596 = vmatpush1.msra.mxu0 %v1534
  %1597 = vmatprep.subr.mxu0 0.0
  %1598 = vmatpush1.msra.mxu0 %v1535
  %1599 = vmatprep.subr.mxu0 0.0
  %1600 = vmatpush1.msra.mxu0 %v1536
  %1601 = vmatprep.mubr.f32.mxu0 %v1502
  %1602 = vmatmul.mubr.f32.gmra.mrb[0].mxu0 %v1501
  %v1603 = vpop.f32.mrb[0].mxu0
  %v1604 = vadd.f32 0.0, %v1603
  %v1605 = vpop.f32.mrb[0].mxu0
  %1606 = vmatprep.mubr.f32.mxu0 %v1504
  %1607 = vmatmul.mubr.f32.gmra.mrb[0].mxu0 %v1503
  %v1608 = vpop.f32.mrb[0].mxu0
  %v1609 = vadd.f32 0.0, %v1608
  %v1610 = vpop.f32.mrb[0].mxu0
  %1611 = vdwg.mxu0
  %v1612 = vsub.f32 %v1367, %v1604
  %v1613 = vsub.f32 %v1372, %v1609
  %v1614 = vmul.f32 %v1612, 1.442695
  %v1615 = vpow.pop %v1614
  %v1616 = vmul.f32 %v1613, 1.442695
  %v1617 = vpow.pop %v1616
  %vm1618 = vcmask 130048
  %v1620 = vsel %vm1618, %v1019, 0
  %1622 = vmatprep.subr.mxu0 0.0
  %1623 = vmatpush1.msra.mxu0 %v1615
  %1624 = vmatprep.subr.mxu0 0.0
  %1625 = vmatpush1.msra.mxu0 %v1617
  %1626 = vmatprep.subr.mxu0 0.0
  %1627 = vmatpush1.msra.mxu0 0.0
  %1628 = vmatprep.subr.mxu0 0.0
  %1629 = vmatpush1.msra.mxu0 0.0
  %1630 = vmatprep.subr.mxu0 0.0
  %1631 = vmatpush1.msra.mxu0 0.0
  %1632 = vmatprep.subr.mxu0 0.0
  %1633 = vmatpush1.msra.mxu0 0.0
  %1634 = vmatprep.subr.mxu0 0.0
  %1635 = vmatpush1.msra.mxu0 0.0
  %1636 = vmatprep.subr.mxu0 0.0
  %1637 = vmatpush1.msra.mxu0 0.0
  %1638 = vmatprep.subr.mxu0 0.0
  %1639 = vmatpush1.msra.mxu0 0.0
  %1640 = vmatprep.subr.mxu0 0.0
  %1641 = vmatpush1.msra.mxu0 0.0
  %1642 = vmatprep.subr.mxu0 0.0
  %1643 = vmatpush1.msra.mxu0 0.0
  %1644 = vmatprep.subr.mxu0 0.0
  %1645 = vmatpush1.msra.mxu0 0.0
  %1646 = vmatprep.subr.mxu0 0.0
  %1647 = vmatpush1.msra.mxu0 0.0
  %1648 = vmatprep.subr.mxu0 0.0
  %1649 = vmatpush1.msra.mxu0 0.0
  %1650 = vmatprep.subr.mxu0 0.0
  %1651 = vmatpush1.msra.mxu0 0.0
  %1652 = vmatprep.subr.mxu0 0.0
  %1653 = vmatpush1.msra.mxu0 0.0
  %1654 = vmatprep.subr.mxu0 0.0
  %1655 = vmatpush1.msra.mxu0 0.0
  %1656 = vmatprep.subr.mxu0 0.0
  %1657 = vmatpush1.msra.mxu0 0.0
  %1658 = vmatprep.subr.mxu0 0.0
  %1659 = vmatpush1.msra.mxu0 0.0
  %1660 = vmatprep.subr.mxu0 0.0
  %1661 = vmatpush1.msra.mxu0 0.0
  %1662 = vmatprep.subr.mxu0 0.0
  %1663 = vmatpush1.msra.mxu0 0.0
  %1664 = vmatprep.subr.mxu0 0.0
  %1665 = vmatpush1.msra.mxu0 0.0
  %1666 = vmatprep.subr.mxu0 0.0
  %1667 = vmatpush1.msra.mxu0 0.0
  %1668 = vmatprep.subr.mxu0 0.0
  %1669 = vmatpush1.msra.mxu0 0.0
  %1670 = vmatprep.subr.mxu0 0.0
  %1671 = vmatpush1.msra.mxu0 0.0
  %1672 = vmatprep.subr.mxu0 0.0
  %1673 = vmatpush1.msra.mxu0 0.0
  %1674 = vmatprep.subr.mxu0 0.0
  %1675 = vmatpush1.msra.mxu0 0.0
  %1676 = vmatprep.subr.mxu0 0.0
  %1677 = vmatpush1.msra.mxu0 0.0
  %1678 = vmatprep.subr.mxu0 0.0
  %1679 = vmatpush1.msra.mxu0 0.0
  %1680 = vmatprep.subr.mxu0 0.0
  %1681 = vmatpush1.msra.mxu0 0.0
  %1682 = vmatprep.subr.mxu0 0.0
  %1683 = vmatpush1.msra.mxu0 0.0
  %1684 = vmatprep.subr.mxu0 0.0
  %1685 = vmatpush1.msra.mxu0 0.0
  %1686 = vmatprep.mubr.f32.mxu0 0.0
  %1687 = vmatmul.mubr.f32.gmra.mrb[0].mxu0 %v1620
  %v1688 = vpop.f32.mrb[0].mxu0
  %v1689 = vadd.f32 0.0, %v1688
  %v1690 = vpop.f32.mrb[0].mxu0
  %1691 = vdwg.mxu0
  %1692 = vmatprep.subr.mxu0 0.0
  %1693 = vmatpush1.msra.mxu0 %v1689
  %1694 = vmatprep.subr.mxu0 0.0
  %1695 = vmatpush1.msra.mxu0 0.0
  %1696 = vmatprep.subr.mxu0 0.0
  %1697 = vmatpush1.msra.mxu0 0.0
  %1698 = vmatprep.subr.mxu0 0.0
  %1699 = vmatpush1.msra.mxu0 0.0
  %1700 = vmatprep.subr.mxu0 0.0
  %1701 = vmatpush1.msra.mxu0 0.0
  %1702 = vmatprep.subr.mxu0 0.0
  %1703 = vmatpush1.msra.mxu0 0.0
  %1704 = vmatprep.subr.mxu0 0.0
  %1705 = vmatpush1.msra.mxu0 0.0
  %1706 = vmatprep.subr.mxu0 0.0
  %1707 = vmatpush1.msra.mxu0 0.0
  %1708 = vmatprep.subr.mxu0 0.0
  %1709 = vmatpush1.msra.mxu0 0.0
  %1710 = vmatprep.subr.mxu0 0.0
  %1711 = vmatpush1.msra.mxu0 0.0
  %1712 = vmatprep.subr.mxu0 0.0
  %1713 = vmatpush1.msra.mxu0 0.0
  %1714 = vmatprep.subr.mxu0 0.0
  %1715 = vmatpush1.msra.mxu0 0.0
  %1716 = vmatprep.subr.mxu0 0.0
  %1717 = vmatpush1.msra.mxu0 0.0
  %1718 = vmatprep.subr.mxu0 0.0
  %1719 = vmatpush1.msra.mxu0 0.0
  %1720 = vmatprep.subr.mxu0 0.0
  %1721 = vmatpush1.msra.mxu0 0.0
  %1722 = vmatprep.subr.mxu0 0.0
  %1723 = vmatpush1.msra.mxu0 0.0
  %1724 = vmatprep.subr.mxu0 0.0
  %1725 = vmatpush1.msra.mxu0 0.0
  %1726 = vmatprep.subr.mxu0 0.0
  %1727 = vmatpush1.msra.mxu0 0.0
  %1728 = vmatprep.subr.mxu0 0.0
  %1729 = vmatpush1.msra.mxu0 0.0
  %1730 = vmatprep.subr.mxu0 0.0
  %1731 = vmatpush1.msra.mxu0 0.0
  %1732 = vmatprep.subr.mxu0 0.0
  %1733 = vmatpush1.msra.mxu0 0.0
  %1734 = vmatprep.subr.mxu0 0.0
  %1735 = vmatpush1.msra.mxu0 0.0
  %1736 = vmatprep.subr.mxu0 0.0
  %1737 = vmatpush1.msra.mxu0 0.0
  %1738 = vmatprep.subr.mxu0 0.0
  %1739 = vmatpush1.msra.mxu0 0.0
  %1740 = vmatprep.subr.mxu0 0.0
  %1741 = vmatpush1.msra.mxu0 0.0
  %1742 = vmatprep.subr.mxu0 0.0
  %1743 = vmatpush1.msra.mxu0 0.0
  %1744 = vmatprep.subr.mxu0 0.0
  %1745 = vmatpush1.msra.mxu0 0.0
  %1746 = vmatprep.subr.mxu0 0.0
  %1747 = vmatpush1.msra.mxu0 0.0
  %1748 = vmatprep.subr.mxu0 0.0
  %1749 = vmatpush1.msra.mxu0 0.0
  %1750 = vmatprep.subr.mxu0 0.0
  %1751 = vmatpush1.msra.mxu0 0.0
  %1752 = vmatprep.subr.mxu0 0.0
  %1753 = vmatpush1.msra.mxu0 0.0
  %1754 = vmatprep.subr.mxu0 0.0
  %1755 = vmatpush1.msra.mxu0 0.0
  %1756 = vmatprep.mubr.f32.mxu0 0.0
  %1757 = vmatmul.mubr.f32.gmra.mrb[0].mxu0 %v1022
  %v1758 = vpop.f32.mrb[0].mxu0
  %v1759 = vadd.f32 1e-16, %v1758
  %v1760 = vpop.f32.mrb[0].mxu0
  %1761 = vmatprep.mubr.f32.mxu0 0.0
  %1762 = vmatmul.mubr.f32.gmra.mrb[0].mxu0 %v1025
  %v1763 = vpop.f32.mrb[0].mxu0
  %v1764 = vadd.f32 1e-16, %v1763
  %v1765 = vpop.f32.mrb[0].mxu0
  %1766 = vdwg.mxu0
  %v1767 = vrcp.pop %v1759
  %v1768 = vmul.f32 %v1615, %v1767
  %v1769 = vrcp.pop %v1764
  %v1770 = vmul.f32 %v1617, %v1769
  %v1771 = vld [vmem:[%s10] sm:$0xff]
  %v1772 = vld [vmem:[%s10 + $0x8] sm:$0xff]
  %v1773 = vld [vmem:[%s10 + $0x10] sm:$0xff]
  %v1774 = vld [vmem:[%s10 + $0x18] sm:$0xff]
  %v1775 = vld [vmem:[%s10 + $0x20] sm:$0xff]
  %v1776 = vld [vmem:[%s10 + $0x28] sm:$0xff]
  %v1777 = vld [vmem:[%s10 + $0x30] sm:$0xff]
  %v1778 = vld [vmem:[%s10 + $0x38] sm:$0xff]
  %v1780 = vsel %vm1387, %v1768, 0
  %v1783 = vsel %vm1387, %v1770, 0
  %1785 = vmatprep.subr.mxu0 %v1772
  %1786 = vmatpush1.msra.mxu0 %v1771
  %1787 = vmatprep.subr.mxu0 %v1774
  %1788 = vmatpush1.msra.mxu0 %v1773
  %1789 = vmatprep.subr.mxu0 %v1776
  %1790 = vmatpush1.msra.mxu0 %v1775
  %1791 = vmatprep.subr.mxu0 %v1778
  %1792 = vmatpush1.msra.mxu0 %v1777
  %1793 = vmatprep.subr.mxu0 0.0
  %1794 = vmatpush1.msra.mxu0 0.0
  %1795 = vmatprep.subr.mxu0 0.0
  %1796 = vmatpush1.msra.mxu0 0.0
  %1797 = vmatprep.subr.mxu0 0.0
  %1798 = vmatpush1.msra.mxu0 0.0
  %1799 = vmatprep.subr.mxu0 0.0
  %1800 = vmatpush1.msra.mxu0 0.0
  %1801 = vmatprep.subr.mxu0 0.0
  %1802 = vmatpush1.msra.mxu0 0.0
  %1803 = vmatprep.subr.mxu0 0.0
  %1804 = vmatpush1.msra.mxu0 0.0
  %1805 = vmatprep.subr.mxu0 0.0
  %1806 = vmatpush1.msra.mxu0 0.0
  %1807 = vmatprep.subr.mxu0 0.0
  %1808 = vmatpush1.msra.mxu0 0.0
  %1809 = vmatprep.subr.mxu0 0.0
  %1810 = vmatpush1.msra.mxu0 0.0
  %1811 = vmatprep.subr.mxu0 0.0
  %1812 = vmatpush1.msra.mxu0 0.0
  %1813 = vmatprep.subr.mxu0 0.0
  %1814 = vmatpush1.msra.mxu0 0.0
  %1815 = vmatprep.subr.mxu0 0.0
  %1816 = vmatpush1.msra.mxu0 0.0
  %1817 = vmatprep.subr.mxu0 0.0
  %1818 = vmatpush1.msra.mxu0 0.0
  %1819 = vmatprep.subr.mxu0 0.0
  %1820 = vmatpush1.msra.mxu0 0.0
  %1821 = vmatprep.subr.mxu0 0.0
  %1822 = vmatpush1.msra.mxu0 0.0
  %1823 = vmatprep.subr.mxu0 0.0
  %1824 = vmatpush1.msra.mxu0 0.0
  %1825 = vmatprep.subr.mxu0 0.0
  %1826 = vmatpush1.msra.mxu0 0.0
  %1827 = vmatprep.subr.mxu0 0.0
  %1828 = vmatpush1.msra.mxu0 0.0
  %1829 = vmatprep.subr.mxu0 0.0
  %1830 = vmatpush1.msra.mxu0 0.0
  %1831 = vmatprep.subr.mxu0 0.0
  %1832 = vmatpush1.msra.mxu0 0.0
  %1833 = vmatprep.subr.mxu0 0.0
  %1834 = vmatpush1.msra.mxu0 0.0
  %1835 = vmatprep.subr.mxu0 0.0
  %1836 = vmatpush1.msra.mxu0 0.0
  %1837 = vmatprep.subr.mxu0 0.0
  %1838 = vmatpush1.msra.mxu0 0.0
  %1839 = vmatprep.subr.mxu0 0.0
  %1840 = vmatpush1.msra.mxu0 0.0
  %1841 = vmatprep.subr.mxu0 0.0
  %1842 = vmatpush1.msra.mxu0 0.0
  %1843 = vmatprep.subr.mxu0 0.0
  %1844 = vmatpush1.msra.mxu0 0.0
  %1845 = vmatprep.subr.mxu0 0.0
  %1846 = vmatpush1.msra.mxu0 0.0
  %1847 = vmatprep.subr.mxu0 0.0
  %1848 = vmatpush1.msra.mxu0 0.0
  %1849 = vmatprep.mubr.f32.mxu0 0.0
  %1850 = vmatmul.mubr.f32.gmra.mrb[0].mxu0 %v1780
  %v1851 = vpop.f32.mrb[0].mxu0
  %v1852 = vadd.f32 0.0, %v1851
  %v1853 = vpop.f32.mrb[0].mxu0
  %v1854 = vadd.f32 0.0, %v1853
  %1855 = vmatprep.mubr.f32.mxu0 0.0
  %1856 = vmatmul.mubr.f32.gmra.mrb[0].mxu0 %v1783
  %v1857 = vpop.f32.mrb[0].mxu0
  %v1858 = vadd.f32 0.0, %v1857
  %v1859 = vpop.f32.mrb[0].mxu0
  %v1860 = vadd.f32 0.0, %v1859
  %1861 = vdwg.mxu0
  %v1862 = vmul.f32 %v1254, %v1852
  %v1863 = vmul.f32 %v1256, %v1854
  %v1864 = vmul.f32 %v1260, %v1858
  %v1865 = vmul.f32 %v1262, %v1860
  %1866 = vmatprep.subr.mxu0 %v1863
  %1867 = vmatpush1.msra.mxu0 %v1862
  %1868 = vmatprep.subr.mxu0 %v1865
  %1869 = vmatpush1.msra.mxu0 %v1864
  %1870 = vmatprep.subr.mxu0 0.0
  %1871 = vmatpush1.msra.mxu0 0.0
  %1872 = vmatprep.subr.mxu0 0.0
  %1873 = vmatpush1.msra.mxu0 0.0
  %1874 = vmatprep.subr.mxu0 0.0
  %1875 = vmatpush1.msra.mxu0 0.0
  %1876 = vmatprep.subr.mxu0 0.0
  %1877 = vmatpush1.msra.mxu0 0.0
  %1878 = vmatprep.subr.mxu0 0.0
  %1879 = vmatpush1.msra.mxu0 0.0
  %1880 = vmatprep.subr.mxu0 0.0
  %1881 = vmatpush1.msra.mxu0 0.0
  %1882 = vmatprep.subr.mxu0 0.0
  %1883 = vmatpush1.msra.mxu0 0.0
  %1884 = vmatprep.subr.mxu0 0.0
  %1885 = vmatpush1.msra.mxu0 0.0
  %1886 = vmatprep.subr.mxu0 0.0
  %1887 = vmatpush1.msra.mxu0 0.0
  %1888 = vmatprep.subr.mxu0 0.0
  %1889 = vmatpush1.msra.mxu0 0.0
  %1890 = vmatprep.subr.mxu0 0.0
  %1891 = vmatpush1.msra.mxu0 0.0
  %1892 = vmatprep.subr.mxu0 0.0
  %1893 = vmatpush1.msra.mxu0 0.0
  %1894 = vmatprep.subr.mxu0 0.0
  %1895 = vmatpush1.msra.mxu0 0.0
  %1896 = vmatprep.subr.mxu0 0.0
  %1897 = vmatpush1.msra.mxu0 0.0
  %1898 = vmatprep.subr.mxu0 0.0
  %1899 = vmatpush1.msra.mxu0 0.0
  %1900 = vmatprep.subr.mxu0 0.0
  %1901 = vmatpush1.msra.mxu0 0.0
  %1902 = vmatprep.subr.mxu0 0.0
  %1903 = vmatpush1.msra.mxu0 0.0
  %1904 = vmatprep.subr.mxu0 0.0
  %1905 = vmatpush1.msra.mxu0 0.0
  %1906 = vmatprep.subr.mxu0 0.0
  %1907 = vmatpush1.msra.mxu0 0.0
  %1908 = vmatprep.subr.mxu0 0.0
  %1909 = vmatpush1.msra.mxu0 0.0
  %1910 = vmatprep.subr.mxu0 0.0
  %1911 = vmatpush1.msra.mxu0 0.0
  %1912 = vmatprep.subr.mxu0 0.0
  %1913 = vmatpush1.msra.mxu0 0.0
  %1914 = vmatprep.subr.mxu0 0.0
  %1915 = vmatpush1.msra.mxu0 0.0
  %1916 = vmatprep.subr.mxu0 0.0
  %1917 = vmatpush1.msra.mxu0 0.0
  %1918 = vmatprep.subr.mxu0 0.0
  %1919 = vmatpush1.msra.mxu0 0.0
  %1920 = vmatprep.subr.mxu0 0.0
  %1921 = vmatpush1.msra.mxu0 0.0
  %1922 = vmatprep.subr.mxu0 0.0
  %1923 = vmatpush1.msra.mxu0 0.0
  %1924 = vmatprep.subr.mxu0 0.0
  %1925 = vmatpush1.msra.mxu0 0.0
  %1926 = vmatprep.subr.mxu0 0.0
  %1927 = vmatpush1.msra.mxu0 0.0
  %1928 = vmatprep.subr.mxu0 0.0
  %1929 = vmatpush1.msra.mxu0 0.0
  %1930 = vmatprep.mubr.f32.mxu0 0.0
  %1931 = vmatmul.mubr.f32.gmra.mrb[0].mxu0 %v1620
  %v1932 = vpop.f32.mrb[0].mxu0
  %v1933 = vadd.f32 0.0, %v1932
  %v1934 = vpop.f32.mrb[0].mxu0
  %v1935 = vadd.f32 0.0, %v1934
  %1936 = vdwg.mxu0
  %v1937 = vld [vmem:[%s16] sm:$0xff]
  %v1938 = vld [vmem:[%s16 + $0x8] sm:$0xff]
  %v1939 = vld [vmem:[%s16 + $0x10] sm:$0xff]
  %v1940 = vld [vmem:[%s16 + $0x18] sm:$0xff]
  %v1941 = vld [vmem:[%s16 + $0x20] sm:$0xff]
  %v1942 = vld [vmem:[%s16 + $0x28] sm:$0xff]
  %v1943 = vld [vmem:[%s16 + $0x30] sm:$0xff]
  %v1944 = vld [vmem:[%s16 + $0x38] sm:$0xff]
  %v1945 = vld [vmem:[%s16 + $0x40] sm:$0xff]
  %v1946 = vld [vmem:[%s16 + $0x48] sm:$0xff]
  %v1947 = vld [vmem:[%s16 + $0x50] sm:$0xff]
  %v1948 = vld [vmem:[%s16 + $0x58] sm:$0xff]
  %v1949 = vld [vmem:[%s16 + $0x60] sm:$0xff]
  %v1950 = vld [vmem:[%s16 + $0x68] sm:$0xff]
  %v1951 = vld [vmem:[%s16 + $0x70] sm:$0xff]
  %v1952 = vld [vmem:[%s16 + $0x78] sm:$0xff]
  %v1953 = vld [vmem:[%s16 + $0x80] sm:$0xff]
  %v1954 = vld [vmem:[%s16 + $0x88] sm:$0xff]
  %v1955 = vld [vmem:[%s16 + $0x90] sm:$0xff]
  %v1956 = vld [vmem:[%s16 + $0x98] sm:$0xff]
  %v1957 = vld [vmem:[%s16 + $0xa0] sm:$0xff]
  %v1958 = vld [vmem:[%s16 + $0xa8] sm:$0xff]
  %v1959 = vld [vmem:[%s16 + $0xb0] sm:$0xff]
  %v1960 = vld [vmem:[%s16 + $0xb8] sm:$0xff]
  %v1961 = vld [vmem:[%s16 + $0xc0] sm:$0xff]
  %v1962 = vld [vmem:[%s16 + $0xc8] sm:$0xff]
  %v1963 = vld [vmem:[%s16 + $0xd0] sm:$0xff]
  %v1964 = vld [vmem:[%s16 + $0xd8] sm:$0xff]
  %v1965 = vld [vmem:[%s16 + $0xe0] sm:$0xff]
  %v1966 = vld [vmem:[%s16 + $0xe8] sm:$0xff]
  %v1967 = vld [vmem:[%s16 + $0xf0] sm:$0xff]
  %v1968 = vld [vmem:[%s16 + $0xf8] sm:$0xff]
  %v1969 = vld [vmem:[%s16 + $0x100] sm:$0xff]
  %v1970 = vld [vmem:[%s16 + $0x108] sm:$0xff]
  %v1971 = vld [vmem:[%s16 + $0x110] sm:$0xff]
  %v1972 = vld [vmem:[%s16 + $0x118] sm:$0xff]
  %v1973 = vld [vmem:[%s16 + $0x120] sm:$0xff]
  %v1974 = vld [vmem:[%s16 + $0x128] sm:$0xff]
  %v1975 = vld [vmem:[%s16 + $0x130] sm:$0xff]
  %v1976 = vld [vmem:[%s16 + $0x138] sm:$0xff]
  %v1977 = vld [vmem:[%s16 + $0x140] sm:$0xff]
  %v1978 = vld [vmem:[%s16 + $0x148] sm:$0xff]
  %v1979 = vld [vmem:[%s16 + $0x150] sm:$0xff]
  %v1980 = vld [vmem:[%s16 + $0x158] sm:$0xff]
  %v1981 = vld [vmem:[%s16 + $0x160] sm:$0xff]
  %v1982 = vld [vmem:[%s16 + $0x168] sm:$0xff]
  %v1983 = vld [vmem:[%s16 + $0x170] sm:$0xff]
  %v1984 = vld [vmem:[%s16 + $0x178] sm:$0xff]
  %v1985 = vld [vmem:[%s16 + $0x180] sm:$0xff]
  %v1986 = vld [vmem:[%s16 + $0x188] sm:$0xff]
  %v1987 = vld [vmem:[%s16 + $0x190] sm:$0xff]
  %v1988 = vld [vmem:[%s16 + $0x198] sm:$0xff]
  %v1989 = vld [vmem:[%s16 + $0x1a0] sm:$0xff]
  %v1990 = vld [vmem:[%s16 + $0x1a8] sm:$0xff]
  %v1991 = vld [vmem:[%s16 + $0x1b0] sm:$0xff]
  %v1992 = vld [vmem:[%s16 + $0x1b8] sm:$0xff]
  %v1993 = vld [vmem:[%s16 + $0x1c0] sm:$0xff]
  %v1994 = vld [vmem:[%s16 + $0x1c8] sm:$0xff]
  %v1995 = vld [vmem:[%s16 + $0x1d0] sm:$0xff]
  %v1996 = vld [vmem:[%s16 + $0x1d8] sm:$0xff]
  %v1997 = vld [vmem:[%s16 + $0x1e0] sm:$0xff]
  %v1998 = vld [vmem:[%s16 + $0x1e8] sm:$0xff]
  %v1999 = vld [vmem:[%s16 + $0x1f0] sm:$0xff]
  %v2000 = vld [vmem:[%s16 + $0x1f8] sm:$0xff]
  %2001 = vmatprep.subr.mxu0 %v1938
  %2002 = vmatpush1.msra.mxu0 %v1937
  %2003 = vmatprep.subr.mxu0 %v1940
  %2004 = vmatpush1.msra.mxu0 %v1939
  %2005 = vmatprep.subr.mxu0 %v1942
  %2006 = vmatpush1.msra.mxu0 %v1941
  %2007 = vmatprep.subr.mxu0 %v1944
  %2008 = vmatpush1.msra.mxu0 %v1943
  %2009 = vmatprep.subr.mxu0 %v1946
  %2010 = vmatpush1.msra.mxu0 %v1945
  %2011 = vmatprep.subr.mxu0 %v1948
  %2012 = vmatpush1.msra.mxu0 %v1947
  %2013 = vmatprep.subr.mxu0 %v1950
  %2014 = vmatpush1.msra.mxu0 %v1949
  %2015 = vmatprep.subr.mxu0 %v1952
  %2016 = vmatpush1.msra.mxu0 %v1951
  %2017 = vmatprep.subr.mxu0 %v1954
  %2018 = vmatpush1.msra.mxu0 %v1953
  %2019 = vmatprep.subr.mxu0 %v1956
  %2020 = vmatpush1.msra.mxu0 %v1955
  %2021 = vmatprep.subr.mxu0 %v1958
  %2022 = vmatpush1.msra.mxu0 %v1957
  %2023 = vmatprep.subr.mxu0 %v1960
  %2024 = vmatpush1.msra.mxu0 %v1959
  %2025 = vmatprep.subr.mxu0 %v1962
  %2026 = vmatpush1.msra.mxu0 %v1961
  %2027 = vmatprep.subr.mxu0 %v1964
  %2028 = vmatpush1.msra.mxu0 %v1963
  %2029 = vmatprep.subr.mxu0 %v1966
  %2030 = vmatpush1.msra.mxu0 %v1965
  %2031 = vmatprep.subr.mxu0 %v1968
  %2032 = vmatpush1.msra.mxu0 %v1967
  %2033 = vmatprep.subr.mxu0 %v1970
  %2034 = vmatpush1.msra.mxu0 %v1969
  %2035 = vmatprep.subr.mxu0 %v1972
  %2036 = vmatpush1.msra.mxu0 %v1971
  %2037 = vmatprep.subr.mxu0 %v1974
  %2038 = vmatpush1.msra.mxu0 %v1973
  %2039 = vmatprep.subr.mxu0 %v1976
  %2040 = vmatpush1.msra.mxu0 %v1975
  %2041 = vmatprep.subr.mxu0 %v1978
  %2042 = vmatpush1.msra.mxu0 %v1977
  %2043 = vmatprep.subr.mxu0 %v1980
  %2044 = vmatpush1.msra.mxu0 %v1979
  %2045 = vmatprep.subr.mxu0 %v1982
  %2046 = vmatpush1.msra.mxu0 %v1981
  %2047 = vmatprep.subr.mxu0 %v1984
  %2048 = vmatpush1.msra.mxu0 %v1983
  %2049 = vmatprep.subr.mxu0 %v1986
  %2050 = vmatpush1.msra.mxu0 %v1985
  %2051 = vmatprep.subr.mxu0 %v1988
  %2052 = vmatpush1.msra.mxu0 %v1987
  %2053 = vmatprep.subr.mxu0 %v1990
  %2054 = vmatpush1.msra.mxu0 %v1989
  %2055 = vmatprep.subr.mxu0 %v1992
  %2056 = vmatpush1.msra.mxu0 %v1991
  %2057 = vmatprep.subr.mxu0 %v1994
  %2058 = vmatpush1.msra.mxu0 %v1993
  %2059 = vmatprep.subr.mxu0 %v1996
  %2060 = vmatpush1.msra.mxu0 %v1995
  %2061 = vmatprep.subr.mxu0 %v1998
  %2062 = vmatpush1.msra.mxu0 %v1997
  %2063 = vmatprep.subr.mxu0 %v2000
  %2064 = vmatpush1.msra.mxu0 %v1999
  %2065 = vmatprep.mubr.f32.mxu0 %v1935
  %2066 = vmatmul.mubr.f32.gmra.mrb[0].mxu0 %v1933
  %v2067 = vpop.f32.mrb[0].mxu0
  %v2068 = vadd.f32 0.0, %v2067
  %v2069 = vpop.f32.mrb[0].mxu0
  %v2070 = vadd.f32 0.0, %v2069
  %2071 = vdwg.mxu0
  %v2072 = vadd.f32 %v126, %v2068
  %v2073 = vadd.f32 %v127, %v2070
  %v2074 = vld [vmem:[%s13] sm:$0x3]
  %v2075 = vmul.f32 %v2072, %v2072
  %v2076 = vmul.f32 %v2073, %v2073
  %2077 = vmatprep.subr.mxu0 %v63
  %2078 = vmatpush1.msra.mxu0 %v62
  %2079 = vmatprep.subr.mxu0 %v65
  %2080 = vmatpush1.msra.mxu0 %v64
  %2081 = vmatprep.subr.mxu0 %v67
  %2082 = vmatpush1.msra.mxu0 %v66
  %2083 = vmatprep.subr.mxu0 %v69
  %2084 = vmatpush1.msra.mxu0 %v68
  %2085 = vmatprep.subr.mxu0 %v71
  %2086 = vmatpush1.msra.mxu0 %v70
  %2087 = vmatprep.subr.mxu0 %v73
  %2088 = vmatpush1.msra.mxu0 %v72
  %2089 = vmatprep.subr.mxu0 %v75
  %2090 = vmatpush1.msra.mxu0 %v74
  %2091 = vmatprep.subr.mxu0 %v77
  %2092 = vmatpush1.msra.mxu0 %v76
  %2093 = vmatprep.subr.mxu0 %v79
  %2094 = vmatpush1.msra.mxu0 %v78
  %2095 = vmatprep.subr.mxu0 %v81
  %2096 = vmatpush1.msra.mxu0 %v80
  %2097 = vmatprep.subr.mxu0 %v83
  %2098 = vmatpush1.msra.mxu0 %v82
  %2099 = vmatprep.subr.mxu0 %v85
  %2100 = vmatpush1.msra.mxu0 %v84
  %2101 = vmatprep.subr.mxu0 %v87
  %2102 = vmatpush1.msra.mxu0 %v86
  %2103 = vmatprep.subr.mxu0 %v89
  %2104 = vmatpush1.msra.mxu0 %v88
  %2105 = vmatprep.subr.mxu0 %v91
  %2106 = vmatpush1.msra.mxu0 %v90
  %2107 = vmatprep.subr.mxu0 %v93
  %2108 = vmatpush1.msra.mxu0 %v92
  %2109 = vmatprep.subr.mxu0 %v95
  %2110 = vmatpush1.msra.mxu0 %v94
  %2111 = vmatprep.subr.mxu0 %v97
  %2112 = vmatpush1.msra.mxu0 %v96
  %2113 = vmatprep.subr.mxu0 %v99
  %2114 = vmatpush1.msra.mxu0 %v98
  %2115 = vmatprep.subr.mxu0 %v101
  %2116 = vmatpush1.msra.mxu0 %v100
  %2117 = vmatprep.subr.mxu0 %v103
  %2118 = vmatpush1.msra.mxu0 %v102
  %2119 = vmatprep.subr.mxu0 %v105
  %2120 = vmatpush1.msra.mxu0 %v104
  %2121 = vmatprep.subr.mxu0 %v107
  %2122 = vmatpush1.msra.mxu0 %v106
  %2123 = vmatprep.subr.mxu0 %v109
  %2124 = vmatpush1.msra.mxu0 %v108
  %2125 = vmatprep.subr.mxu0 %v111
  %2126 = vmatpush1.msra.mxu0 %v110
  %2127 = vmatprep.subr.mxu0 %v113
  %2128 = vmatpush1.msra.mxu0 %v112
  %2129 = vmatprep.subr.mxu0 %v115
  %2130 = vmatpush1.msra.mxu0 %v114
  %2131 = vmatprep.subr.mxu0 %v117
  %2132 = vmatpush1.msra.mxu0 %v116
  %2133 = vmatprep.subr.mxu0 %v119
  %2134 = vmatpush1.msra.mxu0 %v118
  %2135 = vmatprep.subr.mxu0 %v121
  %2136 = vmatpush1.msra.mxu0 %v120
  %2137 = vmatprep.subr.mxu0 %v123
  %2138 = vmatpush1.msra.mxu0 %v122
  %2139 = vmatprep.subr.mxu0 %v125
  %2140 = vmatpush1.msra.mxu0 %v124
  %2141 = vmatprep.mubr.f32.mxu0 %v2076
  %2142 = vmatmul.mubr.f32.gmra.mrb[0].mxu0 %v2075
  %v2143 = vpop.f32.mrb[0].mxu0
  %v2144 = vadd.f32 1e-06, %v2143
  %v2145 = vpop.f32.mrb[0].mxu0
  %v2146 = vadd.f32 1e-06, %v2145
  %2147 = vdwg.mxu0
  %v2148 = vrsqrt.pop %v2144
  %v2149 = vrsqrt.pop %v2146
  %v2150 = vmul.f32 %v2072, %v2148
  %v2151 = vmul.f32 %v2073, %v2149
  %v2153 = vlaneseq
  %v2154 = vshrl.u32 %v2153, 7
  %v2155 = vsub.s32 0, %v2154
  %v2156 = vrot.slane %v2074, %v2155
  %v2157 = vlaneseq
  %v2158 = vshrl.u32 %v2157, 7
  %v2159 = vsub.s32 1, %v2158
  %v2160 = vrot.slane %v2074, %v2159
  %v2163 = vmul.f32 %v2150, %v2156
  %v2164 = vmul.f32 %v2151, %v2160
  %v2165 = vld [vmem:[%s17] sm:$0xff]
  %v2166 = vld [vmem:[%s17 + $0x8] sm:$0xff]
  %v2167 = vld [vmem:[%s17 + $0x10] sm:$0xff]
  %v2168 = vld [vmem:[%s17 + $0x18] sm:$0xff]
  %v2169 = vld [vmem:[%s17 + $0x20] sm:$0xff]
  %v2170 = vld [vmem:[%s17 + $0x28] sm:$0xff]
  %v2171 = vld [vmem:[%s17 + $0x30] sm:$0xff]
  %v2172 = vld [vmem:[%s17 + $0x38] sm:$0xff]
  %v2173 = vld [vmem:[%s17 + $0x40] sm:$0xff]
  %v2174 = vld [vmem:[%s17 + $0x48] sm:$0xff]
  %v2175 = vld [vmem:[%s17 + $0x50] sm:$0xff]
  %v2176 = vld [vmem:[%s17 + $0x58] sm:$0xff]
  %v2177 = vld [vmem:[%s17 + $0x60] sm:$0xff]
  %v2178 = vld [vmem:[%s17 + $0x68] sm:$0xff]
  %v2179 = vld [vmem:[%s17 + $0x70] sm:$0xff]
  %v2180 = vld [vmem:[%s17 + $0x78] sm:$0xff]
  %v2181 = vld [vmem:[%s17 + $0x80] sm:$0xff]
  %v2182 = vld [vmem:[%s17 + $0x88] sm:$0xff]
  %v2183 = vld [vmem:[%s17 + $0x90] sm:$0xff]
  %v2184 = vld [vmem:[%s17 + $0x98] sm:$0xff]
  %v2185 = vld [vmem:[%s17 + $0xa0] sm:$0xff]
  %v2186 = vld [vmem:[%s17 + $0xa8] sm:$0xff]
  %v2187 = vld [vmem:[%s17 + $0xb0] sm:$0xff]
  %v2188 = vld [vmem:[%s17 + $0xb8] sm:$0xff]
  %v2189 = vld [vmem:[%s17 + $0xc0] sm:$0xff]
  %v2190 = vld [vmem:[%s17 + $0xc8] sm:$0xff]
  %v2191 = vld [vmem:[%s17 + $0xd0] sm:$0xff]
  %v2192 = vld [vmem:[%s17 + $0xd8] sm:$0xff]
  %v2193 = vld [vmem:[%s17 + $0xe0] sm:$0xff]
  %v2194 = vld [vmem:[%s17 + $0xe8] sm:$0xff]
  %v2195 = vld [vmem:[%s17 + $0xf0] sm:$0xff]
  %v2196 = vld [vmem:[%s17 + $0xf8] sm:$0xff]
  %v2197 = vld [vmem:[%s17 + $0x100] sm:$0xff]
  %v2198 = vld [vmem:[%s17 + $0x108] sm:$0xff]
  %v2199 = vld [vmem:[%s17 + $0x110] sm:$0xff]
  %v2200 = vld [vmem:[%s17 + $0x118] sm:$0xff]
  %v2201 = vld [vmem:[%s17 + $0x120] sm:$0xff]
  %v2202 = vld [vmem:[%s17 + $0x128] sm:$0xff]
  %v2203 = vld [vmem:[%s17 + $0x130] sm:$0xff]
  %v2204 = vld [vmem:[%s17 + $0x138] sm:$0xff]
  %v2205 = vld [vmem:[%s17 + $0x140] sm:$0xff]
  %v2206 = vld [vmem:[%s17 + $0x148] sm:$0xff]
  %v2207 = vld [vmem:[%s17 + $0x150] sm:$0xff]
  %v2208 = vld [vmem:[%s17 + $0x158] sm:$0xff]
  %v2209 = vld [vmem:[%s17 + $0x160] sm:$0xff]
  %v2210 = vld [vmem:[%s17 + $0x168] sm:$0xff]
  %v2211 = vld [vmem:[%s17 + $0x170] sm:$0xff]
  %v2212 = vld [vmem:[%s17 + $0x178] sm:$0xff]
  %v2213 = vld [vmem:[%s17 + $0x180] sm:$0xff]
  %v2214 = vld [vmem:[%s17 + $0x188] sm:$0xff]
  %v2215 = vld [vmem:[%s17 + $0x190] sm:$0xff]
  %v2216 = vld [vmem:[%s17 + $0x198] sm:$0xff]
  %v2217 = vld [vmem:[%s17 + $0x1a0] sm:$0xff]
  %v2218 = vld [vmem:[%s17 + $0x1a8] sm:$0xff]
  %v2219 = vld [vmem:[%s17 + $0x1b0] sm:$0xff]
  %v2220 = vld [vmem:[%s17 + $0x1b8] sm:$0xff]
  %v2221 = vld [vmem:[%s17 + $0x1c0] sm:$0xff]
  %v2222 = vld [vmem:[%s17 + $0x1c8] sm:$0xff]
  %v2223 = vld [vmem:[%s17 + $0x1d0] sm:$0xff]
  %v2224 = vld [vmem:[%s17 + $0x1d8] sm:$0xff]
  %v2225 = vld [vmem:[%s17 + $0x1e0] sm:$0xff]
  %v2226 = vld [vmem:[%s17 + $0x1e8] sm:$0xff]
  %v2227 = vld [vmem:[%s17 + $0x1f0] sm:$0xff]
  %v2228 = vld [vmem:[%s17 + $0x1f8] sm:$0xff]
  %v2229 = vld [vmem:[%s17 + $0x200] sm:$0xff]
  %v2230 = vld [vmem:[%s17 + $0x208] sm:$0xff]
  %v2231 = vld [vmem:[%s17 + $0x210] sm:$0xff]
  %v2232 = vld [vmem:[%s17 + $0x218] sm:$0xff]
  %v2233 = vld [vmem:[%s17 + $0x220] sm:$0xff]
  %v2234 = vld [vmem:[%s17 + $0x228] sm:$0xff]
  %v2235 = vld [vmem:[%s17 + $0x230] sm:$0xff]
  %v2236 = vld [vmem:[%s17 + $0x238] sm:$0xff]
  %v2237 = vld [vmem:[%s17 + $0x240] sm:$0xff]
  %v2238 = vld [vmem:[%s17 + $0x248] sm:$0xff]
  %v2239 = vld [vmem:[%s17 + $0x250] sm:$0xff]
  %v2240 = vld [vmem:[%s17 + $0x258] sm:$0xff]
  %v2241 = vld [vmem:[%s17 + $0x260] sm:$0xff]
  %v2242 = vld [vmem:[%s17 + $0x268] sm:$0xff]
  %v2243 = vld [vmem:[%s17 + $0x270] sm:$0xff]
  %v2244 = vld [vmem:[%s17 + $0x278] sm:$0xff]
  %v2245 = vld [vmem:[%s17 + $0x280] sm:$0xff]
  %v2246 = vld [vmem:[%s17 + $0x288] sm:$0xff]
  %v2247 = vld [vmem:[%s17 + $0x290] sm:$0xff]
  %v2248 = vld [vmem:[%s17 + $0x298] sm:$0xff]
  %v2249 = vld [vmem:[%s17 + $0x2a0] sm:$0xff]
  %v2250 = vld [vmem:[%s17 + $0x2a8] sm:$0xff]
  %v2251 = vld [vmem:[%s17 + $0x2b0] sm:$0xff]
  %v2252 = vld [vmem:[%s17 + $0x2b8] sm:$0xff]
  %v2253 = vld [vmem:[%s17 + $0x2c0] sm:$0xff]
  %v2254 = vld [vmem:[%s17 + $0x2c8] sm:$0xff]
  %v2255 = vld [vmem:[%s17 + $0x2d0] sm:$0xff]
  %v2256 = vld [vmem:[%s17 + $0x2d8] sm:$0xff]
  %v2257 = vld [vmem:[%s17 + $0x2e0] sm:$0xff]
  %v2258 = vld [vmem:[%s17 + $0x2e8] sm:$0xff]
  %v2259 = vld [vmem:[%s17 + $0x2f0] sm:$0xff]
  %v2260 = vld [vmem:[%s17 + $0x2f8] sm:$0xff]
  %v2261 = vld [vmem:[%s17 + $0x300] sm:$0xff]
  %v2262 = vld [vmem:[%s17 + $0x308] sm:$0xff]
  %v2263 = vld [vmem:[%s17 + $0x310] sm:$0xff]
  %v2264 = vld [vmem:[%s17 + $0x318] sm:$0xff]
  %v2265 = vld [vmem:[%s17 + $0x320] sm:$0xff]
  %v2266 = vld [vmem:[%s17 + $0x328] sm:$0xff]
  %v2267 = vld [vmem:[%s17 + $0x330] sm:$0xff]
  %v2268 = vld [vmem:[%s17 + $0x338] sm:$0xff]
  %v2269 = vld [vmem:[%s17 + $0x340] sm:$0xff]
  %v2270 = vld [vmem:[%s17 + $0x348] sm:$0xff]
  %v2271 = vld [vmem:[%s17 + $0x350] sm:$0xff]
  %v2272 = vld [vmem:[%s17 + $0x358] sm:$0xff]
  %v2273 = vld [vmem:[%s17 + $0x360] sm:$0xff]
  %v2274 = vld [vmem:[%s17 + $0x368] sm:$0xff]
  %v2275 = vld [vmem:[%s17 + $0x370] sm:$0xff]
  %v2276 = vld [vmem:[%s17 + $0x378] sm:$0xff]
  %v2277 = vld [vmem:[%s17 + $0x380] sm:$0xff]
  %v2278 = vld [vmem:[%s17 + $0x388] sm:$0xff]
  %v2279 = vld [vmem:[%s17 + $0x390] sm:$0xff]
  %v2280 = vld [vmem:[%s17 + $0x398] sm:$0xff]
  %v2281 = vld [vmem:[%s17 + $0x3a0] sm:$0xff]
  %v2282 = vld [vmem:[%s17 + $0x3a8] sm:$0xff]
  %v2283 = vld [vmem:[%s17 + $0x3b0] sm:$0xff]
  %v2284 = vld [vmem:[%s17 + $0x3b8] sm:$0xff]
  %v2285 = vld [vmem:[%s17 + $0x3c0] sm:$0xff]
  %v2286 = vld [vmem:[%s17 + $0x3c8] sm:$0xff]
  %v2287 = vld [vmem:[%s17 + $0x3d0] sm:$0xff]
  %v2288 = vld [vmem:[%s17 + $0x3d8] sm:$0xff]
  %v2289 = vld [vmem:[%s17 + $0x3e0] sm:$0xff]
  %v2290 = vld [vmem:[%s17 + $0x3e8] sm:$0xff]
  %v2291 = vld [vmem:[%s17 + $0x3f0] sm:$0xff]
  %v2292 = vld [vmem:[%s17 + $0x3f8] sm:$0xff]
  %v2293 = vld [vmem:[%s17 + $0x400] sm:$0xff]
  %v2294 = vld [vmem:[%s17 + $0x408] sm:$0xff]
  %v2295 = vld [vmem:[%s17 + $0x410] sm:$0xff]
  %v2296 = vld [vmem:[%s17 + $0x418] sm:$0xff]
  %v2297 = vld [vmem:[%s17 + $0x420] sm:$0xff]
  %v2298 = vld [vmem:[%s17 + $0x428] sm:$0xff]
  %v2299 = vld [vmem:[%s17 + $0x430] sm:$0xff]
  %v2300 = vld [vmem:[%s17 + $0x438] sm:$0xff]
  %v2301 = vld [vmem:[%s17 + $0x440] sm:$0xff]
  %v2302 = vld [vmem:[%s17 + $0x448] sm:$0xff]
  %v2303 = vld [vmem:[%s17 + $0x450] sm:$0xff]
  %v2304 = vld [vmem:[%s17 + $0x458] sm:$0xff]
  %v2305 = vld [vmem:[%s17 + $0x460] sm:$0xff]
  %v2306 = vld [vmem:[%s17 + $0x468] sm:$0xff]
  %v2307 = vld [vmem:[%s17 + $0x470] sm:$0xff]
  %v2308 = vld [vmem:[%s17 + $0x478] sm:$0xff]
  %v2309 = vld [vmem:[%s17 + $0x480] sm:$0xff]
  %v2310 = vld [vmem:[%s17 + $0x488] sm:$0xff]
  %v2311 = vld [vmem:[%s17 + $0x490] sm:$0xff]
  %v2312 = vld [vmem:[%s17 + $0x498] sm:$0xff]
  %v2313 = vld [vmem:[%s17 + $0x4a0] sm:$0xff]
  %v2314 = vld [vmem:[%s17 + $0x4a8] sm:$0xff]
  %v2315 = vld [vmem:[%s17 + $0x4b0] sm:$0xff]
  %v2316 = vld [vmem:[%s17 + $0x4b8] sm:$0xff]
  %v2317 = vld [vmem:[%s17 + $0x4c0] sm:$0xff]
  %v2318 = vld [vmem:[%s17 + $0x4c8] sm:$0xff]
  %v2319 = vld [vmem:[%s17 + $0x4d0] sm:$0xff]
  %v2320 = vld [vmem:[%s17 + $0x4d8] sm:$0xff]
  %v2321 = vld [vmem:[%s17 + $0x4e0] sm:$0xff]
  %v2322 = vld [vmem:[%s17 + $0x4e8] sm:$0xff]
  %v2323 = vld [vmem:[%s17 + $0x4f0] sm:$0xff]
  %v2324 = vld [vmem:[%s17 + $0x4f8] sm:$0xff]
  %v2325 = vld [vmem:[%s17 + $0x500] sm:$0xff]
  %v2326 = vld [vmem:[%s17 + $0x508] sm:$0xff]
  %v2327 = vld [vmem:[%s17 + $0x510] sm:$0xff]
  %v2328 = vld [vmem:[%s17 + $0x518] sm:$0xff]
  %v2329 = vld [vmem:[%s17 + $0x520] sm:$0xff]
  %v2330 = vld [vmem:[%s17 + $0x528] sm:$0xff]
  %v2331 = vld [vmem:[%s17 + $0x530] sm:$0xff]
  %v2332 = vld [vmem:[%s17 + $0x538] sm:$0xff]
  %v2333 = vld [vmem:[%s17 + $0x540] sm:$0xff]
  %v2334 = vld [vmem:[%s17 + $0x548] sm:$0xff]
  %v2335 = vld [vmem:[%s17 + $0x550] sm:$0xff]
  %v2336 = vld [vmem:[%s17 + $0x558] sm:$0xff]
  %v2337 = vld [vmem:[%s17 + $0x560] sm:$0xff]
  %v2338 = vld [vmem:[%s17 + $0x568] sm:$0xff]
  %v2339 = vld [vmem:[%s17 + $0x570] sm:$0xff]
  %v2340 = vld [vmem:[%s17 + $0x578] sm:$0xff]
  %v2341 = vld [vmem:[%s17 + $0x580] sm:$0xff]
  %v2342 = vld [vmem:[%s17 + $0x588] sm:$0xff]
  %v2343 = vld [vmem:[%s17 + $0x590] sm:$0xff]
  %v2344 = vld [vmem:[%s17 + $0x598] sm:$0xff]
  %v2345 = vld [vmem:[%s17 + $0x5a0] sm:$0xff]
  %v2346 = vld [vmem:[%s17 + $0x5a8] sm:$0xff]
  %v2347 = vld [vmem:[%s17 + $0x5b0] sm:$0xff]
  %v2348 = vld [vmem:[%s17 + $0x5b8] sm:$0xff]
  %v2349 = vld [vmem:[%s17 + $0x5c0] sm:$0xff]
  %v2350 = vld [vmem:[%s17 + $0x5c8] sm:$0xff]
  %v2351 = vld [vmem:[%s17 + $0x5d0] sm:$0xff]
  %v2352 = vld [vmem:[%s17 + $0x5d8] sm:$0xff]
  %v2353 = vld [vmem:[%s17 + $0x5e0] sm:$0xff]
  %v2354 = vld [vmem:[%s17 + $0x5e8] sm:$0xff]
  %v2355 = vld [vmem:[%s17 + $0x5f0] sm:$0xff]
  %v2356 = vld [vmem:[%s17 + $0x5f8] sm:$0xff]
  %v2357 = vld [vmem:[%s17 + $0x600] sm:$0xff]
  %v2358 = vld [vmem:[%s17 + $0x608] sm:$0xff]
  %v2359 = vld [vmem:[%s17 + $0x610] sm:$0xff]
  %v2360 = vld [vmem:[%s17 + $0x618] sm:$0xff]
  %v2361 = vld [vmem:[%s17 + $0x620] sm:$0xff]
  %v2362 = vld [vmem:[%s17 + $0x628] sm:$0xff]
  %v2363 = vld [vmem:[%s17 + $0x630] sm:$0xff]
  %v2364 = vld [vmem:[%s17 + $0x638] sm:$0xff]
  %v2365 = vld [vmem:[%s17 + $0x640] sm:$0xff]
  %v2366 = vld [vmem:[%s17 + $0x648] sm:$0xff]
  %v2367 = vld [vmem:[%s17 + $0x650] sm:$0xff]
  %v2368 = vld [vmem:[%s17 + $0x658] sm:$0xff]
  %v2369 = vld [vmem:[%s17 + $0x660] sm:$0xff]
  %v2370 = vld [vmem:[%s17 + $0x668] sm:$0xff]
  %v2371 = vld [vmem:[%s17 + $0x670] sm:$0xff]
  %v2372 = vld [vmem:[%s17 + $0x678] sm:$0xff]
  %v2373 = vld [vmem:[%s17 + $0x680] sm:$0xff]
  %v2374 = vld [vmem:[%s17 + $0x688] sm:$0xff]
  %v2375 = vld [vmem:[%s17 + $0x690] sm:$0xff]
  %v2376 = vld [vmem:[%s17 + $0x698] sm:$0xff]
  %v2377 = vld [vmem:[%s17 + $0x6a0] sm:$0xff]
  %v2378 = vld [vmem:[%s17 + $0x6a8] sm:$0xff]
  %v2379 = vld [vmem:[%s17 + $0x6b0] sm:$0xff]
  %v2380 = vld [vmem:[%s17 + $0x6b8] sm:$0xff]
  %v2381 = vld [vmem:[%s17 + $0x6c0] sm:$0xff]
  %v2382 = vld [vmem:[%s17 + $0x6c8] sm:$0xff]
  %v2383 = vld [vmem:[%s17 + $0x6d0] sm:$0xff]
  %v2384 = vld [vmem:[%s17 + $0x6d8] sm:$0xff]
  %v2385 = vld [vmem:[%s17 + $0x6e0] sm:$0xff]
  %v2386 = vld [vmem:[%s17 + $0x6e8] sm:$0xff]
  %v2387 = vld [vmem:[%s17 + $0x6f0] sm:$0xff]
  %v2388 = vld [vmem:[%s17 + $0x6f8] sm:$0xff]
  %v2389 = vld [vmem:[%s17 + $0x700] sm:$0xff]
  %v2390 = vld [vmem:[%s17 + $0x708] sm:$0xff]
  %v2391 = vld [vmem:[%s17 + $0x710] sm:$0xff]
  %v2392 = vld [vmem:[%s17 + $0x718] sm:$0xff]
  %v2393 = vld [vmem:[%s17 + $0x720] sm:$0xff]
  %v2394 = vld [vmem:[%s17 + $0x728] sm:$0xff]
  %v2395 = vld [vmem:[%s17 + $0x730] sm:$0xff]
  %v2396 = vld [vmem:[%s17 + $0x738] sm:$0xff]
  %v2397 = vld [vmem:[%s17 + $0x740] sm:$0xff]
  %v2398 = vld [vmem:[%s17 + $0x748] sm:$0xff]
  %v2399 = vld [vmem:[%s17 + $0x750] sm:$0xff]
  %v2400 = vld [vmem:[%s17 + $0x758] sm:$0xff]
  %v2401 = vld [vmem:[%s17 + $0x760] sm:$0xff]
  %v2402 = vld [vmem:[%s17 + $0x768] sm:$0xff]
  %v2403 = vld [vmem:[%s17 + $0x770] sm:$0xff]
  %v2404 = vld [vmem:[%s17 + $0x778] sm:$0xff]
  %v2405 = vld [vmem:[%s17 + $0x780] sm:$0xff]
  %v2406 = vld [vmem:[%s17 + $0x788] sm:$0xff]
  %v2407 = vld [vmem:[%s17 + $0x790] sm:$0xff]
  %v2408 = vld [vmem:[%s17 + $0x798] sm:$0xff]
  %v2409 = vld [vmem:[%s17 + $0x7a0] sm:$0xff]
  %v2410 = vld [vmem:[%s17 + $0x7a8] sm:$0xff]
  %v2411 = vld [vmem:[%s17 + $0x7b0] sm:$0xff]
  %v2412 = vld [vmem:[%s17 + $0x7b8] sm:$0xff]
  %v2413 = vld [vmem:[%s17 + $0x7c0] sm:$0xff]
  %v2414 = vld [vmem:[%s17 + $0x7c8] sm:$0xff]
  %v2415 = vld [vmem:[%s17 + $0x7d0] sm:$0xff]
  %v2416 = vld [vmem:[%s17 + $0x7d8] sm:$0xff]
  %v2417 = vld [vmem:[%s17 + $0x7e0] sm:$0xff]
  %v2418 = vld [vmem:[%s17 + $0x7e8] sm:$0xff]
  %v2419 = vld [vmem:[%s17 + $0x7f0] sm:$0xff]
  %v2420 = vld [vmem:[%s17 + $0x7f8] sm:$0xff]
  %2421 = vmatprep.subr.mxu0 %v2166
  %2422 = vmatpush1.msra.mxu0 %v2165
  %2423 = vmatprep.subr.mxu0 %v2174
  %2424 = vmatpush1.msra.mxu0 %v2173
  %2425 = vmatprep.subr.mxu0 %v2182
  %2426 = vmatpush1.msra.mxu0 %v2181
  %2427 = vmatprep.subr.mxu0 %v2190
  %2428 = vmatpush1.msra.mxu0 %v2189
  %2429 = vmatprep.subr.mxu0 %v2198
  %2430 = vmatpush1.msra.mxu0 %v2197
  %2431 = vmatprep.subr.mxu0 %v2206
  %2432 = vmatpush1.msra.mxu0 %v2205
  %2433 = vmatprep.subr.mxu0 %v2214
  %2434 = vmatpush1.msra.mxu0 %v2213
  %2435 = vmatprep.subr.mxu0 %v2222
  %2436 = vmatpush1.msra.mxu0 %v2221
  %2437 = vmatprep.subr.mxu0 %v2230
  %2438 = vmatpush1.msra.mxu0 %v2229
  %2439 = vmatprep.subr.mxu0 %v2238
  %2440 = vmatpush1.msra.mxu0 %v2237
  %2441 = vmatprep.subr.mxu0 %v2246
  %2442 = vmatpush1.msra.mxu0 %v2245
  %2443 = vmatprep.subr.mxu0 %v2254
  %2444 = vmatpush1.msra.mxu0 %v2253
  %2445 = vmatprep.subr.mxu0 %v2262
  %2446 = vmatpush1.msra.mxu0 %v2261
  %2447 = vmatprep.subr.mxu0 %v2270
  %2448 = vmatpush1.msra.mxu0 %v2269
  %2449 = vmatprep.subr.mxu0 %v2278
  %2450 = vmatpush1.msra.mxu0 %v2277
  %2451 = vmatprep.subr.mxu0 %v2286
  %2452 = vmatpush1.msra.mxu0 %v2285
  %2453 = vmatprep.subr.mxu0 %v2294
  %2454 = vmatpush1.msra.mxu0 %v2293
  %2455 = vmatprep.subr.mxu0 %v2302
  %2456 = vmatpush1.msra.mxu0 %v2301
  %2457 = vmatprep.subr.mxu0 %v2310
  %2458 = vmatpush1.msra.mxu0 %v2309
  %2459 = vmatprep.subr.mxu0 %v2318
  %2460 = vmatpush1.msra.mxu0 %v2317
  %2461 = vmatprep.subr.mxu0 %v2326
  %2462 = vmatpush1.msra.mxu0 %v2325
  %2463 = vmatprep.subr.mxu0 %v2334
  %2464 = vmatpush1.msra.mxu0 %v2333
  %2465 = vmatprep.subr.mxu0 %v2342
  %2466 = vmatpush1.msra.mxu0 %v2341
  %2467 = vmatprep.subr.mxu0 %v2350
  %2468 = vmatpush1.msra.mxu0 %v2349
  %2469 = vmatprep.subr.mxu0 %v2358
  %2470 = vmatpush1.msra.mxu0 %v2357
  %2471 = vmatprep.subr.mxu0 %v2366
  %2472 = vmatpush1.msra.mxu0 %v2365
  %2473 = vmatprep.subr.mxu0 %v2374
  %2474 = vmatpush1.msra.mxu0 %v2373
  %2475 = vmatprep.subr.mxu0 %v2382
  %2476 = vmatpush1.msra.mxu0 %v2381
  %2477 = vmatprep.subr.mxu0 %v2390
  %2478 = vmatpush1.msra.mxu0 %v2389
  %2479 = vmatprep.subr.mxu0 %v2398
  %2480 = vmatpush1.msra.mxu0 %v2397
  %2481 = vmatprep.subr.mxu0 %v2406
  %2482 = vmatpush1.msra.mxu0 %v2405
  %2483 = vmatprep.subr.mxu0 %v2414
  %2484 = vmatpush1.msra.mxu0 %v2413
  %2485 = vmatprep.mubr.f32.mxu0 %v2164
  %2486 = vmatmul.mubr.f32.gmra.mrb[0].mxu0 %v2163
  %v2487 = vpop.f32.mrb[0].mxu0
  %v2488 = vadd.f32 0.0, %v2487
  %v2489 = vpop.f32.mrb[0].mxu0
  %v2490 = vadd.f32 0.0, %v2489
  %2491 = vdwg.mxu0
  %2492 = vmatprep.subr.mxu0 %v2168
  %2493 = vmatpush1.msra.mxu0 %v2167
  %2494 = vmatprep.subr.mxu0 %v2176
  %2495 = vmatpush1.msra.mxu0 %v2175
  %2496 = vmatprep.subr.mxu0 %v2184
  %2497 = vmatpush1.msra.mxu0 %v2183
  %2498 = vmatprep.subr.mxu0 %v2192
  %2499 = vmatpush1.msra.mxu0 %v2191
  %2500 = vmatprep.subr.mxu0 %v2200
  %2501 = vmatpush1.msra.mxu0 %v2199
  %2502 = vmatprep.subr.mxu0 %v2208
  %2503 = vmatpush1.msra.mxu0 %v2207
  %2504 = vmatprep.subr.mxu0 %v2216
  %2505 = vmatpush1.msra.mxu0 %v2215
  %2506 = vmatprep.subr.mxu0 %v2224
  %2507 = vmatpush1.msra.mxu0 %v2223
  %2508 = vmatprep.subr.mxu0 %v2232
  %2509 = vmatpush1.msra.mxu0 %v2231
  %2510 = vmatprep.subr.mxu0 %v2240
  %2511 = vmatpush1.msra.mxu0 %v2239
  %2512 = vmatprep.subr.mxu0 %v2248
  %2513 = vmatpush1.msra.mxu0 %v2247
  %2514 = vmatprep.subr.mxu0 %v2256
  %2515 = vmatpush1.msra.mxu0 %v2255
  %2516 = vmatprep.subr.mxu0 %v2264
  %2517 = vmatpush1.msra.mxu0 %v2263
  %2518 = vmatprep.subr.mxu0 %v2272
  %2519 = vmatpush1.msra.mxu0 %v2271
  %2520 = vmatprep.subr.mxu0 %v2280
  %2521 = vmatpush1.msra.mxu0 %v2279
  %2522 = vmatprep.subr.mxu0 %v2288
  %2523 = vmatpush1.msra.mxu0 %v2287
  %2524 = vmatprep.subr.mxu0 %v2296
  %2525 = vmatpush1.msra.mxu0 %v2295
  %2526 = vmatprep.subr.mxu0 %v2304
  %2527 = vmatpush1.msra.mxu0 %v2303
  %2528 = vmatprep.subr.mxu0 %v2312
  %2529 = vmatpush1.msra.mxu0 %v2311
  %2530 = vmatprep.subr.mxu0 %v2320
  %2531 = vmatpush1.msra.mxu0 %v2319
  %2532 = vmatprep.subr.mxu0 %v2328
  %2533 = vmatpush1.msra.mxu0 %v2327
  %2534 = vmatprep.subr.mxu0 %v2336
  %2535 = vmatpush1.msra.mxu0 %v2335
  %2536 = vmatprep.subr.mxu0 %v2344
  %2537 = vmatpush1.msra.mxu0 %v2343
  %2538 = vmatprep.subr.mxu0 %v2352
  %2539 = vmatpush1.msra.mxu0 %v2351
  %2540 = vmatprep.subr.mxu0 %v2360
  %2541 = vmatpush1.msra.mxu0 %v2359
  %2542 = vmatprep.subr.mxu0 %v2368
  %2543 = vmatpush1.msra.mxu0 %v2367
  %2544 = vmatprep.subr.mxu0 %v2376
  %2545 = vmatpush1.msra.mxu0 %v2375
  %2546 = vmatprep.subr.mxu0 %v2384
  %2547 = vmatpush1.msra.mxu0 %v2383
  %2548 = vmatprep.subr.mxu0 %v2392
  %2549 = vmatpush1.msra.mxu0 %v2391
  %2550 = vmatprep.subr.mxu0 %v2400
  %2551 = vmatpush1.msra.mxu0 %v2399
  %2552 = vmatprep.subr.mxu0 %v2408
  %2553 = vmatpush1.msra.mxu0 %v2407
  %2554 = vmatprep.subr.mxu0 %v2416
  %2555 = vmatpush1.msra.mxu0 %v2415
  %2556 = vmatprep.mubr.f32.mxu0 %v2164
  %2557 = vmatmul.mubr.f32.gmra.mrb[0].mxu0 %v2163
  %v2558 = vpop.f32.mrb[0].mxu0
  %v2559 = vadd.f32 0.0, %v2558
  %v2560 = vpop.f32.mrb[0].mxu0
  %v2561 = vadd.f32 0.0, %v2560
  %2562 = vdwg.mxu0
  %2563 = vmatprep.subr.mxu0 %v2170
  %2564 = vmatpush1.msra.mxu0 %v2169
  %2565 = vmatprep.subr.mxu0 %v2178
  %2566 = vmatpush1.msra.mxu0 %v2177
  %2567 = vmatprep.subr.mxu0 %v2186
  %2568 = vmatpush1.msra.mxu0 %v2185
  %2569 = vmatprep.subr.mxu0 %v2194
  %2570 = vmatpush1.msra.mxu0 %v2193
  %2571 = vmatprep.subr.mxu0 %v2202
  %2572 = vmatpush1.msra.mxu0 %v2201
  %2573 = vmatprep.subr.mxu0 %v2210
  %2574 = vmatpush1.msra.mxu0 %v2209
  %2575 = vmatprep.subr.mxu0 %v2218
  %2576 = vmatpush1.msra.mxu0 %v2217
  %2577 = vmatprep.subr.mxu0 %v2226
  %2578 = vmatpush1.msra.mxu0 %v2225
  %2579 = vmatprep.subr.mxu0 %v2234
  %2580 = vmatpush1.msra.mxu0 %v2233
  %2581 = vmatprep.subr.mxu0 %v2242
  %2582 = vmatpush1.msra.mxu0 %v2241
  %2583 = vmatprep.subr.mxu0 %v2250
  %2584 = vmatpush1.msra.mxu0 %v2249
  %2585 = vmatprep.subr.mxu0 %v2258
  %2586 = vmatpush1.msra.mxu0 %v2257
  %2587 = vmatprep.subr.mxu0 %v2266
  %2588 = vmatpush1.msra.mxu0 %v2265
  %2589 = vmatprep.subr.mxu0 %v2274
  %2590 = vmatpush1.msra.mxu0 %v2273
  %2591 = vmatprep.subr.mxu0 %v2282
  %2592 = vmatpush1.msra.mxu0 %v2281
  %2593 = vmatprep.subr.mxu0 %v2290
  %2594 = vmatpush1.msra.mxu0 %v2289
  %2595 = vmatprep.subr.mxu0 %v2298
  %2596 = vmatpush1.msra.mxu0 %v2297
  %2597 = vmatprep.subr.mxu0 %v2306
  %2598 = vmatpush1.msra.mxu0 %v2305
  %2599 = vmatprep.subr.mxu0 %v2314
  %2600 = vmatpush1.msra.mxu0 %v2313
  %2601 = vmatprep.subr.mxu0 %v2322
  %2602 = vmatpush1.msra.mxu0 %v2321
  %2603 = vmatprep.subr.mxu0 %v2330
  %2604 = vmatpush1.msra.mxu0 %v2329
  %2605 = vmatprep.subr.mxu0 %v2338
  %2606 = vmatpush1.msra.mxu0 %v2337
  %2607 = vmatprep.subr.mxu0 %v2346
  %2608 = vmatpush1.msra.mxu0 %v2345
  %2609 = vmatprep.subr.mxu0 %v2354
  %2610 = vmatpush1.msra.mxu0 %v2353
  %2611 = vmatprep.subr.mxu0 %v2362
  %2612 = vmatpush1.msra.mxu0 %v2361
  %2613 = vmatprep.subr.mxu0 %v2370
  %2614 = vmatpush1.msra.mxu0 %v2369
  %2615 = vmatprep.subr.mxu0 %v2378
  %2616 = vmatpush1.msra.mxu0 %v2377
  %2617 = vmatprep.subr.mxu0 %v2386
  %2618 = vmatpush1.msra.mxu0 %v2385
  %2619 = vmatprep.subr.mxu0 %v2394
  %2620 = vmatpush1.msra.mxu0 %v2393
  %2621 = vmatprep.subr.mxu0 %v2402
  %2622 = vmatpush1.msra.mxu0 %v2401
  %2623 = vmatprep.subr.mxu0 %v2410
  %2624 = vmatpush1.msra.mxu0 %v2409
  %2625 = vmatprep.subr.mxu0 %v2418
  %2626 = vmatpush1.msra.mxu0 %v2417
  %2627 = vmatprep.mubr.f32.mxu0 %v2164
  %2628 = vmatmul.mubr.f32.gmra.mrb[0].mxu0 %v2163
  %v2629 = vpop.f32.mrb[0].mxu0
  %v2630 = vadd.f32 0.0, %v2629
  %v2631 = vpop.f32.mrb[0].mxu0
  %v2632 = vadd.f32 0.0, %v2631
  %2633 = vdwg.mxu0
  %2634 = vmatprep.subr.mxu0 %v2172
  %2635 = vmatpush1.msra.mxu0 %v2171
  %2636 = vmatprep.subr.mxu0 %v2180
  %2637 = vmatpush1.msra.mxu0 %v2179
  %2638 = vmatprep.subr.mxu0 %v2188
  %2639 = vmatpush1.msra.mxu0 %v2187
  %2640 = vmatprep.subr.mxu0 %v2196
  %2641 = vmatpush1.msra.mxu0 %v2195
  %2642 = vmatprep.subr.mxu0 %v2204
  %2643 = vmatpush1.msra.mxu0 %v2203
  %2644 = vmatprep.subr.mxu0 %v2212
  %2645 = vmatpush1.msra.mxu0 %v2211
  %2646 = vmatprep.subr.mxu0 %v2220
  %2647 = vmatpush1.msra.mxu0 %v2219
  %2648 = vmatprep.subr.mxu0 %v2228
  %2649 = vmatpush1.msra.mxu0 %v2227
  %2650 = vmatprep.subr.mxu0 %v2236
  %2651 = vmatpush1.msra.mxu0 %v2235
  %2652 = vmatprep.subr.mxu0 %v2244
  %2653 = vmatpush1.msra.mxu0 %v2243
  %2654 = vmatprep.subr.mxu0 %v2252
  %2655 = vmatpush1.msra.mxu0 %v2251
  %2656 = vmatprep.subr.mxu0 %v2260
  %2657 = vmatpush1.msra.mxu0 %v2259
  %2658 = vmatprep.subr.mxu0 %v2268
  %2659 = vmatpush1.msra.mxu0 %v2267
  %2660 = vmatprep.subr.mxu0 %v2276
  %2661 = vmatpush1.msra.mxu0 %v2275
  %2662 = vmatprep.subr.mxu0 %v2284
  %2663 = vmatpush1.msra.mxu0 %v2283
  %2664 = vmatprep.subr.mxu0 %v2292
  %2665 = vmatpush1.msra.mxu0 %v2291
  %2666 = vmatprep.subr.mxu0 %v2300
  %2667 = vmatpush1.msra.mxu0 %v2299
  %2668 = vmatprep.subr.mxu0 %v2308
  %2669 = vmatpush1.msra.mxu0 %v2307
  %2670 = vmatprep.subr.mxu0 %v2316
  %2671 = vmatpush1.msra.mxu0 %v2315
  %2672 = vmatprep.subr.mxu0 %v2324
  %2673 = vmatpush1.msra.mxu0 %v2323
  %2674 = vmatprep.subr.mxu0 %v2332
  %2675 = vmatpush1.msra.mxu0 %v2331
  %2676 = vmatprep.subr.mxu0 %v2340
  %2677 = vmatpush1.msra.mxu0 %v2339
  %2678 = vmatprep.subr.mxu0 %v2348
  %2679 = vmatpush1.msra.mxu0 %v2347
  %2680 = vmatprep.subr.mxu0 %v2356
  %2681 = vmatpush1.msra.mxu0 %v2355
  %2682 = vmatprep.subr.mxu0 %v2364
  %2683 = vmatpush1.msra.mxu0 %v2363
  %2684 = vmatprep.subr.mxu0 %v2372
  %2685 = vmatpush1.msra.mxu0 %v2371
  %2686 = vmatprep.subr.mxu0 %v2380
  %2687 = vmatpush1.msra.mxu0 %v2379
  %2688 = vmatprep.subr.mxu0 %v2388
  %2689 = vmatpush1.msra.mxu0 %v2387
  %2690 = vmatprep.subr.mxu0 %v2396
  %2691 = vmatpush1.msra.mxu0 %v2395
  %2692 = vmatprep.subr.mxu0 %v2404
  %2693 = vmatpush1.msra.mxu0 %v2403
  %2694 = vmatprep.subr.mxu0 %v2412
  %2695 = vmatpush1.msra.mxu0 %v2411
  %2696 = vmatprep.subr.mxu0 %v2420
  %2697 = vmatpush1.msra.mxu0 %v2419
  %2698 = vmatprep.mubr.f32.mxu0 %v2164
  %2699 = vmatmul.mubr.f32.gmra.mrb[0].mxu0 %v2163
  %v2700 = vpop.f32.mrb[0].mxu0
  %v2701 = vadd.f32 0.0, %v2700
  %v2702 = vpop.f32.mrb[0].mxu0
  %v2703 = vadd.f32 0.0, %v2702
  %2704 = vdwg.mxu0
  %v2705 = vsub.f32 0.0, %v2488
  %v2706 = vsub.f32 0.0, %v2490
  %v2707 = vsub.f32 0.0, %v2559
  %v2708 = vsub.f32 0.0, %v2561
  %v2709 = vmul.f32 %v2705, 1.442695
  %v2710 = vpow.pop %v2709
  %v2711 = vmul.f32 %v2706, 1.442695
  %v2712 = vpow.pop %v2711
  %v2713 = vmul.f32 %v2707, 1.442695
  %v2714 = vpow.pop %v2713
  %v2715 = vmul.f32 %v2708, 1.442695
  %v2716 = vpow.pop %v2715
  %v2717 = vadd.f32 %v2710, 1.0
  %v2718 = vadd.f32 %v2712, 1.0
  %v2719 = vadd.f32 %v2714, 1.0
  %v2720 = vadd.f32 %v2716, 1.0
  %v2721 = vrcp.pop %v2717
  %v2722 = vmul.f32 1.0, %v2721
  %v2723 = vrcp.pop %v2718
  %v2724 = vmul.f32 1.0, %v2723
  %v2725 = vrcp.pop %v2719
  %v2726 = vmul.f32 1.0, %v2725
  %v2727 = vrcp.pop %v2720
  %v2728 = vmul.f32 1.0, %v2727
  %v2729 = vmul.f32 %v2488, %v2722
  %v2730 = vmul.f32 %v2490, %v2724
  %v2731 = vmul.f32 %v2559, %v2726
  %v2732 = vmul.f32 %v2561, %v2728
  %v2733 = vmul.f32 %v2729, %v2630
  %v2734 = vmul.f32 %v2730, %v2632
  %v2735 = vmul.f32 %v2731, %v2701
  %v2736 = vmul.f32 %v2732, %v2703
  %v2737 = vld [vmem:[%s18] sm:$0xff]
  %v2738 = vld [vmem:[%s18 + $0x8] sm:$0xff]
  %v2739 = vld [vmem:[%s18 + $0x10] sm:$0xff]
  %v2740 = vld [vmem:[%s18 + $0x18] sm:$0xff]
  %v2741 = vld [vmem:[%s18 + $0x20] sm:$0xff]
  %v2742 = vld [vmem:[%s18 + $0x28] sm:$0xff]
  %v2743 = vld [vmem:[%s18 + $0x30] sm:$0xff]
  %v2744 = vld [vmem:[%s18 + $0x38] sm:$0xff]
  %v2745 = vld [vmem:[%s18 + $0x40] sm:$0xff]
  %v2746 = vld [vmem:[%s18 + $0x48] sm:$0xff]
  %v2747 = vld [vmem:[%s18 + $0x50] sm:$0xff]
  %v2748 = vld [vmem:[%s18 + $0x58] sm:$0xff]
  %v2749 = vld [vmem:[%s18 + $0x60] sm:$0xff]
  %v2750 = vld [vmem:[%s18 + $0x68] sm:$0xff]
  %v2751 = vld [vmem:[%s18 + $0x70] sm:$0xff]
  %v2752 = vld [vmem:[%s18 + $0x78] sm:$0xff]
  %v2753 = vld [vmem:[%s18 + $0x80] sm:$0xff]
  %v2754 = vld [vmem:[%s18 + $0x88] sm:$0xff]
  %v2755 = vld [vmem:[%s18 + $0x90] sm:$0xff]
  %v2756 = vld [vmem:[%s18 + $0x98] sm:$0xff]
  %v2757 = vld [vmem:[%s18 + $0xa0] sm:$0xff]
  %v2758 = vld [vmem:[%s18 + $0xa8] sm:$0xff]
  %v2759 = vld [vmem:[%s18 + $0xb0] sm:$0xff]
  %v2760 = vld [vmem:[%s18 + $0xb8] sm:$0xff]
  %v2761 = vld [vmem:[%s18 + $0xc0] sm:$0xff]
  %v2762 = vld [vmem:[%s18 + $0xc8] sm:$0xff]
  %v2763 = vld [vmem:[%s18 + $0xd0] sm:$0xff]
  %v2764 = vld [vmem:[%s18 + $0xd8] sm:$0xff]
  %v2765 = vld [vmem:[%s18 + $0xe0] sm:$0xff]
  %v2766 = vld [vmem:[%s18 + $0xe8] sm:$0xff]
  %v2767 = vld [vmem:[%s18 + $0xf0] sm:$0xff]
  %v2768 = vld [vmem:[%s18 + $0xf8] sm:$0xff]
  %v2769 = vld [vmem:[%s18 + $0x100] sm:$0xff]
  %v2770 = vld [vmem:[%s18 + $0x108] sm:$0xff]
  %v2771 = vld [vmem:[%s18 + $0x110] sm:$0xff]
  %v2772 = vld [vmem:[%s18 + $0x118] sm:$0xff]
  %v2773 = vld [vmem:[%s18 + $0x120] sm:$0xff]
  %v2774 = vld [vmem:[%s18 + $0x128] sm:$0xff]
  %v2775 = vld [vmem:[%s18 + $0x130] sm:$0xff]
  %v2776 = vld [vmem:[%s18 + $0x138] sm:$0xff]
  %v2777 = vld [vmem:[%s18 + $0x140] sm:$0xff]
  %v2778 = vld [vmem:[%s18 + $0x148] sm:$0xff]
  %v2779 = vld [vmem:[%s18 + $0x150] sm:$0xff]
  %v2780 = vld [vmem:[%s18 + $0x158] sm:$0xff]
  %v2781 = vld [vmem:[%s18 + $0x160] sm:$0xff]
  %v2782 = vld [vmem:[%s18 + $0x168] sm:$0xff]
  %v2783 = vld [vmem:[%s18 + $0x170] sm:$0xff]
  %v2784 = vld [vmem:[%s18 + $0x178] sm:$0xff]
  %v2785 = vld [vmem:[%s18 + $0x180] sm:$0xff]
  %v2786 = vld [vmem:[%s18 + $0x188] sm:$0xff]
  %v2787 = vld [vmem:[%s18 + $0x190] sm:$0xff]
  %v2788 = vld [vmem:[%s18 + $0x198] sm:$0xff]
  %v2789 = vld [vmem:[%s18 + $0x1a0] sm:$0xff]
  %v2790 = vld [vmem:[%s18 + $0x1a8] sm:$0xff]
  %v2791 = vld [vmem:[%s18 + $0x1b0] sm:$0xff]
  %v2792 = vld [vmem:[%s18 + $0x1b8] sm:$0xff]
  %v2793 = vld [vmem:[%s18 + $0x1c0] sm:$0xff]
  %v2794 = vld [vmem:[%s18 + $0x1c8] sm:$0xff]
  %v2795 = vld [vmem:[%s18 + $0x1d0] sm:$0xff]
  %v2796 = vld [vmem:[%s18 + $0x1d8] sm:$0xff]
  %v2797 = vld [vmem:[%s18 + $0x1e0] sm:$0xff]
  %v2798 = vld [vmem:[%s18 + $0x1e8] sm:$0xff]
  %v2799 = vld [vmem:[%s18 + $0x1f0] sm:$0xff]
  %v2800 = vld [vmem:[%s18 + $0x1f8] sm:$0xff]
  %v2801 = vld [vmem:[%s18 + $0x200] sm:$0xff]
  %v2802 = vld [vmem:[%s18 + $0x208] sm:$0xff]
  %v2803 = vld [vmem:[%s18 + $0x210] sm:$0xff]
  %v2804 = vld [vmem:[%s18 + $0x218] sm:$0xff]
  %v2805 = vld [vmem:[%s18 + $0x220] sm:$0xff]
  %v2806 = vld [vmem:[%s18 + $0x228] sm:$0xff]
  %v2807 = vld [vmem:[%s18 + $0x230] sm:$0xff]
  %v2808 = vld [vmem:[%s18 + $0x238] sm:$0xff]
  %v2809 = vld [vmem:[%s18 + $0x240] sm:$0xff]
  %v2810 = vld [vmem:[%s18 + $0x248] sm:$0xff]
  %v2811 = vld [vmem:[%s18 + $0x250] sm:$0xff]
  %v2812 = vld [vmem:[%s18 + $0x258] sm:$0xff]
  %v2813 = vld [vmem:[%s18 + $0x260] sm:$0xff]
  %v2814 = vld [vmem:[%s18 + $0x268] sm:$0xff]
  %v2815 = vld [vmem:[%s18 + $0x270] sm:$0xff]
  %v2816 = vld [vmem:[%s18 + $0x278] sm:$0xff]
  %v2817 = vld [vmem:[%s18 + $0x280] sm:$0xff]
  %v2818 = vld [vmem:[%s18 + $0x288] sm:$0xff]
  %v2819 = vld [vmem:[%s18 + $0x290] sm:$0xff]
  %v2820 = vld [vmem:[%s18 + $0x298] sm:$0xff]
  %v2821 = vld [vmem:[%s18 + $0x2a0] sm:$0xff]
  %v2822 = vld [vmem:[%s18 + $0x2a8] sm:$0xff]
  %v2823 = vld [vmem:[%s18 + $0x2b0] sm:$0xff]
  %v2824 = vld [vmem:[%s18 + $0x2b8] sm:$0xff]
  %v2825 = vld [vmem:[%s18 + $0x2c0] sm:$0xff]
  %v2826 = vld [vmem:[%s18 + $0x2c8] sm:$0xff]
  %v2827 = vld [vmem:[%s18 + $0x2d0] sm:$0xff]
  %v2828 = vld [vmem:[%s18 + $0x2d8] sm:$0xff]
  %v2829 = vld [vmem:[%s18 + $0x2e0] sm:$0xff]
  %v2830 = vld [vmem:[%s18 + $0x2e8] sm:$0xff]
  %v2831 = vld [vmem:[%s18 + $0x2f0] sm:$0xff]
  %v2832 = vld [vmem:[%s18 + $0x2f8] sm:$0xff]
  %v2833 = vld [vmem:[%s18 + $0x300] sm:$0xff]
  %v2834 = vld [vmem:[%s18 + $0x308] sm:$0xff]
  %v2835 = vld [vmem:[%s18 + $0x310] sm:$0xff]
  %v2836 = vld [vmem:[%s18 + $0x318] sm:$0xff]
  %v2837 = vld [vmem:[%s18 + $0x320] sm:$0xff]
  %v2838 = vld [vmem:[%s18 + $0x328] sm:$0xff]
  %v2839 = vld [vmem:[%s18 + $0x330] sm:$0xff]
  %v2840 = vld [vmem:[%s18 + $0x338] sm:$0xff]
  %v2841 = vld [vmem:[%s18 + $0x340] sm:$0xff]
  %v2842 = vld [vmem:[%s18 + $0x348] sm:$0xff]
  %v2843 = vld [vmem:[%s18 + $0x350] sm:$0xff]
  %v2844 = vld [vmem:[%s18 + $0x358] sm:$0xff]
  %v2845 = vld [vmem:[%s18 + $0x360] sm:$0xff]
  %v2846 = vld [vmem:[%s18 + $0x368] sm:$0xff]
  %v2847 = vld [vmem:[%s18 + $0x370] sm:$0xff]
  %v2848 = vld [vmem:[%s18 + $0x378] sm:$0xff]
  %v2849 = vld [vmem:[%s18 + $0x380] sm:$0xff]
  %v2850 = vld [vmem:[%s18 + $0x388] sm:$0xff]
  %v2851 = vld [vmem:[%s18 + $0x390] sm:$0xff]
  %v2852 = vld [vmem:[%s18 + $0x398] sm:$0xff]
  %v2853 = vld [vmem:[%s18 + $0x3a0] sm:$0xff]
  %v2854 = vld [vmem:[%s18 + $0x3a8] sm:$0xff]
  %v2855 = vld [vmem:[%s18 + $0x3b0] sm:$0xff]
  %v2856 = vld [vmem:[%s18 + $0x3b8] sm:$0xff]
  %v2857 = vld [vmem:[%s18 + $0x3c0] sm:$0xff]
  %v2858 = vld [vmem:[%s18 + $0x3c8] sm:$0xff]
  %v2859 = vld [vmem:[%s18 + $0x3d0] sm:$0xff]
  %v2860 = vld [vmem:[%s18 + $0x3d8] sm:$0xff]
  %v2861 = vld [vmem:[%s18 + $0x3e0] sm:$0xff]
  %v2862 = vld [vmem:[%s18 + $0x3e8] sm:$0xff]
  %v2863 = vld [vmem:[%s18 + $0x3f0] sm:$0xff]
  %v2864 = vld [vmem:[%s18 + $0x3f8] sm:$0xff]
  %2865 = vmatprep.subr.mxu0 %v2738
  %2866 = vmatpush1.msra.mxu0 %v2737
  %2867 = vmatprep.subr.mxu0 %v2740
  %2868 = vmatpush1.msra.mxu0 %v2739
  %2869 = vmatprep.subr.mxu0 %v2742
  %2870 = vmatpush1.msra.mxu0 %v2741
  %2871 = vmatprep.subr.mxu0 %v2744
  %2872 = vmatpush1.msra.mxu0 %v2743
  %2873 = vmatprep.subr.mxu0 %v2746
  %2874 = vmatpush1.msra.mxu0 %v2745
  %2875 = vmatprep.subr.mxu0 %v2748
  %2876 = vmatpush1.msra.mxu0 %v2747
  %2877 = vmatprep.subr.mxu0 %v2750
  %2878 = vmatpush1.msra.mxu0 %v2749
  %2879 = vmatprep.subr.mxu0 %v2752
  %2880 = vmatpush1.msra.mxu0 %v2751
  %2881 = vmatprep.subr.mxu0 %v2754
  %2882 = vmatpush1.msra.mxu0 %v2753
  %2883 = vmatprep.subr.mxu0 %v2756
  %2884 = vmatpush1.msra.mxu0 %v2755
  %2885 = vmatprep.subr.mxu0 %v2758
  %2886 = vmatpush1.msra.mxu0 %v2757
  %2887 = vmatprep.subr.mxu0 %v2760
  %2888 = vmatpush1.msra.mxu0 %v2759
  %2889 = vmatprep.subr.mxu0 %v2762
  %2890 = vmatpush1.msra.mxu0 %v2761
  %2891 = vmatprep.subr.mxu0 %v2764
  %2892 = vmatpush1.msra.mxu0 %v2763
  %2893 = vmatprep.subr.mxu0 %v2766
  %2894 = vmatpush1.msra.mxu0 %v2765
  %2895 = vmatprep.subr.mxu0 %v2768
  %2896 = vmatpush1.msra.mxu0 %v2767
  %2897 = vmatprep.subr.mxu0 %v2770
  %2898 = vmatpush1.msra.mxu0 %v2769
  %2899 = vmatprep.subr.mxu0 %v2772
  %2900 = vmatpush1.msra.mxu0 %v2771
  %2901 = vmatprep.subr.mxu0 %v2774
  %2902 = vmatpush1.msra.mxu0 %v2773
  %2903 = vmatprep.subr.mxu0 %v2776
  %2904 = vmatpush1.msra.mxu0 %v2775
  %2905 = vmatprep.subr.mxu0 %v2778
  %2906 = vmatpush1.msra.mxu0 %v2777
  %2907 = vmatprep.subr.mxu0 %v2780
  %2908 = vmatpush1.msra.mxu0 %v2779
  %2909 = vmatprep.subr.mxu0 %v2782
  %2910 = vmatpush1.msra.mxu0 %v2781
  %2911 = vmatprep.subr.mxu0 %v2784
  %2912 = vmatpush1.msra.mxu0 %v2783
  %2913 = vmatprep.subr.mxu0 %v2786
  %2914 = vmatpush1.msra.mxu0 %v2785
  %2915 = vmatprep.subr.mxu0 %v2788
  %2916 = vmatpush1.msra.mxu0 %v2787
  %2917 = vmatprep.subr.mxu0 %v2790
  %2918 = vmatpush1.msra.mxu0 %v2789
  %2919 = vmatprep.subr.mxu0 %v2792
  %2920 = vmatpush1.msra.mxu0 %v2791
  %2921 = vmatprep.subr.mxu0 %v2794
  %2922 = vmatpush1.msra.mxu0 %v2793
  %2923 = vmatprep.subr.mxu0 %v2796
  %2924 = vmatpush1.msra.mxu0 %v2795
  %2925 = vmatprep.subr.mxu0 %v2798
  %2926 = vmatpush1.msra.mxu0 %v2797
  %2927 = vmatprep.subr.mxu0 %v2800
  %2928 = vmatpush1.msra.mxu0 %v2799
  %2929 = vmatprep.mubr.f32.mxu0 %v2734
  %2930 = vmatmul.mubr.f32.gmra.mrb[0].mxu0 %v2733
  %v2931 = vpop.f32.mrb[0].mxu0
  %v2932 = vadd.f32 0.0, %v2931
  %v2933 = vpop.f32.mrb[0].mxu0
  %v2934 = vadd.f32 0.0, %v2933
  %2935 = vdwg.mxu0
  %2936 = vmatprep.subr.mxu0 %v2802
  %2937 = vmatpush1.msra.mxu0 %v2801
  %2938 = vmatprep.subr.mxu0 %v2804
  %2939 = vmatpush1.msra.mxu0 %v2803
  %2940 = vmatprep.subr.mxu0 %v2806
  %2941 = vmatpush1.msra.mxu0 %v2805
  %2942 = vmatprep.subr.mxu0 %v2808
  %2943 = vmatpush1.msra.mxu0 %v2807
  %2944 = vmatprep.subr.mxu0 %v2810
  %2945 = vmatpush1.msra.mxu0 %v2809
  %2946 = vmatprep.subr.mxu0 %v2812
  %2947 = vmatpush1.msra.mxu0 %v2811
  %2948 = vmatprep.subr.mxu0 %v2814
  %2949 = vmatpush1.msra.mxu0 %v2813
  %2950 = vmatprep.subr.mxu0 %v2816
  %2951 = vmatpush1.msra.mxu0 %v2815
  %2952 = vmatprep.subr.mxu0 %v2818
  %2953 = vmatpush1.msra.mxu0 %v2817
  %2954 = vmatprep.subr.mxu0 %v2820
  %2955 = vmatpush1.msra.mxu0 %v2819
  %2956 = vmatprep.subr.mxu0 %v2822
  %2957 = vmatpush1.msra.mxu0 %v2821
  %2958 = vmatprep.subr.mxu0 %v2824
  %2959 = vmatpush1.msra.mxu0 %v2823
  %2960 = vmatprep.subr.mxu0 %v2826
  %2961 = vmatpush1.msra.mxu0 %v2825
  %2962 = vmatprep.subr.mxu0 %v2828
  %2963 = vmatpush1.msra.mxu0 %v2827
  %2964 = vmatprep.subr.mxu0 %v2830
  %2965 = vmatpush1.msra.mxu0 %v2829
  %2966 = vmatprep.subr.mxu0 %v2832
  %2967 = vmatpush1.msra.mxu0 %v2831
  %2968 = vmatprep.subr.mxu0 %v2834
  %2969 = vmatpush1.msra.mxu0 %v2833
  %2970 = vmatprep.subr.mxu0 %v2836
  %2971 = vmatpush1.msra.mxu0 %v2835
  %2972 = vmatprep.subr.mxu0 %v2838
  %2973 = vmatpush1.msra.mxu0 %v2837
  %2974 = vmatprep.subr.mxu0 %v2840
  %2975 = vmatpush1.msra.mxu0 %v2839
  %2976 = vmatprep.subr.mxu0 %v2842
  %2977 = vmatpush1.msra.mxu0 %v2841
  %2978 = vmatprep.subr.mxu0 %v2844
  %2979 = vmatpush1.msra.mxu0 %v2843
  %2980 = vmatprep.subr.mxu0 %v2846
  %2981 = vmatpush1.msra.mxu0 %v2845
  %2982 = vmatprep.subr.mxu0 %v2848
  %2983 = vmatpush1.msra.mxu0 %v2847
  %2984 = vmatprep.subr.mxu0 %v2850
  %2985 = vmatpush1.msra.mxu0 %v2849
  %2986 = vmatprep.subr.mxu0 %v2852
  %2987 = vmatpush1.msra.mxu0 %v2851
  %2988 = vmatprep.subr.mxu0 %v2854
  %2989 = vmatpush1.msra.mxu0 %v2853
  %2990 = vmatprep.subr.mxu0 %v2856
  %2991 = vmatpush1.msra.mxu0 %v2855
  %2992 = vmatprep.subr.mxu0 %v2858
  %2993 = vmatpush1.msra.mxu0 %v2857
  %2994 = vmatprep.subr.mxu0 %v2860
  %2995 = vmatpush1.msra.mxu0 %v2859
  %2996 = vmatprep.subr.mxu0 %v2862
  %2997 = vmatpush1.msra.mxu0 %v2861
  %2998 = vmatprep.subr.mxu0 %v2864
  %2999 = vmatpush1.msra.mxu0 %v2863
  %3000 = vmatprep.mubr.f32.mxu0 %v2736
  %3001 = vmatmul.mubr.f32.gmra.mrb[0].mxu0 %v2735
  %v3002 = vpop.f32.mrb[0].mxu0
  %v3003 = vadd.f32 %v2932, %v3002
  %v3004 = vpop.f32.mrb[0].mxu0
  %v3005 = vadd.f32 %v2934, %v3004
  %3006 = vdwg.mxu0
  %v3007 = vadd.f32 %v2072, %v3003
  %v3008 = vadd.f32 %v2073, %v3005
  %3009 = vst [vmem:[%s19] sm:$0xff] %v3007
  %3010 = vst [vmem:[%s19 + $0x8] sm:$0xff] %v3008
  // Predicated region
  $region78: #{gofa_gnn_forward_pallas.2} parent=0 // pred_check
    _
  $region79: #{gofa_gnn_forward_pallas.2} parent=0 // pred_check_branch
    %3012 = sbr.rel (0) target = $region81
  $region80: #{gofa_gnn_forward_pallas.2} parent=0 // pred_region
    _
  $region81: #{gofa_gnn_forward_pallas.2} parent=0 // pred_fallthru
    _
  // Predicated region
  $region82: #{gofa_gnn_forward_pallas.2} parent=0 // pred_check
    _
  $region83: #{gofa_gnn_forward_pallas.2} parent=0 // pred_check_branch
    %3014 = sbr.rel (0) target = $region85
  $region84: #{gofa_gnn_forward_pallas.2} parent=0 // pred_region
    _
  $region85: #{gofa_gnn_forward_pallas.2} parent=0 // pred_fallthru
    _

</llo_original>
